<compile_context>
chip_gen: v6e
topology: v6e:2x2x1
jax: 0.10.0
libtpu: 0.0.40
codegen_flags: <defaults>
</compile_context>

<pallas_src>
import functools

import jax
import jax.numpy as jnp
from jax import lax
from jax.scipy.linalg import block_diag
from jax.experimental import pallas as pl
from jax.experimental.pallas import tpu as pltpu


# ----------------------------------------------------------------------------
# Kernel 1: modality projections for the whole sequence (hoisted out of the
# recurrence), tiled over rows so it pipelines at production sizes.
# ----------------------------------------------------------------------------
def _proj_kernel(x_ref, w_ref, b_ref, o_ref):
    o_ref[...] = (jnp.dot(x_ref[...], w_ref[...],
                          preferred_element_type=jnp.float32) + b_ref[...])


def pallas_projection(x, w, b, tm=256):
    M, K = x.shape
    N = w.shape[1]
    Mp = ((M + 7) // 8) * 8
    tm = min(tm, Mp)
    Mp = ((Mp + tm - 1) // tm) * tm
    if Mp != M:
        x = jnp.pad(x, ((0, Mp - M), (0, 0)))
    out = pl.pallas_call(
        _proj_kernel,
        out_shape=jax.ShapeDtypeStruct((Mp, N), jnp.float32),
        grid=(Mp // tm,),
        in_specs=[pl.BlockSpec((tm, K), lambda i: (i, 0)),
                  pl.BlockSpec((K, N), lambda i: (0, 0)),
                  pl.BlockSpec((1, N), lambda i: (0, 0))],
        out_specs=pl.BlockSpec((tm, N), lambda i: (i, 0)),
        compiler_params=pltpu.CompilerParams(
            dimension_semantics=("parallel",)),
    )(x, w, b)
    return out[:M]


# ----------------------------------------------------------------------------
# Kernel 2: the whole DialogueRNNTri recurrence, one grid step per utterance.
# Modality order everywhere is (t, v, a).
# ----------------------------------------------------------------------------
def _recurrence_kernel(u_ref, selmat_ref, qm_ref, bcmat_ref,
                       g_wu_ref, g_wq_ref, g_wh_ref, g_b_ref,
                       p_wu_ref, p_wc_ref, p_wh_ref, p_b_ref,
                       e_wq_ref, e_wh_ref, e_b_ref,
                       attw_ref, repw_ref, expw_ref,
                       saw_ref, sab_ref, dw_ref, db_ref,
                       e_out_ref, alpha_out_ref,
                       score_ref, grep_ref, glast_ref, q_ref, e_state_ref,
                       *, S, B, B_real, D_g, D_p, D_e):
    s = pl.program_id(0)

    @pl.when(s == 0)
    def _init():
        score_ref[...] = jnp.zeros_like(score_ref)
        grep_ref[...] = jnp.zeros_like(grep_ref)
        glast_ref[...] = jnp.zeros_like(glast_ref)
        q_ref[...] = jnp.zeros_like(q_ref)
        e_state_ref[...] = jnp.zeros_like(e_state_ref)

    def dot(a, b):
        return jnp.dot(a, b, preferred_element_type=jnp.float32)

    def gru_gates(gi, gh, h, H3):
        # Gate-major fused layout: [r_t r_v r_a | z_t z_v z_a | n_t n_v n_a],
        # hidden is modality-major [h_t | h_v | h_a] (blocks line up per gate).
        r = jax.nn.sigmoid(gi[:, 0:H3] + gh[:, 0:H3])
        z = jax.nn.sigmoid(gi[:, H3:2 * H3] + gh[:, H3:2 * H3])
        n = jnp.tanh(gi[:, 2 * H3:3 * H3] + r * gh[:, 2 * H3:3 * H3])
        return (1.0 - z) * n + z * h

    u_cat = u_ref[s]                 # (B, 3*D_m)   [ut | uv | ua]
    sel_m = selmat_ref[s]            # (B, B*P)     one-hot speaker selector
    qm_s = qm_ref[s]                 # (B*P, 1)     raw qmask (party mixing)

    # --- global GRU g_cell_{t,v,a} (fused, gate-major, split inputs) --------
    q0 = q_ref[...]                                    # (B*P, 3*D_p)
    q0_sel = dot(sel_m, q0)                            # (B, 3*D_p)
    g_prev = glast_ref[...]                            # (B, 3*D_g)
    gi_g = dot(u_cat, g_wu_ref[...]) + dot(q0_sel, g_wq_ref[...]) + g_b_ref[0:1, :]
    gh_g = dot(g_prev, g_wh_ref[...]) + g_b_ref[1:2, :]
    g_new = gru_gates(gi_g, gh_g, g_prev, 3 * D_g)     # (B, 3*D_g)

    # --- 9 SimpleAttentions: masked softmax over the cached history scores --
    sc = score_ref[...]                                # (S, B, 9)
    t_idx = lax.broadcasted_iota(jnp.int32, (S, 1, 1), 0)
    valid = t_idx < s
    smask = jnp.where(valid, sc, -1e30)
    mx = jnp.max(smask, axis=0, keepdims=True)
    ex = jnp.where(valid, jnp.exp(smask - mx), 0.0)
    den = jnp.sum(ex, axis=0, keepdims=True)
    alpha = ex / jnp.maximum(den, 1e-30)               # (S, B, 9); all 0 at s == 0
    alpha_out_ref[0] = jnp.transpose(jnp.sum(alpha, axis=2), (1, 0))   # (B, S)

    # Pooled member contexts (src-major member order) as one (B, 9*D_g) slab:
    #   slab[:, j*D_g:(j+1)*D_g] = sum_t alpha[t, :, j] * g_hist_src(j)[t]
    aexp = dot(alpha.reshape(S * B, 9), expw_ref[...]).reshape(S, B, 9 * D_g)
    slab = jnp.sum(aexp * grep_ref[...], axis=0)       # (B, 9*D_g)

    # --- SelfAttention('general2') + dense heads (one matmul each) ----------
    scale9 = dot(slab, saw_ref[...]) + sab_ref[...]    # (B, 9)
    b_idx = lax.broadcasted_iota(jnp.int32, (B, 1), 0)
    scale9 = jnp.where(b_idx < B_real, scale9, -1e30)  # exclude padded batch rows
    mxb = jnp.max(scale9, axis=0, keepdims=True)
    exb = jnp.exp(scale9 - mxb)
    a_sa = exb / jnp.sum(exb, axis=0, keepdims=True)   # softmax over batch (faithful)
    att = slab * (1.0 + dot(a_sa, expw_ref[...]))      # (B, 9*D_g)
    c_cat = dot(att, dw_ref[...]) + db_ref[...]        # (B, 3*D_g) = [c_t|c_v|c_a]
    c_cat = c_cat * (s > 0).astype(jnp.float32)        # context is exactly 0 at s == 0

    # --- party GRU p_cell_{t,v,a}: gi on B rows, broadcast over parties -----
    gi_p = dot(u_cat, p_wu_ref[...]) + dot(c_cat, p_wc_ref[...]) + p_b_ref[0:1, :]
    gi_p = dot(bcmat_ref[...], gi_p)                   # (B*P, 9*D_p)
    gh_p = dot(q0, p_wh_ref[...]) + p_b_ref[1:2, :]
    qs = gru_gates(gi_p, gh_p, q0, 3 * D_p)            # (B*P, 3*D_p)
    q_new = q0 * (1.0 - qm_s) + qs * qm_s
    q_ref[...] = q_new

    # --- emotion GRU e_cell_{t,v,a} ------------------------------------------
    q_sel = dot(sel_m, q_new)                          # (B, 3*D_p)
    e_prev = e_state_ref[...]
    gi_e = dot(q_sel, e_wq_ref[...]) + e_b_ref[0:1, :]
    gh_e = dot(e_prev, e_wh_ref[...]) + e_b_ref[1:2, :]
    e_new = gru_gates(gi_e, gh_e, e_prev, 3 * D_e)
    e_state_ref[...] = e_new
    e_out_ref[0] = e_new                               # [e_t | e_v | e_a]

    # --- append this step's g to the caches (used from step s+1 onwards) ----
    glast_ref[...] = g_new
    score_ref[pl.ds(s, 1)] = dot(g_new, attw_ref[...])[None]   # (1, B, 9)
    grep_ref[pl.ds(s, 1)] = dot(g_new, repw_ref[...])[None]    # (1, B, 9*D_g)


_WKEYS = ('g_wu', 'g_wq', 'g_wh', 'g_b',
          'p_wu', 'p_wc', 'p_wh', 'p_b',
          'e_wq', 'e_wh', 'e_b',
          'att_w', 'rep_w', 'exp_w', 'sa_w', 'sa_b', 'dense_w', 'dense_b')


def _const_spec(arr):
    nd = arr.ndim
    return pl.BlockSpec(tuple(arr.shape), lambda s, _n=nd: (0,) * _n)


def pallas_dialogue_recurrence(u_all, selmat, qm_flat, bcmat, fused, dims, B_real):
    D_m, D_g, D_p, D_e = dims
    S, B, _ = u_all.shape
    BP = bcmat.shape[0]
    kernel = functools.partial(_recurrence_kernel, S=S, B=B, B_real=B_real,
                               D_g=D_g, D_p=D_p, D_e=D_e)
    weights = [fused[k] for k in _WKEYS]
    operands = [u_all, selmat, qm_flat, bcmat] + weights
    in_specs = [_const_spec(a) for a in operands]           # all resident in VMEM
    out_shape = (jax.ShapeDtypeStruct((S, B, 3 * D_e), jnp.float32),
                 jax.ShapeDtypeStruct((S, B, S), jnp.float32))   # lane-dense alpha
    out_specs = (pl.BlockSpec((1, B, 3 * D_e), lambda s: (s, 0, 0)),
                 pl.BlockSpec((1, B, S), lambda s: (s, 0, 0)))
    scratch = [pltpu.VMEM((S, B, 9), jnp.float32),           # cached attention scores
               pltpu.VMEM((S, B, 9 * D_g), jnp.float32),     # replicated g history
               pltpu.VMEM((B, 3 * D_g), jnp.float32),        # last g (GRU hidden)
               pltpu.VMEM((BP, 3 * D_p), jnp.float32),       # party states q
               pltpu.VMEM((B, 3 * D_e), jnp.float32)]        # emotion states e
    return pl.pallas_call(
        kernel,
        out_shape=out_shape,
        grid_spec=pltpu.PrefetchScalarGridSpec(
            num_scalar_prefetch=0, grid=(S,),
            in_specs=in_specs, out_specs=out_specs, scratch_shapes=scratch),
        compiler_params=pltpu.CompilerParams(
            dimension_semantics=("arbitrary",),              # true recurrence
            vmem_limit_bytes=32 * 1024 * 1024),
    )(*operands)


# ----------------------------------------------------------------------------
# Deterministic parameter init (shapes follow the nn.Module __init__)
# ----------------------------------------------------------------------------
def _uniform(key, shape, scale):
    return jax.random.uniform(key, shape, jnp.float32, -scale, scale)


def init_linear(key, in_dim, out_dim, bias=True):
    k1, k2 = jax.random.split(key)
    s = 1.0 / float(in_dim) ** 0.5
    p = {'w_t': _uniform(k1, (in_dim, out_dim), s)}        # stored pre-transposed
    p['b'] = (_uniform(k2, (1, out_dim), s) if bias
              else jnp.zeros((1, out_dim), jnp.float32))
    return p


def init_gru(key, in_dim, hid):
    k = jax.random.split(key, 4)
    s = 1.0 / float(hid) ** 0.5
    return {'wih_t': _uniform(k[0], (in_dim, 3 * hid), s),   # gate order (r, z, n)
            'whh_t': _uniform(k[1], (hid, 3 * hid), s),
            'bih': _uniform(k[2], (1, 3 * hid), s),
            'bhh': _uniform(k[3], (1, 3 * hid), s)}


def init_params(key, D_m_T, D_m_V, D_m_A, D_m, D_g, D_p, D_e):
    keys = jax.random.split(key, 32)
    it = iter(keys)
    p = {}
    p['dense_t'] = init_linear(next(it), D_m_T, D_m)
    p['dense_a'] = init_linear(next(it), D_m_A, D_m)
    p['dense_v'] = init_linear(next(it), D_m_V, D_m)
    for m in ('t', 'v', 'a'):
        p[f'g_cell_{m}'] = init_gru(next(it), D_m + D_p, D_g)
        p[f'p_cell_{m}'] = init_gru(next(it), D_m + D_g, D_p)
        p[f'e_cell_{m}'] = init_gru(next(it), D_p, D_e)
    for i in range(1, 10):   # SimpleAttention: Linear(D_g, 1, bias=False)
        p[f'attention{i}'] = {'w': _uniform(next(it), (1, D_g), 1.0 / D_g ** 0.5)}
    for i in range(1, 4):    # SelfAttention scalar (with bias) + dense{i}
        k1, k2 = jax.random.split(next(it))
        p[f'my_self_att{i}'] = {'w': _uniform(k1, (1, D_g), 1.0 / D_g ** 0.5),
                                'b': _uniform(k2, (1, 1), 1.0 / D_g ** 0.5)}
        p[f'dense{i}'] = init_linear(next(it), 3 * D_g, D_g)
    p['self_attention'] = init_linear(next(it), D_e, 1)
    return p


# ----------------------------------------------------------------------------
# Fused / restructured kernel operands
# ----------------------------------------------------------------------------
def _fuse_gru3_gatemajor(cells, part_sizes, H):
    """Fuse 3 nn.GRUCells (modalities t,v,a) into gate-major, input-split weights.

    Returns ([W_part ...], W_h, b) with columns ordered
    [r_t r_v r_a | z_t z_v z_a | n_t n_v n_a] (each block H wide)."""
    W_parts = [jnp.zeros((3 * Ip, 9 * H), jnp.float32) for Ip in part_sizes]
    W_h = jnp.zeros((3 * H, 9 * H), jnp.float32)
    for m, cell in enumerate(cells):
        off = 0
        for pi, Ip in enumerate(part_sizes):
            sub = cell['wih_t'][off:off + Ip, :]             # (Ip, 3H), gates (r,z,n)
            for g in range(3):
                W_parts[pi] = W_parts[pi].at[
                    m * Ip:(m + 1) * Ip,
                    g * 3 * H + m * H: g * 3 * H + (m + 1) * H].set(
                        sub[:, g * H:(g + 1) * H])
            off += Ip
        for g in range(3):
            W_h = W_h.at[m * H:(m + 1) * H,
                         g * 3 * H + m * H: g * 3 * H + (m + 1) * H].set(
                cell['whh_t'][:, g * H:(g + 1) * H])

    def gm_bias(key):
        return jnp.concatenate(
            [jnp.concatenate([cells[m][key][:, g * H:(g + 1) * H]
                              for m in range(3)], axis=1)
             for g in range(3)], axis=1)

    b = jnp.concatenate([gm_bias('bih'), gm_bias('bhh')], axis=0)    # (2, 9H)
    return W_parts, W_h, b


def prepare_fused(p, dims):
    """Pack per-module params into fused / 0-1-structured kernel operands."""
    D_m, D_g, D_p, D_e = dims
    f = {}
    f['proj_w'] = block_diag(p['dense_t']['w_t'], p['dense_v']['w_t'],
                             p['dense_a']['w_t'])
    f['proj_b'] = jnp.concatenate(
        [p['dense_t']['b'], p['dense_v']['b'], p['dense_a']['b']], axis=1)

    def cells(name):
        return [p[f'{name}_{m}'] for m in ('t', 'v', 'a')]

    (f['g_wu'], f['g_wq']), f['g_wh'], f['g_b'] = _fuse_gru3_gatemajor(
        cells('g_cell'), (D_m, D_p), D_g)
    (f['p_wu'], f['p_wc']), f['p_wh'], f['p_b'] = _fuse_gru3_gatemajor(
        cells('p_cell'), (D_m, D_g), D_p)
    (f['e_wq'],), f['e_wh'], f['e_b'] = _fuse_gru3_gatemajor(
        cells('e_cell'), (D_p,), D_e)

    # 9 SimpleAttention weights, block-diag by source history (src-major heads):
    #   over g_hist_t: attention 1,4,6 ; over g_hist_v: 2,7,9 ; over g_hist_a: 3,5,8
    def att_cols(ids):
        return jnp.concatenate([p[f'attention{i}']['w'].T for i in ids], axis=1)
    f['att_w'] = block_diag(att_cols((1, 4, 6)), att_cols((2, 7, 9)),
                            att_cols((3, 5, 8)))             # (3*D_g, 9)

    # 0/1 replication (g -> per-member source blocks) and expansion (head -> D_g lanes)
    f['rep_w'] = jnp.kron(jnp.repeat(jnp.eye(3, dtype=jnp.float32), 3, axis=1),
                          jnp.eye(D_g, dtype=jnp.float32))   # (3*D_g, 9*D_g)
    f['exp_w'] = jnp.kron(jnp.eye(9, dtype=jnp.float32),
                          jnp.ones((1, D_g), jnp.float32))   # (9, 9*D_g)

    # src-major member j -> (my_self_att/dense module, slot within its group).
    #   j: 0 c_tt, 1 c_at, 2 c_vt, 3 c_vv, 4 c_tv, 5 c_av, 6 c_aa, 7 c_ta, 8 c_va
    J_MODULE = (1, 2, 3, 3, 1, 2, 2, 1, 3)
    J_SLOT = (0, 1, 1, 0, 2, 2, 0, 1, 2)
    OUT_COL = {1: 0, 3: 1, 2: 2}              # module -> block in [c_t | c_v | c_a]
    saw = jnp.zeros((9 * D_g, 9), jnp.float32)
    dw = jnp.zeros((9 * D_g, 3 * D_g), jnp.float32)
    sab = []
    for j in range(9):
        mod, slot = J_MODULE[j], J_SLOT[j]
        oc = OUT_COL[mod]
        saw = saw.at[j * D_g:(j + 1) * D_g, j].set(p[f'my_self_att{mod}']['w'][0])
        sab.append(p[f'my_self_att{mod}']['b'][0, 0])
        dw = dw.at[j * D_g:(j + 1) * D_g, oc * D_g:(oc + 1) * D_g].set(
            p[f'dense{mod}']['w_t'][slot * D_g:(slot + 1) * D_g, :])
    f['sa_w'] = saw
    f['sa_b'] = jnp.stack(sab).reshape(1, 9)
    f['dense_w'] = dw
    f['dense_b'] = jnp.concatenate(
        [p['dense1']['b'], p['dense3']['b'], p['dense2']['b']], axis=1)
    return f


# ----------------------------------------------------------------------------
# DialogueRNNTri forward
# ----------------------------------------------------------------------------
@functools.partial(jax.jit, static_argnums=(5,))
def _forward_core(params, Ut, Uv, Ua, qmask, dims):
    D_m, D_g, D_p, D_e = dims
    S, B_real, _ = Ut.shape
    P = qmask.shape[2]

    # Pad the batch to the sublane quantum (8 for f32); padded rows are masked
    # out of the (batch-axis) SelfAttention softmax and sliced off at the end.
    B_pad = max(8, ((B_real + 7) // 8) * 8)
    pad = B_pad - B_real
    if pad:
        Ut = jnp.pad(Ut, ((0, 0), (0, pad), (0, 0)))
        Uv = jnp.pad(Uv, ((0, 0), (0, pad), (0, 0)))
        Ua = jnp.pad(Ua, ((0, 0), (0, pad), (0, 0)))
        qmask = jnp.pad(qmask, ((0, 0), (0, pad), (0, 0)))

    fused = prepare_fused(params, dims)

    # Hoisted modality projections: one tiled matmul for the whole sequence.
    x_cat = jnp.concatenate([Ut, Uv, Ua], axis=-1).reshape(S * B_pad, -1)
    u_all = pallas_projection(x_cat, fused['proj_w'],
                              fused['proj_b']).reshape(S, B_pad, 3 * D_m)

    # Speaker-selection / party-broadcast matmul operands + mixing mask (resident).
    sel = jax.nn.one_hot(jnp.argmax(qmask, axis=-1), P, dtype=jnp.float32)
    selmat = jnp.einsum('sbp,bc->sbcp', sel,
                        jnp.eye(B_pad, dtype=jnp.float32)).reshape(S, B_pad, B_pad * P)
    bcmat = jnp.repeat(jnp.eye(B_pad, dtype=jnp.float32), P, axis=0)   # (B*P, B)
    qm_flat = qmask.reshape(S, B_pad * P, 1)

    e_pad, alpha_pad = pallas_dialogue_recurrence(
        u_all, selmat, qm_flat, bcmat, fused, dims, B_real)
    e_cat = e_pad[:, :B_real, :]
    alpha_out = alpha_pad[:, :B_real, :]

    # Final scoring block (tiny; faithful to the PyTorch module, whose softmax
    # over a size-1 axis makes it e <- 2*e).
    et = e_cat[..., 0 * D_e:1 * D_e]
    ev = e_cat[..., 1 * D_e:2 * D_e]
    ea = e_cat[..., 2 * D_e:3 * D_e]
    score = jnp.stack([et, ev, ea], axis=2)                  # (S, B, 3, D_e)
    score = score @ params['self_attention']['w_t'] + params['self_attention']['b']
    score = jax.nn.softmax(score, axis=-1)[..., 0]           # (S, B, 3)
    score = jnp.tile(score, (1, 1, D_e))                     # (S, B, 3*D_e)
    e_final = e_cat + e_cat * score
    return e_final, alpha_out


def dialogue_rnn_tri_forward(params, Ut, Uv, Ua, qmask, dims):
    e_final, alpha_out = _forward_core(params, Ut, Uv, Ua, qmask, dims)
    S = Ut.shape[0]
    # PyTorch returns one (B, t) summed-attention map per step t >= 1.
    alphas = [alpha_out[s, :, :s] for s in range(1, S)]
    return e_final, alphas


# ----------------------------------------------------------------------------
if __name__ == "__main__":
    D_m_T, D_m_V, D_m_A = 16, 16, 16
    D_m, D_g, D_p, D_e = 32, 32, 32, 32
    S, B, P = 8, 2, 2

    key = jax.random.PRNGKey(0)
    kp, k1, k2, k3, k4 = jax.random.split(key, 5)
    params = init_params(kp, D_m_T, D_m_V, D_m_A, D_m, D_g, D_p, D_e)

    Ut = jax.random.normal(k1, (S, B, D_m_T), jnp.float32)
    Uv = jax.random.normal(k2, (S, B, D_m_V), jnp.float32)
    Ua = jax.random.normal(k3, (S, B, D_m_A), jnp.float32)
    party_idx = jax.random.randint(k4, (S, B), 0, P)
    qmask = jax.nn.one_hot(party_idx, P, dtype=jnp.float32)   # (S, B, P)

    e_out, alpha_list = dialogue_rnn_tri_forward(
        params, Ut, Uv, Ua, qmask, (D_m, D_g, D_p, D_e))

    jax.block_until_ready(e_out)
    for a in alpha_list:
        jax.block_until_ready(a)

    assert e_out.shape == (S, B, 3 * D_e)
    assert len(alpha_list) == S - 1
    assert alpha_list[0].shape == (B, 1) and alpha_list[-1].shape == (B, S - 1)
    assert bool(jnp.all(jnp.isfinite(e_out)))
    assert all(bool(jnp.all(jnp.isfinite(a))) for a in alpha_list)
    print("KERNEL_OK")
</pallas_src>

<mosaic_0001>
module attributes {stable_mosaic.version = 11 : i64} {
  func.func @_proj_kernel(%arg0: i32, %arg1: memref<64x48xf32, #tpu.memory_space<vmem>>, %arg2: memref<48x96xf32, #tpu.memory_space<vmem>>, %arg3: memref<1x96xf32, #tpu.memory_space<vmem>>, %arg4: memref<64x96xf32, #tpu.memory_space<vmem>>) attributes {dimension_semantics = [#tpu.dimension_semantics<parallel>], iteration_bounds = array<i64: 1>, scalar_prefetch = 0 : i64, scratch_operands = 0 : i64, tpu.core_type = #tpu.core_type<tc>, window_params = [{transform_indices = @transform_0, window_bounds = array<i64: 64, 48>}, {pipeline_mode = #tpu.pipeline_mode<synchronous>, transform_indices = @transform_1, window_bounds = array<i64: 48, 96>}, {pipeline_mode = #tpu.pipeline_mode<synchronous>, transform_indices = @transform_2, window_bounds = array<i64: 1, 96>}, {transform_indices = @transform_3, window_bounds = array<i64: 64, 96>}]} {
    %c0 = arith.constant 0 : index
    %c0_0 = arith.constant 0 : index
    %0 = vector.load %arg1[%c0, %c0_0] : memref<64x48xf32, #tpu.memory_space<vmem>>, vector<64x48xf32>
    %c0_1 = arith.constant 0 : index
    %c0_2 = arith.constant 0 : index
    %1 = vector.load %arg2[%c0_1, %c0_2] : memref<48x96xf32, #tpu.memory_space<vmem>>, vector<48x96xf32>
    %cst = arith.constant dense<0.000000e+00> : vector<64x96xf32>
    %2 = tpu.matmul %0, %1, %cst {dimension_numbers = #tpu.dot_dimension_numbers<[1], [0], [0], [1], [0, 0, 1, 1], [], []>} : vector<64x48xf32>, vector<48x96xf32>, vector<64x96xf32> -> vector<64x96xf32>
    %c0_3 = arith.constant 0 : index
    %c0_4 = arith.constant 0 : index
    %3 = vector.load %arg3[%c0_3, %c0_4] : memref<1x96xf32, #tpu.memory_space<vmem>>, vector<1x96xf32>
    %4 = vector.broadcast %3 : vector<1x96xf32> to vector<64x96xf32>
    %5 = arith.addf %2, %4 : vector<64x96xf32>
    %c0_5 = arith.constant 0 : index
    %c0_6 = arith.constant 0 : index
    %6 = vector.load %arg4[%c0_5, %c0_6] : memref<64x96xf32, #tpu.memory_space<vmem>>, vector<64x96xf32>
    tpu.vector_store %arg4[%c0_5, %c0_6], %5 {strides = array<i32>} : memref<64x96xf32, #tpu.memory_space<vmem>>, vector<64x96xf32>,
    return
  }
  func.func @transform_0(%arg0: i32) -> (i32, i32) {
    %c0_i32 = arith.constant 0 : i32
    %c0_i32_0 = arith.constant 0 : i32
    return %arg0, %c0_i32 : i32, i32
  }
  func.func @transform_1(%arg0: i32) -> (i32, i32) {
    %c0_i32 = arith.constant 0 : i32
    %c0_i32_0 = arith.constant 0 : i32
    %c0_i32_1 = arith.constant 0 : i32
    return %c0_i32, %c0_i32_0 : i32, i32
  }
  func.func @transform_2(%arg0: i32) -> (i32, i32) {
    %c0_i32 = arith.constant 0 : i32
    %c0_i32_0 = arith.constant 0 : i32
    %c0_i32_1 = arith.constant 0 : i32
    return %c0_i32, %c0_i32_0 : i32, i32
  }
  func.func @transform_3(%arg0: i32) -> (i32, i32) {
    %c0_i32 = arith.constant 0 : i32
    %c0_i32_0 = arith.constant 0 : i32
    return %arg0, %c0_i32 : i32, i32
  }
}

module attributes {stable_mosaic.version = 11 : i64} {
  func.func @_recurrence_kernel(%arg0: i32, %arg1: memref<8x8x96xf32, #tpu.memory_space<vmem>>, %arg2: memref<8x8x16xf32, #tpu.memory_space<vmem>>, %arg3: memref<8x16x1xf32, #tpu.memory_space<vmem>>, %arg4: memref<16x8xf32, #tpu.memory_space<vmem>>, %arg5: memref<96x288xf32, #tpu.memory_space<vmem>>, %arg6: memref<96x288xf32, #tpu.memory_space<vmem>>, %arg7: memref<96x288xf32, #tpu.memory_space<vmem>>, %arg8: memref<2x288xf32, #tpu.memory_space<vmem>>, %arg9: memref<96x288xf32, #tpu.memory_space<vmem>>, %arg10: memref<96x288xf32, #tpu.memory_space<vmem>>, %arg11: memref<96x288xf32, #tpu.memory_space<vmem>>, %arg12: memref<2x288xf32, #tpu.memory_space<vmem>>, %arg13: memref<96x288xf32, #tpu.memory_space<vmem>>, %arg14: memref<96x288xf32, #tpu.memory_space<vmem>>, %arg15: memref<2x288xf32, #tpu.memory_space<vmem>>, %arg16: memref<96x9xf32, #tpu.memory_space<vmem>>, %arg17: memref<96x288xf32, #tpu.memory_space<vmem>>, %arg18: memref<9x288xf32, #tpu.memory_space<vmem>>, %arg19: memref<288x9xf32, #tpu.memory_space<vmem>>, %arg20: memref<1x9xf32, #tpu.memory_space<vmem>>, %arg21: memref<288x96xf32, #tpu.memory_space<vmem>>, %arg22: memref<1x96xf32, #tpu.memory_space<vmem>>, %arg23: memref<1x8x96xf32, #tpu.memory_space<vmem>>, %arg24: memref<1x8x8xf32, #tpu.memory_space<vmem>>, %arg25: memref<8x8x9xf32, #tpu.memory_space<vmem>>, %arg26: memref<8x8x288xf32, #tpu.memory_space<vmem>>, %arg27: memref<8x96xf32, #tpu.memory_space<vmem>>, %arg28: memref<16x96xf32, #tpu.memory_space<vmem>>, %arg29: memref<8x96xf32, #tpu.memory_space<vmem>>) attributes {dimension_semantics = [#tpu.dimension_semantics<arbitrary>], iteration_bounds = array<i64: 8>, scalar_prefetch = 0 : i64, scratch_operands = 5 : i64, tpu.core_type = #tpu.core_type<tc>, window_params = [{pipeline_mode = #tpu.pipeline_mode<synchronous>, transform_indices = @transform_0, window_bounds = array<i64: 8, 8, 96>}, {pipeline_mode = #tpu.pipeline_mode<synchronous>, transform_indices = @transform_1, window_bounds = array<i64: 8, 8, 16>}, {pipeline_mode = #tpu.pipeline_mode<synchronous>, transform_indices = @transform_2, window_bounds = array<i64: 8, 16, 1>}, {pipeline_mode = #tpu.pipeline_mode<synchronous>, transform_indices = @transform_3, window_bounds = array<i64: 16, 8>}, {pipeline_mode = #tpu.pipeline_mode<synchronous>, transform_indices = @transform_4, window_bounds = array<i64: 96, 288>}, {pipeline_mode = #tpu.pipeline_mode<synchronous>, transform_indices = @transform_5, window_bounds = array<i64: 96, 288>}, {pipeline_mode = #tpu.pipeline_mode<synchronous>, transform_indices = @transform_6, window_bounds = array<i64: 96, 288>}, {pipeline_mode = #tpu.pipeline_mode<synchronous>, transform_indices = @transform_7, window_bounds = array<i64: 2, 288>}, {pipeline_mode = #tpu.pipeline_mode<synchronous>, transform_indices = @transform_8, window_bounds = array<i64: 96, 288>}, {pipeline_mode = #tpu.pipeline_mode<synchronous>, transform_indices = @transform_9, window_bounds = array<i64: 96, 288>}, {pipeline_mode = #tpu.pipeline_mode<synchronous>, transform_indices = @transform_10, window_bounds = array<i64: 96, 288>}, {pipeline_mode = #tpu.pipeline_mode<synchronous>, transform_indices = @transform_11, window_bounds = array<i64: 2, 288>}, {pipeline_mode = #tpu.pipeline_mode<synchronous>, transform_indices = @transform_12, window_bounds = array<i64: 96, 288>}, {pipeline_mode = #tpu.pipeline_mode<synchronous>, transform_indices = @transform_13, window_bounds = array<i64: 96, 288>}, {pipeline_mode = #tpu.pipeline_mode<synchronous>, transform_indices = @transform_14, window_bounds = array<i64: 2, 288>}, {pipeline_mode = #tpu.pipeline_mode<synchronous>, transform_indices = @transform_15, window_bounds = array<i64: 96, 9>}, {pipeline_mode = #tpu.pipeline_mode<synchronous>, transform_indices = @transform_16, window_bounds = array<i64: 96, 288>}, {pipeline_mode = #tpu.pipeline_mode<synchronous>, transform_indices = @transform_17, window_bounds = array<i64: 9, 288>}, {pipeline_mode = #tpu.pipeline_mode<synchronous>, transform_indices = @transform_18, window_bounds = array<i64: 288, 9>}, {pipeline_mode = #tpu.pipeline_mode<synchronous>, transform_indices = @transform_19, window_bounds = array<i64: 1, 9>}, {pipeline_mode = #tpu.pipeline_mode<synchronous>, transform_indices = @transform_20, window_bounds = array<i64: 288, 96>}, {pipeline_mode = #tpu.pipeline_mode<synchronous>, transform_indices = @transform_21, window_bounds = array<i64: 1, 96>}, {transform_indices = @transform_22, window_bounds = array<i64: 1, 8, 96>}, {transform_indices = @transform_23, window_bounds = array<i64: 1, 8, 8>}]} {
    %c0_i32 = arith.constant 0 : i32
    %0 = arith.cmpi eq, %arg0, %c0_i32 : i32
    %1 = arith.extui %0 : i1 to i32
    %c0_i32_0 = arith.constant 0 : i32
    %2 = arith.cmpi ne, %1, %c0_i32_0 : i32
    scf.if %2 {
      %cst_117 = arith.constant 0.000000e+00 : f32
      %227 = vector.broadcast %cst_117 : f32 to vector<8x8x9xf32>
      %c0_118 = arith.constant 0 : index
      %c0_119 = arith.constant 0 : index
      %c0_120 = arith.constant 0 : index
      %228 = vector.load %arg25[%c0_118, %c0_119, %c0_120] : memref<8x8x9xf32, #tpu.memory_space<vmem>>, vector<8x8x9xf32>
      tpu.vector_store %arg25[%c0_118, %c0_119, %c0_120], %227 {strides = array<i32>} : memref<8x8x9xf32, #tpu.memory_space<vmem>>, vector<8x8x9xf32>,
      %cst_121 = arith.constant 0.000000e+00 : f32
      %229 = vector.broadcast %cst_121 : f32 to vector<8x8x288xf32>
      %c0_122 = arith.constant 0 : index
      %c0_123 = arith.constant 0 : index
      %c0_124 = arith.constant 0 : index
      %230 = vector.load %arg26[%c0_122, %c0_123, %c0_124] : memref<8x8x288xf32, #tpu.memory_space<vmem>>, vector<8x8x288xf32>
      tpu.vector_store %arg26[%c0_122, %c0_123, %c0_124], %229 {strides = array<i32>} : memref<8x8x288xf32, #tpu.memory_space<vmem>>, vector<8x8x288xf32>,
      %cst_125 = arith.constant 0.000000e+00 : f32
      %231 = vector.broadcast %cst_125 : f32 to vector<8x96xf32>
      %c0_126 = arith.constant 0 : index
      %c0_127 = arith.constant 0 : index
      %232 = vector.load %arg27[%c0_126, %c0_127] : memref<8x96xf32, #tpu.memory_space<vmem>>, vector<8x96xf32>
      tpu.vector_store %arg27[%c0_126, %c0_127], %231 {strides = array<i32>} : memref<8x96xf32, #tpu.memory_space<vmem>>, vector<8x96xf32>,
      %cst_128 = arith.constant 0.000000e+00 : f32
      %233 = vector.broadcast %cst_128 : f32 to vector<16x96xf32>
      %c0_129 = arith.constant 0 : index
      %c0_130 = arith.constant 0 : index
      %234 = vector.load %arg28[%c0_129, %c0_130] : memref<16x96xf32, #tpu.memory_space<vmem>>, vector<16x96xf32>
      tpu.vector_store %arg28[%c0_129, %c0_130], %233 {strides = array<i32>} : memref<16x96xf32, #tpu.memory_space<vmem>>, vector<16x96xf32>,
      %cst_131 = arith.constant 0.000000e+00 : f32
      %235 = vector.broadcast %cst_131 : f32 to vector<8x96xf32>
      %c0_132 = arith.constant 0 : index
      %c0_133 = arith.constant 0 : index
      %236 = vector.load %arg29[%c0_132, %c0_133] : memref<8x96xf32, #tpu.memory_space<vmem>>, vector<8x96xf32>
      tpu.vector_store %arg29[%c0_132, %c0_133], %235 {strides = array<i32>} : memref<8x96xf32, #tpu.memory_space<vmem>>, vector<8x96xf32>,
    } else {
    }
    %3 = arith.index_cast %arg0 : i32 to index
    %c0 = arith.constant 0 : index
    %c0_1 = arith.constant 0 : index
    %4 = vector.load %arg1[%3, %c0, %c0_1] : memref<8x8x96xf32, #tpu.memory_space<vmem>>, vector<1x8x96xf32>
    %5 = vector.shape_cast %4 : vector<1x8x96xf32> to vector<8x96xf32>
    %6 = arith.index_cast %arg0 : i32 to index
    %c0_2 = arith.constant 0 : index
    %c0_3 = arith.constant 0 : index
    %7 = vector.load %arg2[%6, %c0_2, %c0_3] : memref<8x8x16xf32, #tpu.memory_space<vmem>>, vector<1x8x16xf32>
    %8 = vector.shape_cast %7 : vector<1x8x16xf32> to vector<8x16xf32>
    %9 = arith.index_cast %arg0 : i32 to index
    %c0_4 = arith.constant 0 : index
    %c0_5 = arith.constant 0 : index
    %10 = vector.load %arg3[%9, %c0_4, %c0_5] : memref<8x16x1xf32, #tpu.memory_space<vmem>>, vector<1x16x1xf32>
    %11 = vector.shape_cast %10 : vector<1x16x1xf32> to vector<16x1xf32>
    %c0_6 = arith.constant 0 : index
    %c0_7 = arith.constant 0 : index
    %12 = vector.load %arg28[%c0_6, %c0_7] : memref<16x96xf32, #tpu.memory_space<vmem>>, vector<16x96xf32>
    %cst = arith.constant dense<0.000000e+00> : vector<8x96xf32>
    %13 = tpu.matmul %8, %12, %cst {dimension_numbers = #tpu.dot_dimension_numbers<[1], [0], [0], [1], [0, 0, 1, 1], [], []>} : vector<8x16xf32>, vector<16x96xf32>, vector<8x96xf32> -> vector<8x96xf32>
    %c0_8 = arith.constant 0 : index
    %c0_9 = arith.constant 0 : index
    %14 = vector.load %arg27[%c0_8, %c0_9] : memref<8x96xf32, #tpu.memory_space<vmem>>, vector<8x96xf32>
    %c0_10 = arith.constant 0 : index
    %c0_11 = arith.constant 0 : index
    %15 = vector.load %arg5[%c0_10, %c0_11] : memref<96x288xf32, #tpu.memory_space<vmem>>, vector<96x288xf32>
    %cst_12 = arith.constant dense<0.000000e+00> : vector<8x288xf32>
    %16 = tpu.matmul %5, %15, %cst_12 {dimension_numbers = #tpu.dot_dimension_numbers<[1], [0], [0], [1], [0, 0, 1, 1], [], []>} : vector<8x96xf32>, vector<96x288xf32>, vector<8x288xf32> -> vector<8x288xf32>
    %c0_13 = arith.constant 0 : index
    %c0_14 = arith.constant 0 : index
    %17 = vector.load %arg6[%c0_13, %c0_14] : memref<96x288xf32, #tpu.memory_space<vmem>>, vector<96x288xf32>
    %cst_15 = arith.constant dense<0.000000e+00> : vector<8x288xf32>
    %18 = tpu.matmul %13, %17, %cst_15 {dimension_numbers = #tpu.dot_dimension_numbers<[1], [0], [0], [1], [0, 0, 1, 1], [], []>} : vector<8x96xf32>, vector<96x288xf32>, vector<8x288xf32> -> vector<8x288xf32>
    %19 = arith.addf %16, %18 : vector<8x288xf32>
    %c0_16 = arith.constant 0 : index
    %c0_17 = arith.constant 0 : index
    %20 = vector.load %arg8[%c0_16, %c0_17] : memref<2x288xf32, #tpu.memory_space<vmem>>, vector<1x288xf32>
    %21 = vector.broadcast %20 : vector<1x288xf32> to vector<8x288xf32>
    %22 = arith.addf %19, %21 : vector<8x288xf32>
    %c0_18 = arith.constant 0 : index
    %c0_19 = arith.constant 0 : index
    %23 = vector.load %arg7[%c0_18, %c0_19] : memref<96x288xf32, #tpu.memory_space<vmem>>, vector<96x288xf32>
    %cst_20 = arith.constant dense<0.000000e+00> : vector<8x288xf32>
    %24 = tpu.matmul %14, %23, %cst_20 {dimension_numbers = #tpu.dot_dimension_numbers<[1], [0], [0], [1], [0, 0, 1, 1], [], []>} : vector<8x96xf32>, vector<96x288xf32>, vector<8x288xf32> -> vector<8x288xf32>
    %c1 = arith.constant 1 : index
    %c0_21 = arith.constant 0 : index
    %25 = vector.load %arg8[%c1, %c0_21] : memref<2x288xf32, #tpu.memory_space<vmem>>, vector<1x288xf32>
    %26 = vector.broadcast %25 : vector<1x288xf32> to vector<8x288xf32>
    %27 = arith.addf %24, %26 : vector<8x288xf32>
    %28 = vector.extract_strided_slice %22 {offsets = [0, 0], sizes = [8, 96], strides = [1, 1]} : vector<8x288xf32> to vector<8x96xf32>
    %29 = vector.extract_strided_slice %27 {offsets = [0, 0], sizes = [8, 96], strides = [1, 1]} : vector<8x288xf32> to vector<8x96xf32>
    %30 = arith.addf %28, %29 : vector<8x96xf32>
    %31 = arith.negf %30 : vector<8x96xf32>
    %32 = math.exp %31 : vector<8x96xf32>
    %cst_22 = arith.constant 1.000000e+00 : f32
    %33 = vector.broadcast %cst_22 : f32 to vector<8x96xf32>
    %34 = arith.addf %33, %32 : vector<8x96xf32>
    %35 = arith.divf %33, %34 : vector<8x96xf32>
    %36 = vector.extract_strided_slice %22 {offsets = [0, 96], sizes = [8, 96], strides = [1, 1]} : vector<8x288xf32> to vector<8x96xf32>
    %37 = vector.extract_strided_slice %27 {offsets = [0, 96], sizes = [8, 96], strides = [1, 1]} : vector<8x288xf32> to vector<8x96xf32>
    %38 = arith.addf %36, %37 : vector<8x96xf32>
    %39 = arith.negf %38 : vector<8x96xf32>
    %40 = math.exp %39 : vector<8x96xf32>
    %cst_23 = arith.constant 1.000000e+00 : f32
    %41 = vector.broadcast %cst_23 : f32 to vector<8x96xf32>
    %42 = arith.addf %41, %40 : vector<8x96xf32>
    %43 = arith.divf %41, %42 : vector<8x96xf32>
    %44 = vector.extract_strided_slice %22 {offsets = [0, 192], sizes = [8, 96], strides = [1, 1]} : vector<8x288xf32> to vector<8x96xf32>
    %45 = vector.extract_strided_slice %27 {offsets = [0, 192], sizes = [8, 96], strides = [1, 1]} : vector<8x288xf32> to vector<8x96xf32>
    %46 = arith.mulf %35, %45 : vector<8x96xf32>
    %47 = arith.addf %44, %46 : vector<8x96xf32>
    %48 = math.tanh %47 : vector<8x96xf32>
    %cst_24 = arith.constant 1.000000e+00 : f32
    %49 = vector.broadcast %cst_24 : f32 to vector<8x96xf32>
    %50 = arith.subf %49, %43 : vector<8x96xf32>
    %51 = arith.mulf %50, %48 : vector<8x96xf32>
    %52 = arith.mulf %43, %14 : vector<8x96xf32>
    %53 = arith.addf %51, %52 : vector<8x96xf32>
    %c0_25 = arith.constant 0 : index
    %c0_26 = arith.constant 0 : index
    %c0_27 = arith.constant 0 : index
    %54 = vector.load %arg25[%c0_25, %c0_26, %c0_27] : memref<8x8x9xf32, #tpu.memory_space<vmem>>, vector<8x8x9xf32>
    %55 = tpu.iota {dimensions = array<i32: 0>} : vector<8x1x1xi32>
    %56 = vector.broadcast %arg0 : i32 to vector<8x1x1xi32>
    %57 = arith.cmpi slt, %55, %56 : vector<8x1x1xi32>
    %cst_28 = arith.constant -1.000000e+30 : f32
    %58 = vector.shape_cast %57 : vector<8x1x1xi1> to vector<8x1x1xi1>
    %59 = vector.broadcast %58 : vector<8x1x1xi1> to vector<8x8x9xi1>
    %60 = vector.broadcast %cst_28 : f32 to vector<8x8x9xf32>
    %61 = arith.select %59, %54, %60 : vector<8x8x9xi1>, vector<8x8x9xf32>
    %cst_29 = arith.constant dense<0xFF800000> : vector<8x9xf32>
    %62 = vector.multi_reduction <maximumf>, %61, %cst_29 [0] : vector<8x8x9xf32> to vector<8x9xf32>
    %63 = vector.shape_cast %62 : vector<8x9xf32> to vector<1x8x9xf32>
    %64 = vector.broadcast %63 : vector<1x8x9xf32> to vector<8x8x9xf32>
    %65 = arith.subf %61, %64 : vector<8x8x9xf32>
    %66 = math.exp %65 : vector<8x8x9xf32>
    %cst_30 = arith.constant 0.000000e+00 : f32
    %67 = vector.shape_cast %57 : vector<8x1x1xi1> to vector<8x1x1xi1>
    %68 = vector.broadcast %67 : vector<8x1x1xi1> to vector<8x8x9xi1>
    %69 = vector.broadcast %cst_30 : f32 to vector<8x8x9xf32>
    %70 = arith.select %68, %66, %69 : vector<8x8x9xi1>, vector<8x8x9xf32>
    %cst_31 = arith.constant dense<0.000000e+00> : vector<8x9xf32>
    %71 = vector.multi_reduction <add>, %70, %cst_31 [0] : vector<8x8x9xf32> to vector<8x9xf32>
    %72 = vector.shape_cast %71 : vector<8x9xf32> to vector<1x8x9xf32>
    %cst_32 = arith.constant 1.000000e-30 : f32
    %73 = vector.broadcast %cst_32 : f32 to vector<1x8x9xf32>
    %74 = arith.maximumf %72, %73 : vector<1x8x9xf32>
    %75 = vector.broadcast %74 : vector<1x8x9xf32> to vector<8x8x9xf32>
    %76 = arith.divf %70, %75 : vector<8x8x9xf32>
    %cst_33 = arith.constant dense<0.000000e+00> : vector<8x8xf32>
    %77 = vector.multi_reduction <add>, %76, %cst_33 [2] : vector<8x8x9xf32> to vector<8x8xf32>
    %78 = tpu.transpose %77, [1, 0] : vector<8x8xf32> -> vector<8x8xf32>
    %c0_34 = arith.constant 0 : index
    %c0_35 = arith.constant 0 : index
    %c0_36 = arith.constant 0 : index
    %79 = vector.load %arg24[%c0_34, %c0_35, %c0_36] : memref<1x8x8xf32, #tpu.memory_space<vmem>>, vector<1x8x8xf32>
    %80 = vector.shape_cast %79 : vector<1x8x8xf32> to vector<8x8xf32>
    %81 = vector.shape_cast %78 : vector<8x8xf32> to vector<1x8x8xf32>
    tpu.vector_store %arg24[%c0_34, %c0_35, %c0_36], %81 {strides = array<i32>} : memref<1x8x8xf32, #tpu.memory_space<vmem>>, vector<1x8x8xf32>,
    %82 = vector.shape_cast %76 : vector<8x8x9xf32> to vector<64x9xf32>
    %c0_37 = arith.constant 0 : index
    %c0_38 = arith.constant 0 : index
    %83 = vector.load %arg18[%c0_37, %c0_38] : memref<9x288xf32, #tpu.memory_space<vmem>>, vector<9x288xf32>
    %cst_39 = arith.constant dense<0.000000e+00> : vector<64x288xf32>
    %84 = tpu.matmul %82, %83, %cst_39 {dimension_numbers = #tpu.dot_dimension_numbers<[1], [0], [0], [1], [0, 0, 1, 1], [], []>} : vector<64x9xf32>, vector<9x288xf32>, vector<64x288xf32> -> vector<64x288xf32>
    %85 = vector.shape_cast %84 : vector<64x288xf32> to vector<8x8x288xf32>
    %c0_40 = arith.constant 0 : index
    %c0_41 = arith.constant 0 : index
    %c0_42 = arith.constant 0 : index
    %86 = vector.load %arg26[%c0_40, %c0_41, %c0_42] : memref<8x8x288xf32, #tpu.memory_space<vmem>>, vector<8x8x288xf32>
    %87 = arith.mulf %85, %86 : vector<8x8x288xf32>
    %cst_43 = arith.constant dense<0.000000e+00> : vector<8x288xf32>
    %88 = vector.multi_reduction <add>, %87, %cst_43 [0] : vector<8x8x288xf32> to vector<8x288xf32>
    %c0_44 = arith.constant 0 : index
    %c0_45 = arith.constant 0 : index
    %89 = vector.load %arg19[%c0_44, %c0_45] : memref<288x9xf32, #tpu.memory_space<vmem>>, vector<288x9xf32>
    %cst_46 = arith.constant dense<0.000000e+00> : vector<8x9xf32>
    %90 = tpu.matmul %88, %89, %cst_46 {dimension_numbers = #tpu.dot_dimension_numbers<[1], [0], [0], [1], [0, 0, 1, 1], [], []>} : vector<8x288xf32>, vector<288x9xf32>, vector<8x9xf32> -> vector<8x9xf32>
    %c0_47 = arith.constant 0 : index
    %c0_48 = arith.constant 0 : index
    %91 = vector.load %arg20[%c0_47, %c0_48] : memref<1x9xf32, #tpu.memory_space<vmem>>, vector<1x9xf32>
    %92 = vector.broadcast %91 : vector<1x9xf32> to vector<8x9xf32>
    %93 = arith.addf %90, %92 : vector<8x9xf32>
    %94 = tpu.iota {dimensions = array<i32: 0>} : vector<8x1xi32>
    %c2_i32 = arith.constant 2 : i32
    %95 = vector.broadcast %c2_i32 : i32 to vector<8x1xi32>
    %96 = arith.cmpi slt, %94, %95 : vector<8x1xi32>
    %cst_49 = arith.constant -1.000000e+30 : f32
    %97 = vector.shape_cast %96 : vector<8x1xi1> to vector<8x1xi1>
    %98 = vector.broadcast %97 : vector<8x1xi1> to vector<8x9xi1>
    %99 = vector.broadcast %cst_49 : f32 to vector<8x9xf32>
    %100 = arith.select %98, %93, %99 : vector<8x9xi1>, vector<8x9xf32>
    %cst_50 = arith.constant dense<0xFF800000> : vector<9xf32>
    %101 = vector.multi_reduction <maximumf>, %100, %cst_50 [0] : vector<8x9xf32> to vector<9xf32>
    %102 = vector.shape_cast %101 : vector<9xf32> to vector<1x9xf32>
    %103 = vector.broadcast %102 : vector<1x9xf32> to vector<8x9xf32>
    %104 = arith.subf %100, %103 : vector<8x9xf32>
    %105 = math.exp %104 : vector<8x9xf32>
    %cst_51 = arith.constant dense<0.000000e+00> : vector<9xf32>
    %106 = vector.multi_reduction <add>, %105, %cst_51 [0] : vector<8x9xf32> to vector<9xf32>
    %107 = vector.shape_cast %106 : vector<9xf32> to vector<1x9xf32>
    %108 = vector.broadcast %107 : vector<1x9xf32> to vector<8x9xf32>
    %109 = arith.divf %105, %108 : vector<8x9xf32>
    %c0_52 = arith.constant 0 : index
    %c0_53 = arith.constant 0 : index
    %110 = vector.load %arg18[%c0_52, %c0_53] : memref<9x288xf32, #tpu.memory_space<vmem>>, vector<9x288xf32>
    %cst_54 = arith.constant dense<0.000000e+00> : vector<8x288xf32>
    %111 = tpu.matmul %109, %110, %cst_54 {dimension_numbers = #tpu.dot_dimension_numbers<[1], [0], [0], [1], [0, 0, 1, 1], [], []>} : vector<8x9xf32>, vector<9x288xf32>, vector<8x288xf32> -> vector<8x288xf32>
    %cst_55 = arith.constant 1.000000e+00 : f32
    %112 = vector.broadcast %cst_55 : f32 to vector<8x288xf32>
    %113 = arith.addf %112, %111 : vector<8x288xf32>
    %114 = arith.mulf %88, %113 : vector<8x288xf32>
    %c0_56 = arith.constant 0 : index
    %c0_57 = arith.constant 0 : index
    %115 = vector.load %arg21[%c0_56, %c0_57] : memref<288x96xf32, #tpu.memory_space<vmem>>, vector<288x96xf32>
    %cst_58 = arith.constant dense<0.000000e+00> : vector<8x96xf32>
    %116 = tpu.matmul %114, %115, %cst_58 {dimension_numbers = #tpu.dot_dimension_numbers<[1], [0], [0], [1], [0, 0, 1, 1], [], []>} : vector<8x288xf32>, vector<288x96xf32>, vector<8x96xf32> -> vector<8x96xf32>
    %c0_59 = arith.constant 0 : index
    %c0_60 = arith.constant 0 : index
    %117 = vector.load %arg22[%c0_59, %c0_60] : memref<1x96xf32, #tpu.memory_space<vmem>>, vector<1x96xf32>
    %118 = vector.broadcast %117 : vector<1x96xf32> to vector<8x96xf32>
    %119 = arith.addf %116, %118 : vector<8x96xf32>
    %c0_i32_61 = arith.constant 0 : i32
    %120 = arith.cmpi sgt, %arg0, %c0_i32_61 : i32
    %121 = arith.extui %120 : i1 to i32
    %122 = arith.sitofp %121 : i32 to f32
    %123 = vector.broadcast %122 : f32 to vector<8x96xf32>
    %124 = arith.mulf %119, %123 : vector<8x96xf32>
    %c0_62 = arith.constant 0 : index
    %c0_63 = arith.constant 0 : index
    %125 = vector.load %arg9[%c0_62, %c0_63] : memref<96x288xf32, #tpu.memory_space<vmem>>, vector<96x288xf32>
    %cst_64 = arith.constant dense<0.000000e+00> : vector<8x288xf32>
    %126 = tpu.matmul %5, %125, %cst_64 {dimension_numbers = #tpu.dot_dimension_numbers<[1], [0], [0], [1], [0, 0, 1, 1], [], []>} : vector<8x96xf32>, vector<96x288xf32>, vector<8x288xf32> -> vector<8x288xf32>
    %c0_65 = arith.constant 0 : index
    %c0_66 = arith.constant 0 : index
    %127 = vector.load %arg10[%c0_65, %c0_66] : memref<96x288xf32, #tpu.memory_space<vmem>>, vector<96x288xf32>
    %cst_67 = arith.constant dense<0.000000e+00> : vector<8x288xf32>
    %128 = tpu.matmul %124, %127, %cst_67 {dimension_numbers = #tpu.dot_dimension_numbers<[1], [0], [0], [1], [0, 0, 1, 1], [], []>} : vector<8x96xf32>, vector<96x288xf32>, vector<8x288xf32> -> vector<8x288xf32>
    %129 = arith.addf %126, %128 : vector<8x288xf32>
    %c0_68 = arith.constant 0 : index
    %c0_69 = arith.constant 0 : index
    %130 = vector.load %arg12[%c0_68, %c0_69] : memref<2x288xf32, #tpu.memory_space<vmem>>, vector<1x288xf32>
    %131 = vector.broadcast %130 : vector<1x288xf32> to vector<8x288xf32>
    %132 = arith.addf %129, %131 : vector<8x288xf32>
    %c0_70 = arith.constant 0 : index
    %c0_71 = arith.constant 0 : index
    %133 = vector.load %arg4[%c0_70, %c0_71] : memref<16x8xf32, #tpu.memory_space<vmem>>, vector<16x8xf32>
    %cst_72 = arith.constant dense<0.000000e+00> : vector<16x288xf32>
    %134 = tpu.matmul %133, %132, %cst_72 {dimension_numbers = #tpu.dot_dimension_numbers<[1], [0], [0], [1], [0, 0, 1, 1], [], []>} : vector<16x8xf32>, vector<8x288xf32>, vector<16x288xf32> -> vector<16x288xf32>
    %c0_73 = arith.constant 0 : index
    %c0_74 = arith.constant 0 : index
    %135 = vector.load %arg11[%c0_73, %c0_74] : memref<96x288xf32, #tpu.memory_space<vmem>>, vector<96x288xf32>
    %cst_75 = arith.constant dense<0.000000e+00> : vector<16x288xf32>
    %136 = tpu.matmul %12, %135, %cst_75 {dimension_numbers = #tpu.dot_dimension_numbers<[1], [0], [0], [1], [0, 0, 1, 1], [], []>} : vector<16x96xf32>, vector<96x288xf32>, vector<16x288xf32> -> vector<16x288xf32>
    %c1_76 = arith.constant 1 : index
    %c0_77 = arith.constant 0 : index
    %137 = vector.load %arg12[%c1_76, %c0_77] : memref<2x288xf32, #tpu.memory_space<vmem>>, vector<1x288xf32>
    %138 = vector.broadcast %137 : vector<1x288xf32> to vector<16x288xf32>
    %139 = arith.addf %136, %138 : vector<16x288xf32>
    %140 = vector.extract_strided_slice %134 {offsets = [0, 0], sizes = [16, 96], strides = [1, 1]} : vector<16x288xf32> to vector<16x96xf32>
    %141 = vector.extract_strided_slice %139 {offsets = [0, 0], sizes = [16, 96], strides = [1, 1]} : vector<16x288xf32> to vector<16x96xf32>
    %142 = arith.addf %140, %141 : vector<16x96xf32>
    %143 = arith.negf %142 : vector<16x96xf32>
    %144 = math.exp %143 : vector<16x96xf32>
    %cst_78 = arith.constant 1.000000e+00 : f32
    %145 = vector.broadcast %cst_78 : f32 to vector<16x96xf32>
    %146 = arith.addf %145, %144 : vector<16x96xf32>
    %147 = arith.divf %145, %146 : vector<16x96xf32>
    %148 = vector.extract_strided_slice %134 {offsets = [0, 96], sizes = [16, 96], strides = [1, 1]} : vector<16x288xf32> to vector<16x96xf32>
    %149 = vector.extract_strided_slice %139 {offsets = [0, 96], sizes = [16, 96], strides = [1, 1]} : vector<16x288xf32> to vector<16x96xf32>
    %150 = arith.addf %148, %149 : vector<16x96xf32>
    %151 = arith.negf %150 : vector<16x96xf32>
    %152 = math.exp %151 : vector<16x96xf32>
    %cst_79 = arith.constant 1.000000e+00 : f32
    %153 = vector.broadcast %cst_79 : f32 to vector<16x96xf32>
    %154 = arith.addf %153, %152 : vector<16x96xf32>
    %155 = arith.divf %153, %154 : vector<16x96xf32>
    %156 = vector.extract_strided_slice %134 {offsets = [0, 192], sizes = [16, 96], strides = [1, 1]} : vector<16x288xf32> to vector<16x96xf32>
    %157 = vector.extract_strided_slice %139 {offsets = [0, 192], sizes = [16, 96], strides = [1, 1]} : vector<16x288xf32> to vector<16x96xf32>
    %158 = arith.mulf %147, %157 : vector<16x96xf32>
    %159 = arith.addf %156, %158 : vector<16x96xf32>
    %160 = math.tanh %159 : vector<16x96xf32>
    %cst_80 = arith.constant 1.000000e+00 : f32
    %161 = vector.broadcast %cst_80 : f32 to vector<16x96xf32>
    %162 = arith.subf %161, %155 : vector<16x96xf32>
    %163 = arith.mulf %162, %160 : vector<16x96xf32>
    %164 = arith.mulf %155, %12 : vector<16x96xf32>
    %165 = arith.addf %163, %164 : vector<16x96xf32>
    %cst_81 = arith.constant 1.000000e+00 : f32
    %166 = vector.broadcast %cst_81 : f32 to vector<16x1xf32>
    %167 = arith.subf %166, %11 : vector<16x1xf32>
    %168 = vector.broadcast %167 : vector<16x1xf32> to vector<16x96xf32>
    %169 = arith.mulf %12, %168 : vector<16x96xf32>
    %170 = vector.broadcast %11 : vector<16x1xf32> to vector<16x96xf32>
    %171 = arith.mulf %165, %170 : vector<16x96xf32>
    %172 = arith.addf %169, %171 : vector<16x96xf32>
    %c0_82 = arith.constant 0 : index
    %c0_83 = arith.constant 0 : index
    %173 = vector.load %arg28[%c0_82, %c0_83] : memref<16x96xf32, #tpu.memory_space<vmem>>, vector<16x96xf32>
    tpu.vector_store %arg28[%c0_82, %c0_83], %172 {strides = array<i32>} : memref<16x96xf32, #tpu.memory_space<vmem>>, vector<16x96xf32>,
    %cst_84 = arith.constant dense<0.000000e+00> : vector<8x96xf32>
    %174 = tpu.matmul %8, %172, %cst_84 {dimension_numbers = #tpu.dot_dimension_numbers<[1], [0], [0], [1], [0, 0, 1, 1], [], []>} : vector<8x16xf32>, vector<16x96xf32>, vector<8x96xf32> -> vector<8x96xf32>
    %c0_85 = arith.constant 0 : index
    %c0_86 = arith.constant 0 : index
    %175 = vector.load %arg29[%c0_85, %c0_86] : memref<8x96xf32, #tpu.memory_space<vmem>>, vector<8x96xf32>
    %c0_87 = arith.constant 0 : index
    %c0_88 = arith.constant 0 : index
    %176 = vector.load %arg13[%c0_87, %c0_88] : memref<96x288xf32, #tpu.memory_space<vmem>>, vector<96x288xf32>
    %cst_89 = arith.constant dense<0.000000e+00> : vector<8x288xf32>
    %177 = tpu.matmul %174, %176, %cst_89 {dimension_numbers = #tpu.dot_dimension_numbers<[1], [0], [0], [1], [0, 0, 1, 1], [], []>} : vector<8x96xf32>, vector<96x288xf32>, vector<8x288xf32> -> vector<8x288xf32>
    %c0_90 = arith.constant 0 : index
    %c0_91 = arith.constant 0 : index
    %178 = vector.load %arg15[%c0_90, %c0_91] : memref<2x288xf32, #tpu.memory_space<vmem>>, vector<1x288xf32>
    %179 = vector.broadcast %178 : vector<1x288xf32> to vector<8x288xf32>
    %180 = arith.addf %177, %179 : vector<8x288xf32>
    %c0_92 = arith.constant 0 : index
    %c0_93 = arith.constant 0 : index
    %181 = vector.load %arg14[%c0_92, %c0_93] : memref<96x288xf32, #tpu.memory_space<vmem>>, vector<96x288xf32>
    %cst_94 = arith.constant dense<0.000000e+00> : vector<8x288xf32>
    %182 = tpu.matmul %175, %181, %cst_94 {dimension_numbers = #tpu.dot_dimension_numbers<[1], [0], [0], [1], [0, 0, 1, 1], [], []>} : vector<8x96xf32>, vector<96x288xf32>, vector<8x288xf32> -> vector<8x288xf32>
    %c1_95 = arith.constant 1 : index
    %c0_96 = arith.constant 0 : index
    %183 = vector.load %arg15[%c1_95, %c0_96] : memref<2x288xf32, #tpu.memory_space<vmem>>, vector<1x288xf32>
    %184 = vector.broadcast %183 : vector<1x288xf32> to vector<8x288xf32>
    %185 = arith.addf %182, %184 : vector<8x288xf32>
    %186 = vector.extract_strided_slice %180 {offsets = [0, 0], sizes = [8, 96], strides = [1, 1]} : vector<8x288xf32> to vector<8x96xf32>
    %187 = vector.extract_strided_slice %185 {offsets = [0, 0], sizes = [8, 96], strides = [1, 1]} : vector<8x288xf32> to vector<8x96xf32>
    %188 = arith.addf %186, %187 : vector<8x96xf32>
    %189 = arith.negf %188 : vector<8x96xf32>
    %190 = math.exp %189 : vector<8x96xf32>
    %cst_97 = arith.constant 1.000000e+00 : f32
    %191 = vector.broadcast %cst_97 : f32 to vector<8x96xf32>
    %192 = arith.addf %191, %190 : vector<8x96xf32>
    %193 = arith.divf %191, %192 : vector<8x96xf32>
    %194 = vector.extract_strided_slice %180 {offsets = [0, 96], sizes = [8, 96], strides = [1, 1]} : vector<8x288xf32> to vector<8x96xf32>
    %195 = vector.extract_strided_slice %185 {offsets = [0, 96], sizes = [8, 96], strides = [1, 1]} : vector<8x288xf32> to vector<8x96xf32>
    %196 = arith.addf %194, %195 : vector<8x96xf32>
    %197 = arith.negf %196 : vector<8x96xf32>
    %198 = math.exp %197 : vector<8x96xf32>
    %cst_98 = arith.constant 1.000000e+00 : f32
    %199 = vector.broadcast %cst_98 : f32 to vector<8x96xf32>
    %200 = arith.addf %199, %198 : vector<8x96xf32>
    %201 = arith.divf %199, %200 : vector<8x96xf32>
    %202 = vector.extract_strided_slice %180 {offsets = [0, 192], sizes = [8, 96], strides = [1, 1]} : vector<8x288xf32> to vector<8x96xf32>
    %203 = vector.extract_strided_slice %185 {offsets = [0, 192], sizes = [8, 96], strides = [1, 1]} : vector<8x288xf32> to vector<8x96xf32>
    %204 = arith.mulf %193, %203 : vector<8x96xf32>
    %205 = arith.addf %202, %204 : vector<8x96xf32>
    %206 = math.tanh %205 : vector<8x96xf32>
    %cst_99 = arith.constant 1.000000e+00 : f32
    %207 = vector.broadcast %cst_99 : f32 to vector<8x96xf32>
    %208 = arith.subf %207, %201 : vector<8x96xf32>
    %209 = arith.mulf %208, %206 : vector<8x96xf32>
    %210 = arith.mulf %201, %175 : vector<8x96xf32>
    %211 = arith.addf %209, %210 : vector<8x96xf32>
    %c0_100 = arith.constant 0 : index
    %c0_101 = arith.constant 0 : index
    %212 = vector.load %arg29[%c0_100, %c0_101] : memref<8x96xf32, #tpu.memory_space<vmem>>, vector<8x96xf32>
    tpu.vector_store %arg29[%c0_100, %c0_101], %211 {strides = array<i32>} : memref<8x96xf32, #tpu.memory_space<vmem>>, vector<8x96xf32>,
    %c0_102 = arith.constant 0 : index
    %c0_103 = arith.constant 0 : index
    %c0_104 = arith.constant 0 : index
    %213 = vector.load %arg23[%c0_102, %c0_103, %c0_104] : memref<1x8x96xf32, #tpu.memory_space<vmem>>, vector<1x8x96xf32>
    %214 = vector.shape_cast %213 : vector<1x8x96xf32> to vector<8x96xf32>
    %215 = vector.shape_cast %211 : vector<8x96xf32> to vector<1x8x96xf32>
    tpu.vector_store %arg23[%c0_102, %c0_103, %c0_104], %215 {strides = array<i32>} : memref<1x8x96xf32, #tpu.memory_space<vmem>>, vector<1x8x96xf32>,
    %c0_105 = arith.constant 0 : index
    %c0_106 = arith.constant 0 : index
    %216 = vector.load %arg27[%c0_105, %c0_106] : memref<8x96xf32, #tpu.memory_space<vmem>>, vector<8x96xf32>
    tpu.vector_store %arg27[%c0_105, %c0_106], %53 {strides = array<i32>} : memref<8x96xf32, #tpu.memory_space<vmem>>, vector<8x96xf32>,
    %c0_107 = arith.constant 0 : index
    %c0_108 = arith.constant 0 : index
    %217 = vector.load %arg16[%c0_107, %c0_108] : memref<96x9xf32, #tpu.memory_space<vmem>>, vector<96x9xf32>
    %cst_109 = arith.constant dense<0.000000e+00> : vector<8x9xf32>
    %218 = tpu.matmul %53, %217, %cst_109 {dimension_numbers = #tpu.dot_dimension_numbers<[1], [0], [0], [1], [0, 0, 1, 1], [], []>} : vector<8x96xf32>, vector<96x9xf32>, vector<8x9xf32> -> vector<8x9xf32>
    %219 = vector.shape_cast %218 : vector<8x9xf32> to vector<1x8x9xf32>
    %220 = arith.index_cast %arg0 : i32 to index
    %c0_110 = arith.constant 0 : index
    %c0_111 = arith.constant 0 : index
    %221 = vector.load %arg25[%220, %c0_110, %c0_111] : memref<8x8x9xf32, #tpu.memory_space<vmem>>, vector<1x8x9xf32>
    tpu.vector_store %arg25[%220, %c0_110, %c0_111], %219 {strides = array<i32>} : memref<8x8x9xf32, #tpu.memory_space<vmem>>, vector<1x8x9xf32>,
    %c0_112 = arith.constant 0 : index
    %c0_113 = arith.constant 0 : index
    %222 = vector.load %arg17[%c0_112, %c0_113] : memref<96x288xf32, #tpu.memory_space<vmem>>, vector<96x288xf32>
    %cst_114 = arith.constant dense<0.000000e+00> : vector<8x288xf32>
    %223 = tpu.matmul %53, %222, %cst_114 {dimension_numbers = #tpu.dot_dimension_numbers<[1], [0], [0], [1], [0, 0, 1, 1], [], []>} : vector<8x96xf32>, vector<96x288xf32>, vector<8x288xf32> -> vector<8x288xf32>
    %224 = vector.shape_cast %223 : vector<8x288xf32> to vector<1x8x288xf32>
    %225 = arith.index_cast %arg0 : i32 to index
    %c0_115 = arith.constant 0 : index
    %c0_116 = arith.constant 0 : index
    %226 = vector.load %arg26[%225, %c0_115, %c0_116] : memref<8x8x288xf32, #tpu.memory_space<vmem>>, vector<1x8x288xf32>
    tpu.vector_store %arg26[%225, %c0_115, %c0_116], %224 {strides = array<i32>} : memref<8x8x288xf32, #tpu.memory_space<vmem>>, vector<1x8x288xf32>,
    return
  }
  func.func @transform_0(%arg0: i32) -> (i32, i32, i32) {
    %c0_i32 = arith.constant 0 : i32
    %c0_i32_0 = arith.constant 0 : i32
    %c0_i32_1 = arith.constant 0 : i32
    %c0_i32_2 = arith.constant 0 : i32
    return %c0_i32, %c0_i32_0, %c0_i32_1 : i32, i32, i32
  }
  func.func @transform_1(%arg0: i32) -> (i32, i32, i32) {
    %c0_i32 = arith.constant 0 : i32
    %c0_i32_0 = arith.constant 0 : i32
    %c0_i32_1 = arith.constant 0 : i32
    %c0_i32_2 = arith.constant 0 : i32
    return %c0_i32, %c0_i32_0, %c0_i32_1 : i32, i32, i32
  }
  func.func @transform_2(%arg0: i32) -> (i32, i32, i32) {
    %c0_i32 = arith.constant 0 : i32
    %c0_i32_0 = arith.constant 0 : i32
    %c0_i32_1 = arith.constant 0 : i32
    %c0_i32_2 = arith.constant 0 : i32
    return %c0_i32, %c0_i32_0, %c0_i32_1 : i32, i32, i32
  }
  func.func @transform_3(%arg0: i32) -> (i32, i32) {
    %c0_i32 = arith.constant 0 : i32
    %c0_i32_0 = arith.constant 0 : i32
    %c0_i32_1 = arith.constant 0 : i32
    return %c0_i32, %c0_i32_0 : i32, i32
  }
  func.func @transform_4(%arg0: i32) -> (i32, i32) {
    %c0_i32 = arith.constant 0 : i32
    %c0_i32_0 = arith.constant 0 : i32
    %c0_i32_1 = arith.constant 0 : i32
    return %c0_i32, %c0_i32_0 : i32, i32
  }
  func.func @transform_5(%arg0: i32) -> (i32, i32) {
    %c0_i32 = arith.constant 0 : i32
    %c0_i32_0 = arith.constant 0 : i32
    %c0_i32_1 = arith.constant 0 : i32
    return %c0_i32, %c0_i32_0 : i32, i32
  }
  func.func @transform_6(%arg0: i32) -> (i32, i32) {
    %c0_i32 = arith.constant 0 : i32
    %c0_i32_0 = arith.constant 0 : i32
    %c0_i32_1 = arith.constant 0 : i32
    return %c0_i32, %c0_i32_0 : i32, i32
  }
  func.func @transform_7(%arg0: i32) -> (i32, i32) {
    %c0_i32 = arith.constant 0 : i32
    %c0_i32_0 = arith.constant 0 : i32
    %c0_i32_1 = arith.constant 0 : i32
    return %c0_i32, %c0_i32_0 : i32, i32
  }
  func.func @transform_8(%arg0: i32) -> (i32, i32) {
    %c0_i32 = arith.constant 0 : i32
    %c0_i32_0 = arith.constant 0 : i32
    %c0_i32_1 = arith.constant 0 : i32
    return %c0_i32, %c0_i32_0 : i32, i32
  }
  func.func @transform_9(%arg0: i32) -> (i32, i32) {
    %c0_i32 = arith.constant 0 : i32
    %c0_i32_0 = arith.constant 0 : i32
    %c0_i32_1 = arith.constant 0 : i32
    return %c0_i32, %c0_i32_0 : i32, i32
  }
  func.func @transform_10(%arg0: i32) -> (i32, i32) {
    %c0_i32 = arith.constant 0 : i32
    %c0_i32_0 = arith.constant 0 : i32
    %c0_i32_1 = arith.constant 0 : i32
    return %c0_i32, %c0_i32_0 : i32, i32
  }
  func.func @transform_11(%arg0: i32) -> (i32, i32) {
    %c0_i32 = arith.constant 0 : i32
    %c0_i32_0 = arith.constant 0 : i32
    %c0_i32_1 = arith.constant 0 : i32
    return %c0_i32, %c0_i32_0 : i32, i32
  }
  func.func @transform_12(%arg0: i32) -> (i32, i32) {
    %c0_i32 = arith.constant 0 : i32
    %c0_i32_0 = arith.constant 0 : i32
    %c0_i32_1 = arith.constant 0 : i32
    return %c0_i32, %c0_i32_0 : i32, i32
  }
  func.func @transform_13(%arg0: i32) -> (i32, i32) {
    %c0_i32 = arith.constant 0 : i32
    %c0_i32_0 = arith.constant 0 : i32
    %c0_i32_1 = arith.constant 0 : i32
    return %c0_i32, %c0_i32_0 : i32, i32
  }
  func.func @transform_14(%arg0: i32) -> (i32, i32) {
    %c0_i32 = arith.constant 0 : i32
    %c0_i32_0 = arith.constant 0 : i32
    %c0_i32_1 = arith.constant 0 : i32
    return %c0_i32, %c0_i32_0 : i32, i32
  }
  func.func @transform_15(%arg0: i32) -> (i32, i32) {
    %c0_i32 = arith.constant 0 : i32
    %c0_i32_0 = arith.constant 0 : i32
    %c0_i32_1 = arith.constant 0 : i32
    return %c0_i32, %c0_i32_0 : i32, i32
  }
  func.func @transform_16(%arg0: i32) -> (i32, i32) {
    %c0_i32 = arith.constant 0 : i32
    %c0_i32_0 = arith.constant 0 : i32
    %c0_i32_1 = arith.constant 0 : i32
    return %c0_i32, %c0_i32_0 : i32, i32
  }
  func.func @transform_17(%arg0: i32) -> (i32, i32) {
    %c0_i32 = arith.constant 0 : i32
    %c0_i32_0 = arith.constant 0 : i32
    %c0_i32_1 = arith.constant 0 : i32
    return %c0_i32, %c0_i32_0 : i32, i32
  }
  func.func @transform_18(%arg0: i32) -> (i32, i32) {
    %c0_i32 = arith.constant 0 : i32
    %c0_i32_0 = arith.constant 0 : i32
    %c0_i32_1 = arith.constant 0 : i32
    return %c0_i32, %c0_i32_0 : i32, i32
  }
  func.func @transform_19(%arg0: i32) -> (i32, i32) {
    %c0_i32 = arith.constant 0 : i32
    %c0_i32_0 = arith.constant 0 : i32
    %c0_i32_1 = arith.constant 0 : i32
    return %c0_i32, %c0_i32_0 : i32, i32
  }
  func.func @transform_20(%arg0: i32) -> (i32, i32) {
    %c0_i32 = arith.constant 0 : i32
    %c0_i32_0 = arith.constant 0 : i32
    %c0_i32_1 = arith.constant 0 : i32
    return %c0_i32, %c0_i32_0 : i32, i32
  }
  func.func @transform_21(%arg0: i32) -> (i32, i32) {
    %c0_i32 = arith.constant 0 : i32
    %c0_i32_0 = arith.constant 0 : i32
    %c0_i32_1 = arith.constant 0 : i32
    return %c0_i32, %c0_i32_0 : i32, i32
  }
  func.func @transform_22(%arg0: i32) -> (i32, i32, i32) {
    %c0_i32 = arith.constant 0 : i32
    %c0_i32_0 = arith.constant 0 : i32
    %c0_i32_1 = arith.constant 0 : i32
    return %arg0, %c0_i32, %c0_i32_0 : i32, i32, i32
  }
  func.func @transform_23(%arg0: i32) -> (i32, i32, i32) {
    %c0_i32 = arith.constant 0 : i32
    %c0_i32_0 = arith.constant 0 : i32
    %c0_i32_1 = arith.constant 0 : i32
    return %arg0, %c0_i32, %c0_i32_0 : i32, i32, i32
  }
}

</mosaic_0001>

<llo_original>
// kernel: _forward_core.2
$region0: #{_forward_core.2}
  #allocation0 [shape = 'u32[]', space=smem, size = 0x4, offset = 0x4, fixed_abs, tag = 'smem constant byte address 0x4 - core index']
  #allocation1 [shape = 'u32[144,128]{1,0:T(1,128)}', space=vmem, size = 0x12000, scoped, tag = 'internal scratch']
  %s0 = inlined_call_operand.vmem [shape: f32[64,48], index: 0, kind: input, shape index: {}]
  %s1 = inlined_call_operand.vmem [shape: f32[48,96], index: 1, kind: input, shape index: {}]
  %s2 = inlined_call_operand.vmem [shape: f32[1,96], index: 2, kind: input, shape index: {}]
  %s3 = inlined_call_operand.vmem [shape: f32[64,96], index: 3, kind: output, shape index: {}]
  %s4 = sld [smem:[#allocation0]]
  $region22: #{_forward_core.2} parent=0
    _
  %s6 = ssub.s32 1, %s4
  %s7 = scalar_select 0, %s6, %s4
  // Predicated region
  $region2: #{_forward_core.2} parent=0 // pred_check
    _
  $region3: #{_forward_core.2} parent=0 // pred_check_branch
    %9 = sbr.rel (0) target = $region5
  $region4: #{_forward_core.2} parent=0 // pred_region
    _
  $region5: #{_forward_core.2} parent=0 // pred_fallthru
    _
  // Predicated region
  $region6: #{_forward_core.2} parent=0 // pred_check
    _
  $region7: #{_forward_core.2} parent=0 // pred_check_branch
    %11 = sbr.rel (0) target = $region9
  $region8: #{_forward_core.2} parent=0 // pred_region
    _
  $region9: #{_forward_core.2} parent=0 // pred_fallthru
    _
  // Predicated region
  $region10: #{_forward_core.2} parent=0 // pred_check
    _
  $region11: #{_forward_core.2} parent=0 // pred_check_branch
    %13 = sbr.rel (0) target = $region13
  $region12: #{_forward_core.2} parent=0 // pred_region
    _
  $region13: #{_forward_core.2} parent=0 // pred_fallthru
    _
  %v14 = vld [vmem:[%s0] sm:$0xff]
  %v15 = vld [vmem:[%s0 + $0x8] sm:$0xff]
  %v16 = vld [vmem:[%s0 + $0x10] sm:$0xff]
  %v17 = vld [vmem:[%s0 + $0x18] sm:$0xff]
  %v18 = vld [vmem:[%s0 + $0x20] sm:$0xff]
  %v19 = vld [vmem:[%s0 + $0x28] sm:$0xff]
  %v20 = vld [vmem:[%s0 + $0x30] sm:$0xff]
  %v21 = vld [vmem:[%s0 + $0x38] sm:$0xff]
  %v22 = vld [vmem:[%s1] sm:$0xff]
  %v23 = vld [vmem:[%s1 + $0x8] sm:$0xff]
  %v24 = vld [vmem:[%s1 + $0x10] sm:$0xff]
  %v25 = vld [vmem:[%s1 + $0x18] sm:$0xff]
  %v26 = vld [vmem:[%s1 + $0x20] sm:$0xff]
  %v27 = vld [vmem:[%s1 + $0x28] sm:$0xff]
  %v28 = vld [vmem:[%s2] sm:$0x1]
  %v30 = vlaneseq
  %v31 = vshrl.u32 %v30, 7
  %v32 = vsub.s32 0, %v31
  %v33 = vrot.slane %v28, %v32
  %vm35 = vcmask 392192
  %v37 = vsel %vm35, %v14, 0
  %v40 = vsel %vm35, %v15, 0
  %v43 = vsel %vm35, %v16, 0
  %v46 = vsel %vm35, %v17, 0
  %v49 = vsel %vm35, %v18, 0
  %v52 = vsel %vm35, %v19, 0
  %v55 = vsel %vm35, %v20, 0
  %v58 = vsel %vm35, %v21, 0
  %60 = vmatprep.subr.mxu0 0.0
  %61 = vmatpush1.msra.mxu0 0.0
  %62 = vmatprep.subr.mxu0 0.0
  %63 = vmatpush1.msra.mxu0 0.0
  %64 = vmatprep.subr.mxu0 0.0
  %65 = vmatpush1.msra.mxu0 0.0
  %66 = vmatprep.subr.mxu0 0.0
  %67 = vmatpush1.msra.mxu0 0.0
  %68 = vmatprep.subr.mxu0 0.0
  %69 = vmatpush1.msra.mxu0 0.0
  %70 = vmatprep.subr.mxu0 0.0
  %71 = vmatpush1.msra.mxu0 0.0
  %72 = vmatprep.subr.mxu0 0.0
  %73 = vmatpush1.msra.mxu0 0.0
  %74 = vmatprep.subr.mxu0 0.0
  %75 = vmatpush1.msra.mxu0 0.0
  %76 = vmatprep.subr.mxu0 0.0
  %77 = vmatpush1.msra.mxu0 0.0
  %78 = vmatprep.subr.mxu0 0.0
  %79 = vmatpush1.msra.mxu0 0.0
  %80 = vmatprep.subr.mxu0 0.0
  %81 = vmatpush1.msra.mxu0 %v27
  %82 = vmatprep.subr.mxu0 0.0
  %83 = vmatpush1.msra.mxu0 %v26
  %84 = vmatprep.subr.mxu0 0.0
  %85 = vmatpush1.msra.mxu0 %v25
  %86 = vmatprep.subr.mxu0 0.0
  %87 = vmatpush1.msra.mxu0 %v24
  %88 = vmatprep.subr.mxu0 0.0
  %89 = vmatpush1.msra.mxu0 %v23
  %90 = vmatprep.subr.mxu0 0.0
  %91 = vmatpush1.msra.mxu0 %v22
  %92 = vmatprep.subr.mxu0 0.0
  %93 = vmatpush2.msra.mxu0 0.0
  %94 = vmatprep.subr.mxu0 0.0
  %95 = vmatpush2.msra.mxu0 0.0
  %96 = vmatprep.subr.mxu0 0.0
  %97 = vmatpush2.msra.mxu0 0.0
  %98 = vmatprep.subr.mxu0 0.0
  %99 = vmatpush2.msra.mxu0 0.0
  %100 = vmatprep.subr.mxu0 0.0
  %101 = vmatpush2.msra.mxu0 0.0
  %102 = vmatprep.subr.mxu0 0.0
  %103 = vmatpush2.msra.mxu0 0.0
  %104 = vmatprep.subr.mxu0 0.0
  %105 = vmatpush2.msra.mxu0 0.0
  %106 = vmatprep.subr.mxu0 0.0
  %107 = vmatpush2.msra.mxu0 0.0
  %108 = vmatprep.subr.mxu0 0.0
  %109 = vmatpush2.msra.mxu0 0.0
  %110 = vmatprep.subr.mxu0 0.0
  %111 = vmatpush2.msra.mxu0 0.0
  %112 = vmatprep.subr.mxu0 0.0
  %113 = vmatpush2.msra.mxu0 0.0
  %114 = vmatprep.subr.mxu0 0.0
  %115 = vmatpush2.msra.mxu0 0.0
  %116 = vmatprep.subr.mxu0 0.0
  %117 = vmatpush2.msra.mxu0 0.0
  %118 = vmatprep.subr.mxu0 0.0
  %119 = vmatpush2.msra.mxu0 0.0
  %120 = vmatprep.subr.mxu0 0.0
  %121 = vmatpush2.msra.mxu0 0.0
  %122 = vmatprep.subr.mxu0 0.0
  %123 = vmatpush2.msra.mxu0 0.0
  %124 = vmatprep.mubr.f32.mxu0 0.0
  %125 = vmatmul.mubr.f32.gmra.mxu0 %v37
  %v126 = vpop.f32.mrf.mxu0
  %v127 = vadd.f32 %v33, %v126
  %v128 = vpop.f32.mrf.mxu0
  %129 = vmatprep.mubr.f32.mxu0 0.0
  %130 = vmatmul.mubr.f32.gmra.mxu0 %v40
  %v131 = vpop.f32.mrf.mxu0
  %v132 = vadd.f32 %v33, %v131
  %v133 = vpop.f32.mrf.mxu0
  %134 = vmatprep.mubr.f32.mxu0 0.0
  %135 = vmatmul.mubr.f32.gmra.mxu0 %v43
  %v136 = vpop.f32.mrf.mxu0
  %v137 = vadd.f32 %v33, %v136
  %v138 = vpop.f32.mrf.mxu0
  %139 = vmatprep.mubr.f32.mxu0 0.0
  %140 = vmatmul.mubr.f32.gmra.mxu0 %v46
  %v141 = vpop.f32.mrf.mxu0
  %v142 = vadd.f32 %v33, %v141
  %v143 = vpop.f32.mrf.mxu0
  %144 = vmatprep.mubr.f32.mxu0 0.0
  %145 = vmatmul.mubr.f32.gmra.mxu0 %v49
  %v146 = vpop.f32.mrf.mxu0
  %v147 = vadd.f32 %v33, %v146
  %v148 = vpop.f32.mrf.mxu0
  %149 = vmatprep.mubr.f32.mxu0 0.0
  %150 = vmatmul.mubr.f32.gmra.mxu0 %v52
  %v151 = vpop.f32.mrf.mxu0
  %v152 = vadd.f32 %v33, %v151
  %v153 = vpop.f32.mrf.mxu0
  %154 = vmatprep.mubr.f32.mxu0 0.0
  %155 = vmatmul.mubr.f32.gmra.mxu0 %v55
  %v156 = vpop.f32.mrf.mxu0
  %v157 = vadd.f32 %v33, %v156
  %v158 = vpop.f32.mrf.mxu0
  %159 = vmatprep.mubr.f32.mxu0 0.0
  %160 = vmatmul.mubr.f32.gmra.mxu0 %v58
  %v161 = vpop.f32.mrf.mxu0
  %v162 = vadd.f32 %v33, %v161
  %v163 = vpop.f32.mrf.mxu0
  %164 = vdwg.mxu0
  %vm165 = vcmask 785408
  %166 = vst.msk [vmem:[%s3] sm:$0xff] %vm165, %v127
  %167 = vst.msk [vmem:[%s3 + $0x8] sm:$0xff] %vm165, %v132
  %168 = vst.msk [vmem:[%s3 + $0x10] sm:$0xff] %vm165, %v137
  %169 = vst.msk [vmem:[%s3 + $0x18] sm:$0xff] %vm165, %v142
  %170 = vst.msk [vmem:[%s3 + $0x20] sm:$0xff] %vm165, %v147
  %171 = vst.msk [vmem:[%s3 + $0x28] sm:$0xff] %vm165, %v152
  %172 = vst.msk [vmem:[%s3 + $0x30] sm:$0xff] %vm165, %v157
  %173 = vst.msk [vmem:[%s3 + $0x38] sm:$0xff] %vm165, %v162
  // Predicated region
  $region14: #{_forward_core.2} parent=0 // pred_check
    _
  $region15: #{_forward_core.2} parent=0 // pred_check_branch
    %175 = sbr.rel (0) target = $region17
  $region16: #{_forward_core.2} parent=0 // pred_region
    _
  $region17: #{_forward_core.2} parent=0 // pred_fallthru
    _
  // Predicated region
  $region18: #{_forward_core.2} parent=0 // pred_check
    _
  $region19: #{_forward_core.2} parent=0 // pred_check_branch
    %177 = sbr.rel (0) target = $region21
  $region20: #{_forward_core.2} parent=0 // pred_region
    _
  $region21: #{_forward_core.2} parent=0 // pred_fallthru
    _

// kernel: mul.1
$region0: #{mul.1}
  %s0 = inlined_call_operand.vmem [shape: f32[3,3,3], index: 0, kind: input, shape index: {}]
  %s1 = inlined_call_operand.vmem [shape: f32[3,9], index: 1, kind: output, shape index: {}]
  $region1: #{mul.1} parent=0
    #allocation0 [shape = 'u8[4096]{0}', space=vmem, size = 0x1000, scoped, tag = 'scoped mem for output reshape']
    #allocation1 [shape = 'u8[12288]{0}', space=vmem, size = 0x3000, scoped, tag = 'scoped mem for input reshape']
    %s3 = sshll.u32 1, 4
    %s4 = ssub.s32 %s3, 1
    %s5 = smul.addr 4, 2
    %s6 = scalar_lea.vmem %s0, %s5
    %v7 = vld [vmem:[%s6] sm:%s4]
    %s8 = scalar_lea.vmem [#allocation1], 16
    %9 = vst [vmem:[%s8] sm:%s4] %v7
    %s10 = scalar_lea.vmem %s0, 4
    %v11 = vld [vmem:[%s10] sm:%s4]
    %s12 = scalar_lea.vmem [#allocation1], 8
    %13 = vst [vmem:[%s12] sm:%s4] %v11
    %v14 = vld [vmem:[%s0] sm:%s4]
    %15 = vst [vmem:[#allocation1] sm:%s4] %v14
    %v16 = vld [vmem:[#allocation1] ss:$8 sm:$0x7]
    %vm17 = vcmask 23552
    %18 = vst.msk [vmem:[#allocation0] sm:$0x7] %vm17, %v16
    %s19 = scalar_lea.vmem [#allocation1], 2
    %v20 = vld [vmem:[%s19] ss:$8 sm:$0x7]
    %21 = vrot.lane.b32.xlu0 %v20, 6
    %v22 = vpop.permute.xlu0 %21
    %vm23 = vcmask 72752
    %24 = vst.msk [vmem:[#allocation0] sm:$0x7] %vm23, %v22
    %s25 = scalar_lea.vmem [#allocation1], 1
    %v26 = vld [vmem:[%s25] ss:$8 sm:$0x7]
    %27 = vrot.lane.b32.xlu0 %v26, 3
    %v28 = vpop.permute.xlu0 %27
    %vm29 = vcmask 48152
    %30 = vst.msk [vmem:[#allocation0] sm:$0x7] %vm29, %v28
    %s32 = sshll.u32 1, 4
    %s33 = ssub.s32 %s32, 1
    %v35 = vld [vmem:[#allocation0] sm:%s33]
    %s36 = sshll.u32 1, 4
    %s37 = ssub.s32 %s36, 1
    %38 = vst [vmem:[%s1] sm:%s37] %v35

// kernel: _forward_core.3
$region0: #{_forward_core.3}
  #allocation0 [shape = 'u32[]', space=smem, size = 0x4, offset = 0x4, fixed_abs, tag = 'smem constant byte address 0x4 - core index']
  #allocation1 [shape = 'u32[144,128]{1,0:T(1,128)}', space=vmem, size = 0x12000, scoped, tag = 'internal scratch']
  #allocation2 [shape = 'f32[8,8,9]{2,1,0:T(8,128)}', space=vmem, size = 0x8000, scoped, tag = 'scratch operand']
  #allocation3 [shape = 'f32[8,8,288]{2,1,0:T(8,128)}', space=vmem, size = 0x18000, scoped, tag = 'scratch operand']
  #allocation4 [shape = 'f32[8,96]{1,0:T(8,128)}', space=vmem, size = 0x1000, scoped, tag = 'scratch operand']
  #allocation5 [shape = 'f32[16,96]{1,0:T(8,128)}', space=vmem, size = 0x2000, scoped, tag = 'scratch operand']
  #allocation6 [shape = 'f32[8,96]{1,0:T(8,128)}', space=vmem, size = 0x1000, scoped, tag = 'scratch operand']
  %s0 = inlined_call_operand.vmem [shape: f32[8,8,96], index: 0, kind: input, shape index: {}]
  %s1 = inlined_call_operand.vmem [shape: f32[8,8,16], index: 1, kind: input, shape index: {}]
  %s2 = inlined_call_operand.vmem [shape: f32[8,16,1], index: 2, kind: input, shape index: {}]
  %s3 = inlined_call_operand.vmem [shape: f32[16,8], index: 3, kind: input, shape index: {}]
  %s4 = inlined_call_operand.vmem [shape: f32[96,288], index: 4, kind: input, shape index: {}]
  %s5 = inlined_call_operand.vmem [shape: f32[96,288], index: 5, kind: input, shape index: {}]
  %s6 = inlined_call_operand.vmem [shape: f32[96,288], index: 6, kind: input, shape index: {}]
  %s7 = inlined_call_operand.vmem [shape: f32[2,288], index: 7, kind: input, shape index: {}]
  %s8 = inlined_call_operand.vmem [shape: f32[96,288], index: 8, kind: input, shape index: {}]
  %s9 = inlined_call_operand.vmem [shape: f32[96,288], index: 9, kind: input, shape index: {}]
  %s10 = inlined_call_operand.vmem [shape: f32[96,288], index: 10, kind: input, shape index: {}]
  %s11 = inlined_call_operand.vmem [shape: f32[2,288], index: 11, kind: input, shape index: {}]
  %s12 = inlined_call_operand.vmem [shape: f32[96,288], index: 12, kind: input, shape index: {}]
  %s13 = inlined_call_operand.vmem [shape: f32[96,288], index: 13, kind: input, shape index: {}]
  %s14 = inlined_call_operand.vmem [shape: f32[2,288], index: 14, kind: input, shape index: {}]
  %s15 = inlined_call_operand.vmem [shape: f32[96,9], index: 15, kind: input, shape index: {}]
  %s16 = inlined_call_operand.vmem [shape: f32[96,288], index: 16, kind: input, shape index: {}]
  %s17 = inlined_call_operand.vmem [shape: f32[9,288], index: 17, kind: input, shape index: {}]
  %s18 = inlined_call_operand.vmem [shape: f32[288,9], index: 18, kind: input, shape index: {}]
  %s19 = inlined_call_operand.vmem [shape: f32[1,9], index: 19, kind: input, shape index: {}]
  %s20 = inlined_call_operand.vmem [shape: f32[288,96], index: 20, kind: input, shape index: {}]
  %s21 = inlined_call_operand.vmem [shape: f32[1,96], index: 21, kind: input, shape index: {}]
  %s22 = inlined_call_operand.vmem [shape: f32[8,8,96], index: 22, kind: output, shape index: {0}]
  %s23 = inlined_call_operand.vmem [shape: f32[8,8,8], index: 23, kind: output, shape index: {1}]
  %24 = xla_tuple %s22, %s23
  %s25 = sld [smem:[#allocation0]]
  $region133: #{_forward_core.3} parent=0
    _
  %s27 = ssub.s32 1, %s25
  %s28 = scalar_select 0, %s27, %s25
  loop: start=0, step=1, limit=10
  $region2: #{_forward_core.3} parent=0 // loop_pre_header
    _
  $region3: #{_forward_core.3} parent=0 // loop_header
    %s30 = sphi 0, %s34
    %p31 = scmp.ge.s32.totalorder %s30, 10
    %s38 = sphi 0, %s38
    %s40 = sphi 0, %s38
    %s41 = sphi 0, %s40
    %s55 = sphi 0, %s41
    %s59 = sphi 0, %s59
    %s61 = sphi 0, %s59
    %s62 = sphi 0, %s61
    %s76 = sphi 0, %s62
    %s80 = sphi 0, %s80
    %s82 = sphi 0, %s80
    %s83 = sphi 0, %s82
    %s97 = sphi 0, %s83
    %s101 = sphi 0, %s101
    %s103 = sphi 0, %s101
    %s104 = sphi 0, %s103
    %s118 = sphi 0, %s104
    %s122 = sphi 0, %s122
    %s124 = sphi 0, %s122
    %s125 = sphi 0, %s124
    %s139 = sphi 0, %s125
    %s143 = sphi 0, %s143
    %s145 = sphi 0, %s143
    %s146 = sphi 0, %s145
    %s160 = sphi 0, %s146
    %s164 = sphi 0, %s164
    %s166 = sphi 0, %s164
    %s167 = sphi 0, %s166
    %s181 = sphi 0, %s167
    %s185 = sphi 0, %s185
    %s187 = sphi 0, %s185
    %s188 = sphi 0, %s187
    %s202 = sphi 0, %s188
    %s206 = sphi 0, %s206
    %s208 = sphi 0, %s206
    %s209 = sphi 0, %s208
    %s223 = sphi 0, %s209
    %s227 = sphi 0, %s227
    %s229 = sphi 0, %s227
    %s230 = sphi 0, %s229
    %s244 = sphi 0, %s230
    %s248 = sphi 0, %s248
    %s250 = sphi 0, %s248
    %s251 = sphi 0, %s250
    %s265 = sphi 0, %s251
    %s269 = sphi 0, %s269
    %s271 = sphi 0, %s269
    %s272 = sphi 0, %s271
    %s286 = sphi 0, %s272
    %s290 = sphi 0, %s290
    %s292 = sphi 0, %s290
    %s293 = sphi 0, %s292
    %s307 = sphi 0, %s293
    %s311 = sphi 0, %s311
    %s313 = sphi 0, %s311
    %s314 = sphi 0, %s313
    %s328 = sphi 0, %s314
    %s332 = sphi 0, %s332
    %s334 = sphi 0, %s332
    %s335 = sphi 0, %s334
    %s349 = sphi 0, %s335
    %s353 = sphi 0, %s353
    %s355 = sphi 0, %s353
    %s356 = sphi 0, %s355
    %s370 = sphi 0, %s356
    %s374 = sphi 0, %s374
    %s376 = sphi 0, %s374
    %s377 = sphi 0, %s376
    %s391 = sphi 0, %s377
    %s395 = sphi 0, %s395
    %s397 = sphi 0, %s395
    %s398 = sphi 0, %s397
    %s412 = sphi 0, %s398
    %s416 = sphi 0, %s416
    %s418 = sphi 0, %s416
    %s419 = sphi 0, %s418
    %s433 = sphi 0, %s419
    %s437 = sphi 0, %s437
    %s439 = sphi 0, %s437
    %s440 = sphi 0, %s439
    %s454 = sphi 0, %s440
    %s458 = sphi 0, %s458
    %s460 = sphi 0, %s458
    %s461 = sphi 0, %s460
    %s475 = sphi 0, %s461
    %s479 = sphi 0, %s479
    %s481 = sphi 0, %s479
    %s482 = sphi 0, %s481
    %s496 = sphi 0, %s482
    %s502 = sphi 0, %s504
    %s505 = sphi 0, %s502
    %s506 = sphi 0, %s505
    %s522 = sphi 0, %s506
    %s528 = sphi 0, %s530
    %s531 = sphi 0, %s528
    %s532 = sphi 0, %s531
    %s548 = sphi 0, %s532
  $region4: #{_forward_core.3} parent=0 // loop_header_branch
    %33 = sbr.rel (%p31) target = $region8
  $region5: #{_forward_core.3} parent=0 // loop_body
    %s35 = ssub.s32 %s30, 1
    %s36 = ssub.s32 %s30, 2
    %s37 = sadd.s32 %s30, 1
    %s39 = sadd.s32 %s38, 1
    %p42 = scmp.eq.s32.totalorder %s30, 7
    %p43 = scmp.ne.s32.totalorder %s38, %s40
    %p44 = scmp.eq.s32.totalorder %s30, 0
    %p45 = por %p43, %p44
    %p46 = scmp.ne.s32.totalorder %s38, %s40
    %p47 = scmp.eq.s32.totalorder %s35, 7
    %p48 = por %p46, %p47
    %p49 = scmp.ne.s32.totalorder %s40, %s41
    %p50 = scmp.eq.s32.totalorder %s35, 0
    %p51 = por %p49, %p50
    %p52 = scmp.ne.s32.totalorder %s40, %s41
    %p53 = scmp.eq.s32.totalorder %s36, 7
    %p54 = por %p52, %p53
    %p56 = scmp.ne.s32.totalorder %s41, %s55
    %p57 = scmp.eq.s32.totalorder %s36, 0
    %p58 = por %p56, %p57
    %s60 = sadd.s32 %s59, 1
    %p63 = scmp.eq.s32.totalorder %s30, 7
    %p64 = scmp.ne.s32.totalorder %s59, %s61
    %p65 = scmp.eq.s32.totalorder %s30, 0
    %p66 = por %p64, %p65
    %p67 = scmp.ne.s32.totalorder %s59, %s61
    %p68 = scmp.eq.s32.totalorder %s35, 7
    %p69 = por %p67, %p68
    %p70 = scmp.ne.s32.totalorder %s61, %s62
    %p71 = scmp.eq.s32.totalorder %s35, 0
    %p72 = por %p70, %p71
    %p73 = scmp.ne.s32.totalorder %s61, %s62
    %p74 = scmp.eq.s32.totalorder %s36, 7
    %p75 = por %p73, %p74
    %p77 = scmp.ne.s32.totalorder %s62, %s76
    %p78 = scmp.eq.s32.totalorder %s36, 0
    %p79 = por %p77, %p78
    %s81 = sadd.s32 %s80, 1
    %p84 = scmp.eq.s32.totalorder %s30, 7
    %p85 = scmp.ne.s32.totalorder %s80, %s82
    %p86 = scmp.eq.s32.totalorder %s30, 0
    %p87 = por %p85, %p86
    %p88 = scmp.ne.s32.totalorder %s80, %s82
    %p89 = scmp.eq.s32.totalorder %s35, 7
    %p90 = por %p88, %p89
    %p91 = scmp.ne.s32.totalorder %s82, %s83
    %p92 = scmp.eq.s32.totalorder %s35, 0
    %p93 = por %p91, %p92
    %p94 = scmp.ne.s32.totalorder %s82, %s83
    %p95 = scmp.eq.s32.totalorder %s36, 7
    %p96 = por %p94, %p95
    %p98 = scmp.ne.s32.totalorder %s83, %s97
    %p99 = scmp.eq.s32.totalorder %s36, 0
    %p100 = por %p98, %p99
    %s102 = sadd.s32 %s101, 1
    %p105 = scmp.eq.s32.totalorder %s30, 7
    %p106 = scmp.ne.s32.totalorder %s101, %s103
    %p107 = scmp.eq.s32.totalorder %s30, 0
    %p108 = por %p106, %p107
    %p109 = scmp.ne.s32.totalorder %s101, %s103
    %p110 = scmp.eq.s32.totalorder %s35, 7
    %p111 = por %p109, %p110
    %p112 = scmp.ne.s32.totalorder %s103, %s104
    %p113 = scmp.eq.s32.totalorder %s35, 0
    %p114 = por %p112, %p113
    %p115 = scmp.ne.s32.totalorder %s103, %s104
    %p116 = scmp.eq.s32.totalorder %s36, 7
    %p117 = por %p115, %p116
    %p119 = scmp.ne.s32.totalorder %s104, %s118
    %p120 = scmp.eq.s32.totalorder %s36, 0
    %p121 = por %p119, %p120
    %s123 = sadd.s32 %s122, 1
    %p126 = scmp.eq.s32.totalorder %s30, 7
    %p127 = scmp.ne.s32.totalorder %s122, %s124
    %p128 = scmp.eq.s32.totalorder %s30, 0
    %p129 = por %p127, %p128
    %p130 = scmp.ne.s32.totalorder %s122, %s124
    %p131 = scmp.eq.s32.totalorder %s35, 7
    %p132 = por %p130, %p131
    %p133 = scmp.ne.s32.totalorder %s124, %s125
    %p134 = scmp.eq.s32.totalorder %s35, 0
    %p135 = por %p133, %p134
    %p136 = scmp.ne.s32.totalorder %s124, %s125
    %p137 = scmp.eq.s32.totalorder %s36, 7
    %p138 = por %p136, %p137
    %p140 = scmp.ne.s32.totalorder %s125, %s139
    %p141 = scmp.eq.s32.totalorder %s36, 0
    %p142 = por %p140, %p141
    %s144 = sadd.s32 %s143, 1
    %p147 = scmp.eq.s32.totalorder %s30, 7
    %p148 = scmp.ne.s32.totalorder %s143, %s145
    %p149 = scmp.eq.s32.totalorder %s30, 0
    %p150 = por %p148, %p149
    %p151 = scmp.ne.s32.totalorder %s143, %s145
    %p152 = scmp.eq.s32.totalorder %s35, 7
    %p153 = por %p151, %p152
    %p154 = scmp.ne.s32.totalorder %s145, %s146
    %p155 = scmp.eq.s32.totalorder %s35, 0
    %p156 = por %p154, %p155
    %p157 = scmp.ne.s32.totalorder %s145, %s146
    %p158 = scmp.eq.s32.totalorder %s36, 7
    %p159 = por %p157, %p158
    %p161 = scmp.ne.s32.totalorder %s146, %s160
    %p162 = scmp.eq.s32.totalorder %s36, 0
    %p163 = por %p161, %p162
    %s165 = sadd.s32 %s164, 1
    %p168 = scmp.eq.s32.totalorder %s30, 7
    %p169 = scmp.ne.s32.totalorder %s164, %s166
    %p170 = scmp.eq.s32.totalorder %s30, 0
    %p171 = por %p169, %p170
    %p172 = scmp.ne.s32.totalorder %s164, %s166
    %p173 = scmp.eq.s32.totalorder %s35, 7
    %p174 = por %p172, %p173
    %p175 = scmp.ne.s32.totalorder %s166, %s167
    %p176 = scmp.eq.s32.totalorder %s35, 0
    %p177 = por %p175, %p176
    %p178 = scmp.ne.s32.totalorder %s166, %s167
    %p179 = scmp.eq.s32.totalorder %s36, 7
    %p180 = por %p178, %p179
    %p182 = scmp.ne.s32.totalorder %s167, %s181
    %p183 = scmp.eq.s32.totalorder %s36, 0
    %p184 = por %p182, %p183
    %s186 = sadd.s32 %s185, 1
    %p189 = scmp.eq.s32.totalorder %s30, 7
    %p190 = scmp.ne.s32.totalorder %s185, %s187
    %p191 = scmp.eq.s32.totalorder %s30, 0
    %p192 = por %p190, %p191
    %p193 = scmp.ne.s32.totalorder %s185, %s187
    %p194 = scmp.eq.s32.totalorder %s35, 7
    %p195 = por %p193, %p194
    %p196 = scmp.ne.s32.totalorder %s187, %s188
    %p197 = scmp.eq.s32.totalorder %s35, 0
    %p198 = por %p196, %p197
    %p199 = scmp.ne.s32.totalorder %s187, %s188
    %p200 = scmp.eq.s32.totalorder %s36, 7
    %p201 = por %p199, %p200
    %p203 = scmp.ne.s32.totalorder %s188, %s202
    %p204 = scmp.eq.s32.totalorder %s36, 0
    %p205 = por %p203, %p204
    %s207 = sadd.s32 %s206, 1
    %p210 = scmp.eq.s32.totalorder %s30, 7
    %p211 = scmp.ne.s32.totalorder %s206, %s208
    %p212 = scmp.eq.s32.totalorder %s30, 0
    %p213 = por %p211, %p212
    %p214 = scmp.ne.s32.totalorder %s206, %s208
    %p215 = scmp.eq.s32.totalorder %s35, 7
    %p216 = por %p214, %p215
    %p217 = scmp.ne.s32.totalorder %s208, %s209
    %p218 = scmp.eq.s32.totalorder %s35, 0
    %p219 = por %p217, %p218
    %p220 = scmp.ne.s32.totalorder %s208, %s209
    %p221 = scmp.eq.s32.totalorder %s36, 7
    %p222 = por %p220, %p221
    %p224 = scmp.ne.s32.totalorder %s209, %s223
    %p225 = scmp.eq.s32.totalorder %s36, 0
    %p226 = por %p224, %p225
    %s228 = sadd.s32 %s227, 1
    %p231 = scmp.eq.s32.totalorder %s30, 7
    %p232 = scmp.ne.s32.totalorder %s227, %s229
    %p233 = scmp.eq.s32.totalorder %s30, 0
    %p234 = por %p232, %p233
    %p235 = scmp.ne.s32.totalorder %s227, %s229
    %p236 = scmp.eq.s32.totalorder %s35, 7
    %p237 = por %p235, %p236
    %p238 = scmp.ne.s32.totalorder %s229, %s230
    %p239 = scmp.eq.s32.totalorder %s35, 0
    %p240 = por %p238, %p239
    %p241 = scmp.ne.s32.totalorder %s229, %s230
    %p242 = scmp.eq.s32.totalorder %s36, 7
    %p243 = por %p241, %p242
    %p245 = scmp.ne.s32.totalorder %s230, %s244
    %p246 = scmp.eq.s32.totalorder %s36, 0
    %p247 = por %p245, %p246
    %s249 = sadd.s32 %s248, 1
    %p252 = scmp.eq.s32.totalorder %s30, 7
    %p253 = scmp.ne.s32.totalorder %s248, %s250
    %p254 = scmp.eq.s32.totalorder %s30, 0
    %p255 = por %p253, %p254
    %p256 = scmp.ne.s32.totalorder %s248, %s250
    %p257 = scmp.eq.s32.totalorder %s35, 7
    %p258 = por %p256, %p257
    %p259 = scmp.ne.s32.totalorder %s250, %s251
    %p260 = scmp.eq.s32.totalorder %s35, 0
    %p261 = por %p259, %p260
    %p262 = scmp.ne.s32.totalorder %s250, %s251
    %p263 = scmp.eq.s32.totalorder %s36, 7
    %p264 = por %p262, %p263
    %p266 = scmp.ne.s32.totalorder %s251, %s265
    %p267 = scmp.eq.s32.totalorder %s36, 0
    %p268 = por %p266, %p267
    %s270 = sadd.s32 %s269, 1
    %p273 = scmp.eq.s32.totalorder %s30, 7
    %p274 = scmp.ne.s32.totalorder %s269, %s271
    %p275 = scmp.eq.s32.totalorder %s30, 0
    %p276 = por %p274, %p275
    %p277 = scmp.ne.s32.totalorder %s269, %s271
    %p278 = scmp.eq.s32.totalorder %s35, 7
    %p279 = por %p277, %p278
    %p280 = scmp.ne.s32.totalorder %s271, %s272
    %p281 = scmp.eq.s32.totalorder %s35, 0
    %p282 = por %p280, %p281
    %p283 = scmp.ne.s32.totalorder %s271, %s272
    %p284 = scmp.eq.s32.totalorder %s36, 7
    %p285 = por %p283, %p284
    %p287 = scmp.ne.s32.totalorder %s272, %s286
    %p288 = scmp.eq.s32.totalorder %s36, 0
    %p289 = por %p287, %p288
    %s291 = sadd.s32 %s290, 1
    %p294 = scmp.eq.s32.totalorder %s30, 7
    %p295 = scmp.ne.s32.totalorder %s290, %s292
    %p296 = scmp.eq.s32.totalorder %s30, 0
    %p297 = por %p295, %p296
    %p298 = scmp.ne.s32.totalorder %s290, %s292
    %p299 = scmp.eq.s32.totalorder %s35, 7
    %p300 = por %p298, %p299
    %p301 = scmp.ne.s32.totalorder %s292, %s293
    %p302 = scmp.eq.s32.totalorder %s35, 0
    %p303 = por %p301, %p302
    %p304 = scmp.ne.s32.totalorder %s292, %s293
    %p305 = scmp.eq.s32.totalorder %s36, 7
    %p306 = por %p304, %p305
    %p308 = scmp.ne.s32.totalorder %s293, %s307
    %p309 = scmp.eq.s32.totalorder %s36, 0
    %p310 = por %p308, %p309
    %s312 = sadd.s32 %s311, 1
    %p315 = scmp.eq.s32.totalorder %s30, 7
    %p316 = scmp.ne.s32.totalorder %s311, %s313
    %p317 = scmp.eq.s32.totalorder %s30, 0
    %p318 = por %p316, %p317
    %p319 = scmp.ne.s32.totalorder %s311, %s313
    %p320 = scmp.eq.s32.totalorder %s35, 7
    %p321 = por %p319, %p320
    %p322 = scmp.ne.s32.totalorder %s313, %s314
    %p323 = scmp.eq.s32.totalorder %s35, 0
    %p324 = por %p322, %p323
    %p325 = scmp.ne.s32.totalorder %s313, %s314
    %p326 = scmp.eq.s32.totalorder %s36, 7
    %p327 = por %p325, %p326
    %p329 = scmp.ne.s32.totalorder %s314, %s328
    %p330 = scmp.eq.s32.totalorder %s36, 0
    %p331 = por %p329, %p330
    %s333 = sadd.s32 %s332, 1
    %p336 = scmp.eq.s32.totalorder %s30, 7
    %p337 = scmp.ne.s32.totalorder %s332, %s334
    %p338 = scmp.eq.s32.totalorder %s30, 0
    %p339 = por %p337, %p338
    %p340 = scmp.ne.s32.totalorder %s332, %s334
    %p341 = scmp.eq.s32.totalorder %s35, 7
    %p342 = por %p340, %p341
    %p343 = scmp.ne.s32.totalorder %s334, %s335
    %p344 = scmp.eq.s32.totalorder %s35, 0
    %p345 = por %p343, %p344
    %p346 = scmp.ne.s32.totalorder %s334, %s335
    %p347 = scmp.eq.s32.totalorder %s36, 7
    %p348 = por %p346, %p347
    %p350 = scmp.ne.s32.totalorder %s335, %s349
    %p351 = scmp.eq.s32.totalorder %s36, 0
    %p352 = por %p350, %p351
    %s354 = sadd.s32 %s353, 1
    %p357 = scmp.eq.s32.totalorder %s30, 7
    %p358 = scmp.ne.s32.totalorder %s353, %s355
    %p359 = scmp.eq.s32.totalorder %s30, 0
    %p360 = por %p358, %p359
    %p361 = scmp.ne.s32.totalorder %s353, %s355
    %p362 = scmp.eq.s32.totalorder %s35, 7
    %p363 = por %p361, %p362
    %p364 = scmp.ne.s32.totalorder %s355, %s356
    %p365 = scmp.eq.s32.totalorder %s35, 0
    %p366 = por %p364, %p365
    %p367 = scmp.ne.s32.totalorder %s355, %s356
    %p368 = scmp.eq.s32.totalorder %s36, 7
    %p369 = por %p367, %p368
    %p371 = scmp.ne.s32.totalorder %s356, %s370
    %p372 = scmp.eq.s32.totalorder %s36, 0
    %p373 = por %p371, %p372
    %s375 = sadd.s32 %s374, 1
    %p378 = scmp.eq.s32.totalorder %s30, 7
    %p379 = scmp.ne.s32.totalorder %s374, %s376
    %p380 = scmp.eq.s32.totalorder %s30, 0
    %p381 = por %p379, %p380
    %p382 = scmp.ne.s32.totalorder %s374, %s376
    %p383 = scmp.eq.s32.totalorder %s35, 7
    %p384 = por %p382, %p383
    %p385 = scmp.ne.s32.totalorder %s376, %s377
    %p386 = scmp.eq.s32.totalorder %s35, 0
    %p387 = por %p385, %p386
    %p388 = scmp.ne.s32.totalorder %s376, %s377
    %p389 = scmp.eq.s32.totalorder %s36, 7
    %p390 = por %p388, %p389
    %p392 = scmp.ne.s32.totalorder %s377, %s391
    %p393 = scmp.eq.s32.totalorder %s36, 0
    %p394 = por %p392, %p393
    %s396 = sadd.s32 %s395, 1
    %p399 = scmp.eq.s32.totalorder %s30, 7
    %p400 = scmp.ne.s32.totalorder %s395, %s397
    %p401 = scmp.eq.s32.totalorder %s30, 0
    %p402 = por %p400, %p401
    %p403 = scmp.ne.s32.totalorder %s395, %s397
    %p404 = scmp.eq.s32.totalorder %s35, 7
    %p405 = por %p403, %p404
    %p406 = scmp.ne.s32.totalorder %s397, %s398
    %p407 = scmp.eq.s32.totalorder %s35, 0
    %p408 = por %p406, %p407
    %p409 = scmp.ne.s32.totalorder %s397, %s398
    %p410 = scmp.eq.s32.totalorder %s36, 7
    %p411 = por %p409, %p410
    %p413 = scmp.ne.s32.totalorder %s398, %s412
    %p414 = scmp.eq.s32.totalorder %s36, 0
    %p415 = por %p413, %p414
    %s417 = sadd.s32 %s416, 1
    %p420 = scmp.eq.s32.totalorder %s30, 7
    %p421 = scmp.ne.s32.totalorder %s416, %s418
    %p422 = scmp.eq.s32.totalorder %s30, 0
    %p423 = por %p421, %p422
    %p424 = scmp.ne.s32.totalorder %s416, %s418
    %p425 = scmp.eq.s32.totalorder %s35, 7
    %p426 = por %p424, %p425
    %p427 = scmp.ne.s32.totalorder %s418, %s419
    %p428 = scmp.eq.s32.totalorder %s35, 0
    %p429 = por %p427, %p428
    %p430 = scmp.ne.s32.totalorder %s418, %s419
    %p431 = scmp.eq.s32.totalorder %s36, 7
    %p432 = por %p430, %p431
    %p434 = scmp.ne.s32.totalorder %s419, %s433
    %p435 = scmp.eq.s32.totalorder %s36, 0
    %p436 = por %p434, %p435
    %s438 = sadd.s32 %s437, 1
    %p441 = scmp.eq.s32.totalorder %s30, 7
    %p442 = scmp.ne.s32.totalorder %s437, %s439
    %p443 = scmp.eq.s32.totalorder %s30, 0
    %p444 = por %p442, %p443
    %p445 = scmp.ne.s32.totalorder %s437, %s439
    %p446 = scmp.eq.s32.totalorder %s35, 7
    %p447 = por %p445, %p446
    %p448 = scmp.ne.s32.totalorder %s439, %s440
    %p449 = scmp.eq.s32.totalorder %s35, 0
    %p450 = por %p448, %p449
    %p451 = scmp.ne.s32.totalorder %s439, %s440
    %p452 = scmp.eq.s32.totalorder %s36, 7
    %p453 = por %p451, %p452
    %p455 = scmp.ne.s32.totalorder %s440, %s454
    %p456 = scmp.eq.s32.totalorder %s36, 0
    %p457 = por %p455, %p456
    %s459 = sadd.s32 %s458, 1
    %p462 = scmp.eq.s32.totalorder %s30, 7
    %p463 = scmp.ne.s32.totalorder %s458, %s460
    %p464 = scmp.eq.s32.totalorder %s30, 0
    %p465 = por %p463, %p464
    %p466 = scmp.ne.s32.totalorder %s458, %s460
    %p467 = scmp.eq.s32.totalorder %s35, 7
    %p468 = por %p466, %p467
    %p469 = scmp.ne.s32.totalorder %s460, %s461
    %p470 = scmp.eq.s32.totalorder %s35, 0
    %p471 = por %p469, %p470
    %p472 = scmp.ne.s32.totalorder %s460, %s461
    %p473 = scmp.eq.s32.totalorder %s36, 7
    %p474 = por %p472, %p473
    %p476 = scmp.ne.s32.totalorder %s461, %s475
    %p477 = scmp.eq.s32.totalorder %s36, 0
    %p478 = por %p476, %p477
    %s480 = sadd.s32 %s479, 1
    %p483 = scmp.eq.s32.totalorder %s30, 7
    %p484 = scmp.ne.s32.totalorder %s479, %s481
    %p485 = scmp.eq.s32.totalorder %s30, 0
    %p486 = por %p484, %p485
    %p487 = scmp.ne.s32.totalorder %s479, %s481
    %p488 = scmp.eq.s32.totalorder %s35, 7
    %p489 = por %p487, %p488
    %p490 = scmp.ne.s32.totalorder %s481, %s482
    %p491 = scmp.eq.s32.totalorder %s35, 0
    %p492 = por %p490, %p491
    %p493 = scmp.ne.s32.totalorder %s481, %s482
    %p494 = scmp.eq.s32.totalorder %s36, 7
    %p495 = por %p493, %p494
    %p497 = scmp.ne.s32.totalorder %s482, %s496
    %p498 = scmp.eq.s32.totalorder %s36, 0
    %p499 = por %p497, %p498
    %s500 = ssub.s32 %s30, %s37
    %p501 = scmp.eq.s32.totalorder %s500, 0
    %s503 = sadd.s32 %s502, 1
    %s504 = scalar_select %p501, %s502, %s503
    %p507 = pneg %p501
    %p508 = scmp.eq.s32.totalorder %s30, 7
    %p509 = por %p507, %p508
    %p510 = scmp.ne.s32.totalorder %s502, %s505
    %p511 = scmp.eq.s32.totalorder %s30, 0
    %p512 = por %p510, %p511
    %p513 = scmp.ne.s32.totalorder %s502, %s505
    %p514 = scmp.eq.s32.totalorder %s35, 7
    %p515 = por %p513, %p514
    %p516 = scmp.ne.s32.totalorder %s505, %s506
    %p517 = scmp.eq.s32.totalorder %s35, 0
    %p518 = por %p516, %p517
    %p519 = scmp.ne.s32.totalorder %s505, %s506
    %p520 = scmp.eq.s32.totalorder %s36, 7
    %p521 = por %p519, %p520
    %p523 = scmp.ne.s32.totalorder %s506, %s522
    %p524 = scmp.eq.s32.totalorder %s36, 0
    %p525 = por %p523, %p524
    %s526 = ssub.s32 %s30, %s37
    %p527 = scmp.eq.s32.totalorder %s526, 0
    %s529 = sadd.s32 %s528, 1
    %s530 = scalar_select %p527, %s528, %s529
    %p533 = pneg %p527
    %p534 = scmp.eq.s32.totalorder %s30, 7
    %p535 = por %p533, %p534
    %p536 = scmp.ne.s32.totalorder %s528, %s531
    %p537 = scmp.eq.s32.totalorder %s30, 0
    %p538 = por %p536, %p537
    %p539 = scmp.ne.s32.totalorder %s528, %s531
    %p540 = scmp.eq.s32.totalorder %s35, 7
    %p541 = por %p539, %p540
    %p542 = scmp.ne.s32.totalorder %s531, %s532
    %p543 = scmp.eq.s32.totalorder %s35, 0
    %p544 = por %p542, %p543
    %p545 = scmp.ne.s32.totalorder %s531, %s532
    %p546 = scmp.eq.s32.totalorder %s36, 7
    %p547 = por %p545, %p546
    %p549 = scmp.ne.s32.totalorder %s532, %s548
    %p550 = scmp.eq.s32.totalorder %s36, 0
    %p551 = por %p549, %p550
    %p552 = scmp.le.s32.totalorder 1, %s30
    %p553 = scmp.lt.s32.totalorder %s30, 9
    %p554 = pnand %p552, %p553
    %p555 = pneg %p554
    // Predicated region
    $region9: #{_forward_core.3} parent=5 // pred_check
      _
    $region10: #{_forward_core.3} parent=5 // pred_check_branch
      %557 = sbr.rel (%p554) target = $region12
    $region11: #{_forward_core.3} parent=5 // pred_region
      %s558 = ssub.s32 %s30, 1
      // Predicated region
      $region13: #{_forward_core.3} parent=11 // pred_check
        %p559 = pneg %p51
      $region14: #{_forward_core.3} parent=11 // pred_check_branch
        %561 = sbr.rel (%p559) target = $region16
      $region15: #{_forward_core.3} parent=11 // pred_region
        _
      $region16: #{_forward_core.3} parent=11 // pred_fallthru
        _
      // Predicated region
      $region17: #{_forward_core.3} parent=11 // pred_check
        %p562 = pneg %p72
      $region18: #{_forward_core.3} parent=11 // pred_check_branch
        %564 = sbr.rel (%p562) target = $region20
      $region19: #{_forward_core.3} parent=11 // pred_region
        _
      $region20: #{_forward_core.3} parent=11 // pred_fallthru
        _
      // Predicated region
      $region21: #{_forward_core.3} parent=11 // pred_check
        %p565 = pneg %p93
      $region22: #{_forward_core.3} parent=11 // pred_check_branch
        %567 = sbr.rel (%p565) target = $region24
      $region23: #{_forward_core.3} parent=11 // pred_region
        _
      $region24: #{_forward_core.3} parent=11 // pred_fallthru
        _
      // Predicated region
      $region25: #{_forward_core.3} parent=11 // pred_check
        %p568 = pneg %p114
      $region26: #{_forward_core.3} parent=11 // pred_check_branch
        %570 = sbr.rel (%p568) target = $region28
      $region27: #{_forward_core.3} parent=11 // pred_region
        _
      $region28: #{_forward_core.3} parent=11 // pred_fallthru
        _
      // Predicated region
      $region29: #{_forward_core.3} parent=11 // pred_check
        %p571 = pneg %p135
      $region30: #{_forward_core.3} parent=11 // pred_check_branch
        %573 = sbr.rel (%p571) target = $region32
      $region31: #{_forward_core.3} parent=11 // pred_region
        _
      $region32: #{_forward_core.3} parent=11 // pred_fallthru
        _
      // Predicated region
      $region33: #{_forward_core.3} parent=11 // pred_check
        %p574 = pneg %p156
      $region34: #{_forward_core.3} parent=11 // pred_check_branch
        %576 = sbr.rel (%p574) target = $region36
      $region35: #{_forward_core.3} parent=11 // pred_region
        _
      $region36: #{_forward_core.3} parent=11 // pred_fallthru
        _
      // Predicated region
      $region37: #{_forward_core.3} parent=11 // pred_check
        %p577 = pneg %p177
      $region38: #{_forward_core.3} parent=11 // pred_check_branch
        %579 = sbr.rel (%p577) target = $region40
      $region39: #{_forward_core.3} parent=11 // pred_region
        _
      $region40: #{_forward_core.3} parent=11 // pred_fallthru
        _
      // Predicated region
      $region41: #{_forward_core.3} parent=11 // pred_check
        %p580 = pneg %p198
      $region42: #{_forward_core.3} parent=11 // pred_check_branch
        %582 = sbr.rel (%p580) target = $region44
      $region43: #{_forward_core.3} parent=11 // pred_region
        _
      $region44: #{_forward_core.3} parent=11 // pred_fallthru
        _
      // Predicated region
      $region45: #{_forward_core.3} parent=11 // pred_check
        %p583 = pneg %p219
      $region46: #{_forward_core.3} parent=11 // pred_check_branch
        %585 = sbr.rel (%p583) target = $region48
      $region47: #{_forward_core.3} parent=11 // pred_region
        _
      $region48: #{_forward_core.3} parent=11 // pred_fallthru
        _
      // Predicated region
      $region49: #{_forward_core.3} parent=11 // pred_check
        %p586 = pneg %p240
      $region50: #{_forward_core.3} parent=11 // pred_check_branch
        %588 = sbr.rel (%p586) target = $region52
      $region51: #{_forward_core.3} parent=11 // pred_region
        _
      $region52: #{_forward_core.3} parent=11 // pred_fallthru
        _
      // Predicated region
      $region53: #{_forward_core.3} parent=11 // pred_check
        %p589 = pneg %p261
      $region54: #{_forward_core.3} parent=11 // pred_check_branch
        %591 = sbr.rel (%p589) target = $region56
      $region55: #{_forward_core.3} parent=11 // pred_region
        _
      $region56: #{_forward_core.3} parent=11 // pred_fallthru
        _
      // Predicated region
      $region57: #{_forward_core.3} parent=11 // pred_check
        %p592 = pneg %p282
      $region58: #{_forward_core.3} parent=11 // pred_check_branch
        %594 = sbr.rel (%p592) target = $region60
      $region59: #{_forward_core.3} parent=11 // pred_region
        _
      $region60: #{_forward_core.3} parent=11 // pred_fallthru
        _
      // Predicated region
      $region61: #{_forward_core.3} parent=11 // pred_check
        %p595 = pneg %p303
      $region62: #{_forward_core.3} parent=11 // pred_check_branch
        %597 = sbr.rel (%p595) target = $region64
      $region63: #{_forward_core.3} parent=11 // pred_region
        _
      $region64: #{_forward_core.3} parent=11 // pred_fallthru
        _
      // Predicated region
      $region65: #{_forward_core.3} parent=11 // pred_check
        %p598 = pneg %p324
      $region66: #{_forward_core.3} parent=11 // pred_check_branch
        %600 = sbr.rel (%p598) target = $region68
      $region67: #{_forward_core.3} parent=11 // pred_region
        _
      $region68: #{_forward_core.3} parent=11 // pred_fallthru
        _
      // Predicated region
      $region69: #{_forward_core.3} parent=11 // pred_check
        %p601 = pneg %p345
      $region70: #{_forward_core.3} parent=11 // pred_check_branch
        %603 = sbr.rel (%p601) target = $region72
      $region71: #{_forward_core.3} parent=11 // pred_region
        _
      $region72: #{_forward_core.3} parent=11 // pred_fallthru
        _
      // Predicated region
      $region73: #{_forward_core.3} parent=11 // pred_check
        %p604 = pneg %p366
      $region74: #{_forward_core.3} parent=11 // pred_check_branch
        %606 = sbr.rel (%p604) target = $region76
      $region75: #{_forward_core.3} parent=11 // pred_region
        _
      $region76: #{_forward_core.3} parent=11 // pred_fallthru
        _
      // Predicated region
      $region77: #{_forward_core.3} parent=11 // pred_check
        %p607 = pneg %p387
      $region78: #{_forward_core.3} parent=11 // pred_check_branch
        %609 = sbr.rel (%p607) target = $region80
      $region79: #{_forward_core.3} parent=11 // pred_region
        _
      $region80: #{_forward_core.3} parent=11 // pred_fallthru
        _
      // Predicated region
      $region81: #{_forward_core.3} parent=11 // pred_check
        %p610 = pneg %p408
      $region82: #{_forward_core.3} parent=11 // pred_check_branch
        %612 = sbr.rel (%p610) target = $region84
      $region83: #{_forward_core.3} parent=11 // pred_region
        _
      $region84: #{_forward_core.3} parent=11 // pred_fallthru
        _
      // Predicated region
      $region85: #{_forward_core.3} parent=11 // pred_check
        %p613 = pneg %p429
      $region86: #{_forward_core.3} parent=11 // pred_check_branch
        %615 = sbr.rel (%p613) target = $region88
      $region87: #{_forward_core.3} parent=11 // pred_region
        _
      $region88: #{_forward_core.3} parent=11 // pred_fallthru
        _
      // Predicated region
      $region89: #{_forward_core.3} parent=11 // pred_check
        %p616 = pneg %p450
      $region90: #{_forward_core.3} parent=11 // pred_check_branch
        %618 = sbr.rel (%p616) target = $region92
      $region91: #{_forward_core.3} parent=11 // pred_region
        _
      $region92: #{_forward_core.3} parent=11 // pred_fallthru
        _
      // Predicated region
      $region93: #{_forward_core.3} parent=11 // pred_check
        %p619 = pneg %p471
      $region94: #{_forward_core.3} parent=11 // pred_check_branch
        %621 = sbr.rel (%p619) target = $region96
      $region95: #{_forward_core.3} parent=11 // pred_region
        _
      $region96: #{_forward_core.3} parent=11 // pred_fallthru
        _
      // Predicated region
      $region97: #{_forward_core.3} parent=11 // pred_check
        %p622 = pneg %p492
      $region98: #{_forward_core.3} parent=11 // pred_check_branch
        %624 = sbr.rel (%p622) target = $region100
      $region99: #{_forward_core.3} parent=11 // pred_region
        _
      $region100: #{_forward_core.3} parent=11 // pred_fallthru
        _
    $region12: #{_forward_core.3} parent=5 // pred_fallthru
      _
    %p625 = scmp.lt.s32.totalorder %s30, 8
    // Predicated region
    $region101: #{_forward_core.3} parent=5 // pred_check
      %p626 = pneg %p625
    $region102: #{_forward_core.3} parent=5 // pred_check_branch
      %628 = sbr.rel (%p626) target = $region104
    $region103: #{_forward_core.3} parent=5 // pred_region
      _
    $region104: #{_forward_core.3} parent=5 // pred_fallthru
      _
    %p629 = scmp.le.s32.totalorder 1, %s30
    %p630 = scmp.lt.s32.totalorder %s30, 9
    %p631 = pnand %p629, %p630
    %p632 = pneg %p631
    // Predicated region
    $region105: #{_forward_core.3} parent=5 // pred_check
      _
    $region106: #{_forward_core.3} parent=5 // pred_check_branch
      %634 = sbr.rel (%p631) target = $region108
    $region107: #{_forward_core.3} parent=5 // pred_region
      %s635 = ssub.s32 %s30, 1
      %p636 = pneg %p51
      %p637 = pneg %p48
      %p638 = pneg %p72
      %p639 = pneg %p69
      %p640 = pneg %p93
      %p641 = pneg %p90
      %p642 = pneg %p114
      %p643 = pneg %p111
      %p644 = pneg %p135
      %p645 = pneg %p132
      %p646 = pneg %p156
      %p647 = pneg %p153
      %p648 = pneg %p177
      %p649 = pneg %p174
      %p650 = pneg %p198
      %p651 = pneg %p195
      %p652 = pneg %p219
      %p653 = pneg %p216
      %p654 = pneg %p240
      %p655 = pneg %p237
      %p656 = pneg %p261
      %p657 = pneg %p258
      %p658 = pneg %p282
      %p659 = pneg %p279
      %p660 = pneg %p303
      %p661 = pneg %p300
      %p662 = pneg %p324
      %p663 = pneg %p321
      %p664 = pneg %p345
      %p665 = pneg %p342
      %p666 = pneg %p366
      %p667 = pneg %p363
      %p668 = pneg %p387
      %p669 = pneg %p384
      %p670 = pneg %p408
      %p671 = pneg %p405
      %p672 = pneg %p429
      %p673 = pneg %p426
      %p674 = pneg %p450
      %p675 = pneg %p447
      %p676 = pneg %p471
      %p677 = pneg %p468
      %p678 = pneg %p492
      %p679 = pneg %p489
      %p680 = pneg %p518
      %p681 = pneg %p515
      %p682 = scmp.lt.s32.totalorder %s35, 7
      %s683 = scalar_select %p682, %s35, 7
      %s684 = smul.addr %s683, 8
      %s685 = scalar_lea.vmem %s22, %s684
      %p686 = pneg %p544
      %p687 = pneg %p541
      %p688 = scmp.lt.s32.totalorder %s35, 7
      %s689 = scalar_select %p688, %s35, 7
      %s690 = smul.addr %s689, 8
      %s691 = scalar_lea.vmem %s23, %s690
      %p692 = scmp.lt.s32.totalorder %s35, 7
      %s693 = scalar_select %p692, %s35, 7
      %s694 = smul.addr %s693, 8
      %s695 = scalar_lea.vmem %s22, %s694
      %p696 = scmp.lt.s32.totalorder %s35, 7
      %s697 = scalar_select %p696, %s35, 7
      %s698 = smul.addr %s697, 8
      %s699 = scalar_lea.vmem %s23, %s698
      %p700 = scmp.eq.s32.totalorder %s35, 0
      // Predicated region
      $region109: #{_forward_core.3} parent=107 // pred_check
        %p701 = pneg %p700
      $region110: #{_forward_core.3} parent=107 // pred_check_branch
        %703 = sbr.rel (%p701) target = $region112
      $region111: #{_forward_core.3} parent=107 // pred_region
        %vm704 = vcmask 72704
        %705 = vst.msk [vmem:[#allocation2] sm:$0xff] %vm704, 0.0
        %706 = vst.msk [vmem:[#allocation2 + $0x8] sm:$0xff] %vm704, 0.0
        %707 = vst.msk [vmem:[#allocation2 + $0x10] sm:$0xff] %vm704, 0.0
        %708 = vst.msk [vmem:[#allocation2 + $0x18] sm:$0xff] %vm704, 0.0
        %709 = vst.msk [vmem:[#allocation2 + $0x20] sm:$0xff] %vm704, 0.0
        %710 = vst.msk [vmem:[#allocation2 + $0x28] sm:$0xff] %vm704, 0.0
        %711 = vst.msk [vmem:[#allocation2 + $0x30] sm:$0xff] %vm704, 0.0
        %712 = vst.msk [vmem:[#allocation2 + $0x38] sm:$0xff] %vm704, 0.0
        %713 = vst [vmem:[#allocation3] sm:$0xff] 0.0
        %714 = vst [vmem:[#allocation3 + $0x8] sm:$0xff] 0.0
        %vm715 = vcmask 261120
        %716 = vst.msk [vmem:[#allocation3 + $0x10] sm:$0xff] %vm715, 0.0
        %717 = vst [vmem:[#allocation3 + $0x18] sm:$0xff] 0.0
        %718 = vst [vmem:[#allocation3 + $0x20] sm:$0xff] 0.0
        %719 = vst.msk [vmem:[#allocation3 + $0x28] sm:$0xff] %vm715, 0.0
        %720 = vst [vmem:[#allocation3 + $0x30] sm:$0xff] 0.0
        %721 = vst [vmem:[#allocation3 + $0x38] sm:$0xff] 0.0
        %722 = vst.msk [vmem:[#allocation3 + $0x40] sm:$0xff] %vm715, 0.0
        %723 = vst [vmem:[#allocation3 + $0x48] sm:$0xff] 0.0
        %724 = vst [vmem:[#allocation3 + $0x50] sm:$0xff] 0.0
        %725 = vst.msk [vmem:[#allocation3 + $0x58] sm:$0xff] %vm715, 0.0
        %726 = vst [vmem:[#allocation3 + $0x60] sm:$0xff] 0.0
        %727 = vst [vmem:[#allocation3 + $0x68] sm:$0xff] 0.0
        %728 = vst.msk [vmem:[#allocation3 + $0x70] sm:$0xff] %vm715, 0.0
        %729 = vst [vmem:[#allocation3 + $0x78] sm:$0xff] 0.0
        %730 = vst [vmem:[#allocation3 + $0x80] sm:$0xff] 0.0
        %731 = vst.msk [vmem:[#allocation3 + $0x88] sm:$0xff] %vm715, 0.0
        %732 = vst [vmem:[#allocation3 + $0x90] sm:$0xff] 0.0
        %733 = vst [vmem:[#allocation3 + $0x98] sm:$0xff] 0.0
        %734 = vst.msk [vmem:[#allocation3 + $0xa0] sm:$0xff] %vm715, 0.0
        %735 = vst [vmem:[#allocation3 + $0xa8] sm:$0xff] 0.0
        %736 = vst [vmem:[#allocation3 + $0xb0] sm:$0xff] 0.0
        %737 = vst.msk [vmem:[#allocation3 + $0xb8] sm:$0xff] %vm715, 0.0
        %vm738 = vcmask 785408
        %739 = vst.msk [vmem:[#allocation4] sm:$0xff] %vm738, 0.0
        %740 = vst.msk [vmem:[#allocation5] sm:$0xff] %vm738, 0.0
        %741 = vst.msk [vmem:[#allocation5 + $0x8] sm:$0xff] %vm738, 0.0
        %742 = vst.msk [vmem:[#allocation6] sm:$0xff] %vm738, 0.0
      $region112: #{_forward_core.3} parent=107 // pred_fallthru
        _
      %s743 = smul.u32 %s35, 8
      %s744 = scalar_lea.vmem %s0, %s743
      %v745 = vld [vmem:[%s744] sm:$0xff]
      %s746 = scalar_lea.vmem %s1, %s743
      %v747 = vld [vmem:[%s746] sm:$0xff]
      %s748 = smul.u32 %s35, 16
      %s749 = scalar_lea.vmem %s2, %s748
      %v750 = vld [vmem:[%s749] sm:$0xff]
      %v751 = vld [vmem:[%s749 + $0x8] sm:$0xff]
      %v752 = vld [vmem:[#allocation5] sm:$0xff]
      %v753 = vld [vmem:[#allocation5 + $0x8] sm:$0xff]
      %vm754 = vcmask 130048
      %v756 = vsel %vm754, %v747, 0
      %758 = vmatprep.subr.mxu0 0.0
      %759 = vmatpush1.msra.mxu0 0.0
      %760 = vmatprep.subr.mxu0 0.0
      %761 = vmatpush1.msra.mxu0 0.0
      %762 = vmatprep.subr.mxu0 0.0
      %763 = vmatpush1.msra.mxu0 0.0
      %764 = vmatprep.subr.mxu0 0.0
      %765 = vmatpush1.msra.mxu0 0.0
      %766 = vmatprep.subr.mxu0 0.0
      %767 = vmatpush1.msra.mxu0 0.0
      %768 = vmatprep.subr.mxu0 0.0
      %769 = vmatpush1.msra.mxu0 0.0
      %770 = vmatprep.subr.mxu0 0.0
      %771 = vmatpush1.msra.mxu0 0.0
      %772 = vmatprep.subr.mxu0 0.0
      %773 = vmatpush1.msra.mxu0 0.0
      %774 = vmatprep.subr.mxu0 0.0
      %775 = vmatpush1.msra.mxu0 0.0
      %776 = vmatprep.subr.mxu0 0.0
      %777 = vmatpush1.msra.mxu0 0.0
      %778 = vmatprep.subr.mxu0 0.0
      %779 = vmatpush1.msra.mxu0 0.0
      %780 = vmatprep.subr.mxu0 0.0
      %781 = vmatpush1.msra.mxu0 0.0
      %782 = vmatprep.subr.mxu0 0.0
      %783 = vmatpush1.msra.mxu0 0.0
      %784 = vmatprep.subr.mxu0 0.0
      %785 = vmatpush1.msra.mxu0 0.0
      %786 = vmatprep.subr.mxu0 0.0
      %787 = vmatpush1.msra.mxu0 %v753
      %788 = vmatprep.subr.mxu0 0.0
      %789 = vmatpush1.msra.mxu0 %v752
      %790 = vmatprep.subr.mxu0 0.0
      %791 = vmatpush2.msra.mxu0 0.0
      %792 = vmatprep.subr.mxu0 0.0
      %793 = vmatpush2.msra.mxu0 0.0
      %794 = vmatprep.subr.mxu0 0.0
      %795 = vmatpush2.msra.mxu0 0.0
      %796 = vmatprep.subr.mxu0 0.0
      %797 = vmatpush2.msra.mxu0 0.0
      %798 = vmatprep.subr.mxu0 0.0
      %799 = vmatpush2.msra.mxu0 0.0
      %800 = vmatprep.subr.mxu0 0.0
      %801 = vmatpush2.msra.mxu0 0.0
      %802 = vmatprep.subr.mxu0 0.0
      %803 = vmatpush2.msra.mxu0 0.0
      %804 = vmatprep.subr.mxu0 0.0
      %805 = vmatpush2.msra.mxu0 0.0
      %806 = vmatprep.subr.mxu0 0.0
      %807 = vmatpush2.msra.mxu0 0.0
      %808 = vmatprep.subr.mxu0 0.0
      %809 = vmatpush2.msra.mxu0 0.0
      %810 = vmatprep.subr.mxu0 0.0
      %811 = vmatpush2.msra.mxu0 0.0
      %812 = vmatprep.subr.mxu0 0.0
      %813 = vmatpush2.msra.mxu0 0.0
      %814 = vmatprep.subr.mxu0 0.0
      %815 = vmatpush2.msra.mxu0 0.0
      %816 = vmatprep.subr.mxu0 0.0
      %817 = vmatpush2.msra.mxu0 0.0
      %818 = vmatprep.subr.mxu0 0.0
      %819 = vmatpush2.msra.mxu0 0.0
      %820 = vmatprep.subr.mxu0 0.0
      %821 = vmatpush2.msra.mxu0 0.0
      %822 = vmatprep.mubr.f32.mxu0 0.0
      %823 = vmatmul.mubr.f32.gmra.mxu0 %v756
      %v824 = vpop.f32.mrf.mxu0
      %v825 = vadd.f32 0.0, %v824
      %v826 = vpop.f32.mrf.mxu0
      %827 = vdwg.mxu0
      %v828 = vld [vmem:[#allocation4] sm:$0xff]
      %v829 = vld [vmem:[%s4] sm:$0xff]
      %v830 = vld [vmem:[%s4 + $0x8] sm:$0xff]
      %v831 = vld [vmem:[%s4 + $0x10] sm:$0xff]
      %v832 = vld [vmem:[%s4 + $0x18] sm:$0xff]
      %v833 = vld [vmem:[%s4 + $0x20] sm:$0xff]
      %v834 = vld [vmem:[%s4 + $0x28] sm:$0xff]
      %v835 = vld [vmem:[%s4 + $0x30] sm:$0xff]
      %v836 = vld [vmem:[%s4 + $0x38] sm:$0xff]
      %v837 = vld [vmem:[%s4 + $0x40] sm:$0xff]
      %v838 = vld [vmem:[%s4 + $0x48] sm:$0xff]
      %v839 = vld [vmem:[%s4 + $0x50] sm:$0xff]
      %v840 = vld [vmem:[%s4 + $0x58] sm:$0xff]
      %v841 = vld [vmem:[%s4 + $0x60] sm:$0xff]
      %v842 = vld [vmem:[%s4 + $0x68] sm:$0xff]
      %v843 = vld [vmem:[%s4 + $0x70] sm:$0xff]
      %v844 = vld [vmem:[%s4 + $0x78] sm:$0xff]
      %v845 = vld [vmem:[%s4 + $0x80] sm:$0xff]
      %v846 = vld [vmem:[%s4 + $0x88] sm:$0xff]
      %v847 = vld [vmem:[%s4 + $0x90] sm:$0xff]
      %v848 = vld [vmem:[%s4 + $0x98] sm:$0xff]
      %v849 = vld [vmem:[%s4 + $0xa0] sm:$0xff]
      %v850 = vld [vmem:[%s4 + $0xa8] sm:$0xff]
      %v851 = vld [vmem:[%s4 + $0xb0] sm:$0xff]
      %v852 = vld [vmem:[%s4 + $0xb8] sm:$0xff]
      %v853 = vld [vmem:[%s4 + $0xc0] sm:$0xff]
      %v854 = vld [vmem:[%s4 + $0xc8] sm:$0xff]
      %v855 = vld [vmem:[%s4 + $0xd0] sm:$0xff]
      %v856 = vld [vmem:[%s4 + $0xd8] sm:$0xff]
      %v857 = vld [vmem:[%s4 + $0xe0] sm:$0xff]
      %v858 = vld [vmem:[%s4 + $0xe8] sm:$0xff]
      %v859 = vld [vmem:[%s4 + $0xf0] sm:$0xff]
      %v860 = vld [vmem:[%s4 + $0xf8] sm:$0xff]
      %v861 = vld [vmem:[%s4 + $0x100] sm:$0xff]
      %v862 = vld [vmem:[%s4 + $0x108] sm:$0xff]
      %v863 = vld [vmem:[%s4 + $0x110] sm:$0xff]
      %v864 = vld [vmem:[%s4 + $0x118] sm:$0xff]
      %v865 = vld [vmem:[%s5] sm:$0xff]
      %v866 = vld [vmem:[%s5 + $0x8] sm:$0xff]
      %v867 = vld [vmem:[%s5 + $0x10] sm:$0xff]
      %v868 = vld [vmem:[%s5 + $0x18] sm:$0xff]
      %v869 = vld [vmem:[%s5 + $0x20] sm:$0xff]
      %v870 = vld [vmem:[%s5 + $0x28] sm:$0xff]
      %v871 = vld [vmem:[%s5 + $0x30] sm:$0xff]
      %v872 = vld [vmem:[%s5 + $0x38] sm:$0xff]
      %v873 = vld [vmem:[%s5 + $0x40] sm:$0xff]
      %v874 = vld [vmem:[%s5 + $0x48] sm:$0xff]
      %v875 = vld [vmem:[%s5 + $0x50] sm:$0xff]
      %v876 = vld [vmem:[%s5 + $0x58] sm:$0xff]
      %v877 = vld [vmem:[%s5 + $0x60] sm:$0xff]
      %v878 = vld [vmem:[%s5 + $0x68] sm:$0xff]
      %v879 = vld [vmem:[%s5 + $0x70] sm:$0xff]
      %v880 = vld [vmem:[%s5 + $0x78] sm:$0xff]
      %v881 = vld [vmem:[%s5 + $0x80] sm:$0xff]
      %v882 = vld [vmem:[%s5 + $0x88] sm:$0xff]
      %v883 = vld [vmem:[%s5 + $0x90] sm:$0xff]
      %v884 = vld [vmem:[%s5 + $0x98] sm:$0xff]
      %v885 = vld [vmem:[%s5 + $0xa0] sm:$0xff]
      %v886 = vld [vmem:[%s5 + $0xa8] sm:$0xff]
      %v887 = vld [vmem:[%s5 + $0xb0] sm:$0xff]
      %v888 = vld [vmem:[%s5 + $0xb8] sm:$0xff]
      %v889 = vld [vmem:[%s5 + $0xc0] sm:$0xff]
      %v890 = vld [vmem:[%s5 + $0xc8] sm:$0xff]
      %v891 = vld [vmem:[%s5 + $0xd0] sm:$0xff]
      %v892 = vld [vmem:[%s5 + $0xd8] sm:$0xff]
      %v893 = vld [vmem:[%s5 + $0xe0] sm:$0xff]
      %v894 = vld [vmem:[%s5 + $0xe8] sm:$0xff]
      %v895 = vld [vmem:[%s5 + $0xf0] sm:$0xff]
      %v896 = vld [vmem:[%s5 + $0xf8] sm:$0xff]
      %v897 = vld [vmem:[%s5 + $0x100] sm:$0xff]
      %v898 = vld [vmem:[%s5 + $0x108] sm:$0xff]
      %v899 = vld [vmem:[%s5 + $0x110] sm:$0xff]
      %v900 = vld [vmem:[%s5 + $0x118] sm:$0xff]
      %vm901 = vcmask 785408
      %v903 = vsel %vm901, %v825, 0
      %905 = vmatprep.subr.mxu0 0.0
      %906 = vmatpush1.msra.mxu0 0.0
      %907 = vmatprep.subr.mxu0 0.0
      %908 = vmatpush1.msra.mxu0 0.0
      %909 = vmatprep.subr.mxu0 0.0
      %910 = vmatpush1.msra.mxu0 0.0
      %911 = vmatprep.subr.mxu0 0.0
      %912 = vmatpush1.msra.mxu0 0.0
      %913 = vmatprep.subr.mxu0 %v899
      %914 = vmatpush1.msra.mxu0 %v898
      %915 = vmatprep.subr.mxu0 %v896
      %916 = vmatpush1.msra.mxu0 %v895
      %917 = vmatprep.subr.mxu0 %v893
      %918 = vmatpush1.msra.mxu0 %v892
      %919 = vmatprep.subr.mxu0 %v890
      %920 = vmatpush1.msra.mxu0 %v889
      %921 = vmatprep.subr.mxu0 %v887
      %922 = vmatpush1.msra.mxu0 %v886
      %923 = vmatprep.subr.mxu0 %v884
      %924 = vmatpush1.msra.mxu0 %v883
      %925 = vmatprep.subr.mxu0 %v881
      %926 = vmatpush1.msra.mxu0 %v880
      %927 = vmatprep.subr.mxu0 %v878
      %928 = vmatpush1.msra.mxu0 %v877
      %929 = vmatprep.subr.mxu0 %v875
      %930 = vmatpush1.msra.mxu0 %v874
      %931 = vmatprep.subr.mxu0 %v872
      %932 = vmatpush1.msra.mxu0 %v871
      %933 = vmatprep.subr.mxu0 %v869
      %934 = vmatpush1.msra.mxu0 %v868
      %935 = vmatprep.subr.mxu0 %v866
      %936 = vmatpush1.msra.mxu0 %v865
      %937 = vmatprep.subr.mxu0 0.0
      %938 = vmatpush2.msra.mxu0 0.0
      %939 = vmatprep.subr.mxu0 0.0
      %940 = vmatpush2.msra.mxu0 0.0
      %941 = vmatprep.subr.mxu0 0.0
      %942 = vmatpush2.msra.mxu0 0.0
      %943 = vmatprep.subr.mxu0 0.0
      %944 = vmatpush2.msra.mxu0 0.0
      %945 = vmatprep.subr.mxu0 0.0
      %946 = vmatpush2.msra.mxu0 0.0
      %947 = vmatprep.subr.mxu0 0.0
      %948 = vmatpush2.msra.mxu0 0.0
      %949 = vmatprep.subr.mxu0 0.0
      %950 = vmatpush2.msra.mxu0 0.0
      %951 = vmatprep.subr.mxu0 0.0
      %952 = vmatpush2.msra.mxu0 0.0
      %953 = vmatprep.subr.mxu0 0.0
      %954 = vmatpush2.msra.mxu0 0.0
      %955 = vmatprep.subr.mxu0 0.0
      %956 = vmatpush2.msra.mxu0 0.0
      %957 = vmatprep.subr.mxu0 0.0
      %958 = vmatpush2.msra.mxu0 0.0
      %959 = vmatprep.subr.mxu0 0.0
      %960 = vmatpush2.msra.mxu0 0.0
      %961 = vmatprep.subr.mxu0 0.0
      %962 = vmatpush2.msra.mxu0 0.0
      %963 = vmatprep.subr.mxu0 0.0
      %964 = vmatpush2.msra.mxu0 0.0
      %965 = vmatprep.subr.mxu0 0.0
      %966 = vmatpush2.msra.mxu0 0.0
      %967 = vmatprep.subr.mxu0 0.0
      %968 = vmatpush2.msra.mxu0 0.0
      %969 = vmatprep.mubr.f32.mxu0 0.0
      %970 = vmatmul.mubr.f32.gmra.mxu0 %v903
      %v971 = vpop.f32.mrf.mxu0
      %v972 = vadd.f32 0.0, %v971
      %v973 = vpop.f32.mrf.mxu0
      %v974 = vadd.f32 0.0, %v973
      %975 = vdwg.mxu0
      %976 = vmatprep.subr.mxu0 0.0
      %977 = vmatpush1.msra.mxu0 0.0
      %978 = vmatprep.subr.mxu0 0.0
      %979 = vmatpush1.msra.mxu0 0.0
      %980 = vmatprep.subr.mxu0 0.0
      %981 = vmatpush1.msra.mxu0 0.0
      %982 = vmatprep.subr.mxu0 0.0
      %983 = vmatpush1.msra.mxu0 0.0
      %984 = vmatprep.subr.mxu0 0.0
      %985 = vmatpush1.msra.mxu0 %v900
      %986 = vmatprep.subr.mxu0 0.0
      %987 = vmatpush1.msra.mxu0 %v897
      %988 = vmatprep.subr.mxu0 0.0
      %989 = vmatpush1.msra.mxu0 %v894
      %990 = vmatprep.subr.mxu0 0.0
      %991 = vmatpush1.msra.mxu0 %v891
      %992 = vmatprep.subr.mxu0 0.0
      %993 = vmatpush1.msra.mxu0 %v888
      %994 = vmatprep.subr.mxu0 0.0
      %995 = vmatpush1.msra.mxu0 %v885
      %996 = vmatprep.subr.mxu0 0.0
      %997 = vmatpush1.msra.mxu0 %v882
      %998 = vmatprep.subr.mxu0 0.0
      %999 = vmatpush1.msra.mxu0 %v879
      %1000 = vmatprep.subr.mxu0 0.0
      %1001 = vmatpush1.msra.mxu0 %v876
      %1002 = vmatprep.subr.mxu0 0.0
      %1003 = vmatpush1.msra.mxu0 %v873
      %1004 = vmatprep.subr.mxu0 0.0
      %1005 = vmatpush1.msra.mxu0 %v870
      %1006 = vmatprep.subr.mxu0 0.0
      %1007 = vmatpush1.msra.mxu0 %v867
      %1008 = vmatprep.subr.mxu0 0.0
      %1009 = vmatpush2.msra.mxu0 0.0
      %1010 = vmatprep.subr.mxu0 0.0
      %1011 = vmatpush2.msra.mxu0 0.0
      %1012 = vmatprep.subr.mxu0 0.0
      %1013 = vmatpush2.msra.mxu0 0.0
      %1014 = vmatprep.subr.mxu0 0.0
      %1015 = vmatpush2.msra.mxu0 0.0
      %1016 = vmatprep.subr.mxu0 0.0
      %1017 = vmatpush2.msra.mxu0 0.0
      %1018 = vmatprep.subr.mxu0 0.0
      %1019 = vmatpush2.msra.mxu0 0.0
      %1020 = vmatprep.subr.mxu0 0.0
      %1021 = vmatpush2.msra.mxu0 0.0
      %1022 = vmatprep.subr.mxu0 0.0
      %1023 = vmatpush2.msra.mxu0 0.0
      %1024 = vmatprep.subr.mxu0 0.0
      %1025 = vmatpush2.msra.mxu0 0.0
      %1026 = vmatprep.subr.mxu0 0.0
      %1027 = vmatpush2.msra.mxu0 0.0
      %1028 = vmatprep.subr.mxu0 0.0
      %1029 = vmatpush2.msra.mxu0 0.0
      %1030 = vmatprep.subr.mxu0 0.0
      %1031 = vmatpush2.msra.mxu0 0.0
      %1032 = vmatprep.subr.mxu0 0.0
      %1033 = vmatpush2.msra.mxu0 0.0
      %1034 = vmatprep.subr.mxu0 0.0
      %1035 = vmatpush2.msra.mxu0 0.0
      %1036 = vmatprep.subr.mxu0 0.0
      %1037 = vmatpush2.msra.mxu0 0.0
      %1038 = vmatprep.subr.mxu0 0.0
      %1039 = vmatpush2.msra.mxu0 0.0
      %1040 = vmatprep.mubr.f32.mxu0 0.0
      %1041 = vmatmul.mubr.f32.gmra.mxu0 %v903
      %v1042 = vpop.f32.mrf.mxu0
      %v1043 = vadd.f32 0.0, %v1042
      %v1044 = vpop.f32.mrf.mxu0
      %1045 = vdwg.mxu0
      %v1047 = vsel %vm901, %v745, 0
      %1049 = vmatprep.subr.mxu0 0.0
      %1050 = vmatpush1.msra.mxu0 0.0
      %1051 = vmatprep.subr.mxu0 0.0
      %1052 = vmatpush1.msra.mxu0 0.0
      %1053 = vmatprep.subr.mxu0 0.0
      %1054 = vmatpush1.msra.mxu0 0.0
      %1055 = vmatprep.subr.mxu0 0.0
      %1056 = vmatpush1.msra.mxu0 0.0
      %1057 = vmatprep.subr.mxu0 %v863
      %1058 = vmatpush1.msra.mxu0 %v862
      %1059 = vmatprep.subr.mxu0 %v860
      %1060 = vmatpush1.msra.mxu0 %v859
      %1061 = vmatprep.subr.mxu0 %v857
      %1062 = vmatpush1.msra.mxu0 %v856
      %1063 = vmatprep.subr.mxu0 %v854
      %1064 = vmatpush1.msra.mxu0 %v853
      %1065 = vmatprep.subr.mxu0 %v851
      %1066 = vmatpush1.msra.mxu0 %v850
      %1067 = vmatprep.subr.mxu0 %v848
      %1068 = vmatpush1.msra.mxu0 %v847
      %1069 = vmatprep.subr.mxu0 %v845
      %1070 = vmatpush1.msra.mxu0 %v844
      %1071 = vmatprep.subr.mxu0 %v842
      %1072 = vmatpush1.msra.mxu0 %v841
      %1073 = vmatprep.subr.mxu0 %v839
      %1074 = vmatpush1.msra.mxu0 %v838
      %1075 = vmatprep.subr.mxu0 %v836
      %1076 = vmatpush1.msra.mxu0 %v835
      %1077 = vmatprep.subr.mxu0 %v833
      %1078 = vmatpush1.msra.mxu0 %v832
      %1079 = vmatprep.subr.mxu0 %v830
      %1080 = vmatpush1.msra.mxu0 %v829
      %1081 = vmatprep.subr.mxu0 0.0
      %1082 = vmatpush2.msra.mxu0 0.0
      %1083 = vmatprep.subr.mxu0 0.0
      %1084 = vmatpush2.msra.mxu0 0.0
      %1085 = vmatprep.subr.mxu0 0.0
      %1086 = vmatpush2.msra.mxu0 0.0
      %1087 = vmatprep.subr.mxu0 0.0
      %1088 = vmatpush2.msra.mxu0 0.0
      %1089 = vmatprep.subr.mxu0 0.0
      %1090 = vmatpush2.msra.mxu0 0.0
      %1091 = vmatprep.subr.mxu0 0.0
      %1092 = vmatpush2.msra.mxu0 0.0
      %1093 = vmatprep.subr.mxu0 0.0
      %1094 = vmatpush2.msra.mxu0 0.0
      %1095 = vmatprep.subr.mxu0 0.0
      %1096 = vmatpush2.msra.mxu0 0.0
      %1097 = vmatprep.subr.mxu0 0.0
      %1098 = vmatpush2.msra.mxu0 0.0
      %1099 = vmatprep.subr.mxu0 0.0
      %1100 = vmatpush2.msra.mxu0 0.0
      %1101 = vmatprep.subr.mxu0 0.0
      %1102 = vmatpush2.msra.mxu0 0.0
      %1103 = vmatprep.subr.mxu0 0.0
      %1104 = vmatpush2.msra.mxu0 0.0
      %1105 = vmatprep.subr.mxu0 0.0
      %1106 = vmatpush2.msra.mxu0 0.0
      %1107 = vmatprep.subr.mxu0 0.0
      %1108 = vmatpush2.msra.mxu0 0.0
      %1109 = vmatprep.subr.mxu0 0.0
      %1110 = vmatpush2.msra.mxu0 0.0
      %1111 = vmatprep.subr.mxu0 0.0
      %1112 = vmatpush2.msra.mxu0 0.0
      %1113 = vmatprep.mubr.f32.mxu0 0.0
      %1114 = vmatmul.mubr.f32.gmra.mxu0 %v1047
      %v1115 = vpop.f32.mrf.mxu0
      %v1116 = vadd.f32 %v972, %v1115
      %v1117 = vpop.f32.mrf.mxu0
      %v1118 = vadd.f32 %v974, %v1117
      %1119 = vdwg.mxu0
      %1120 = vmatprep.subr.mxu0 0.0
      %1121 = vmatpush1.msra.mxu0 0.0
      %1122 = vmatprep.subr.mxu0 0.0
      %1123 = vmatpush1.msra.mxu0 0.0
      %1124 = vmatprep.subr.mxu0 0.0
      %1125 = vmatpush1.msra.mxu0 0.0
      %1126 = vmatprep.subr.mxu0 0.0
      %1127 = vmatpush1.msra.mxu0 0.0
      %1128 = vmatprep.subr.mxu0 0.0
      %1129 = vmatpush1.msra.mxu0 %v864
      %1130 = vmatprep.subr.mxu0 0.0
      %1131 = vmatpush1.msra.mxu0 %v861
      %1132 = vmatprep.subr.mxu0 0.0
      %1133 = vmatpush1.msra.mxu0 %v858
      %1134 = vmatprep.subr.mxu0 0.0
      %1135 = vmatpush1.msra.mxu0 %v855
      %1136 = vmatprep.subr.mxu0 0.0
      %1137 = vmatpush1.msra.mxu0 %v852
      %1138 = vmatprep.subr.mxu0 0.0
      %1139 = vmatpush1.msra.mxu0 %v849
      %1140 = vmatprep.subr.mxu0 0.0
      %1141 = vmatpush1.msra.mxu0 %v846
      %1142 = vmatprep.subr.mxu0 0.0
      %1143 = vmatpush1.msra.mxu0 %v843
      %1144 = vmatprep.subr.mxu0 0.0
      %1145 = vmatpush1.msra.mxu0 %v840
      %1146 = vmatprep.subr.mxu0 0.0
      %1147 = vmatpush1.msra.mxu0 %v837
      %1148 = vmatprep.subr.mxu0 0.0
      %1149 = vmatpush1.msra.mxu0 %v834
      %1150 = vmatprep.subr.mxu0 0.0
      %1151 = vmatpush1.msra.mxu0 %v831
      %1152 = vmatprep.subr.mxu0 0.0
      %1153 = vmatpush2.msra.mxu0 0.0
      %1154 = vmatprep.subr.mxu0 0.0
      %1155 = vmatpush2.msra.mxu0 0.0
      %1156 = vmatprep.subr.mxu0 0.0
      %1157 = vmatpush2.msra.mxu0 0.0
      %1158 = vmatprep.subr.mxu0 0.0
      %1159 = vmatpush2.msra.mxu0 0.0
      %1160 = vmatprep.subr.mxu0 0.0
      %1161 = vmatpush2.msra.mxu0 0.0
      %1162 = vmatprep.subr.mxu0 0.0
      %1163 = vmatpush2.msra.mxu0 0.0
      %1164 = vmatprep.subr.mxu0 0.0
      %1165 = vmatpush2.msra.mxu0 0.0
      %1166 = vmatprep.subr.mxu0 0.0
      %1167 = vmatpush2.msra.mxu0 0.0
      %1168 = vmatprep.subr.mxu0 0.0
      %1169 = vmatpush2.msra.mxu0 0.0
      %1170 = vmatprep.subr.mxu0 0.0
      %1171 = vmatpush2.msra.mxu0 0.0
      %1172 = vmatprep.subr.mxu0 0.0
      %1173 = vmatpush2.msra.mxu0 0.0
      %1174 = vmatprep.subr.mxu0 0.0
      %1175 = vmatpush2.msra.mxu0 0.0
      %1176 = vmatprep.subr.mxu0 0.0
      %1177 = vmatpush2.msra.mxu0 0.0
      %1178 = vmatprep.subr.mxu0 0.0
      %1179 = vmatpush2.msra.mxu0 0.0
      %1180 = vmatprep.subr.mxu0 0.0
      %1181 = vmatpush2.msra.mxu0 0.0
      %1182 = vmatprep.subr.mxu0 0.0
      %1183 = vmatpush2.msra.mxu0 0.0
      %1184 = vmatprep.mubr.f32.mxu0 0.0
      %1185 = vmatmul.mubr.f32.gmra.mxu0 %v1047
      %v1186 = vpop.f32.mrf.mxu0
      %v1187 = vadd.f32 %v1043, %v1186
      %v1188 = vpop.f32.mrf.mxu0
      %1189 = vdwg.mxu0
      %v1190 = vld [vmem:[%s7] ss:$2 sm:$0x7]
      %v1192 = vlaneseq
      %v1193 = vshrl.u32 %v1192, 7
      %v1194 = vsub.s32 0, %v1193
      %v1195 = vrot.slane %v1190, %v1194
      %v1196 = vlaneseq
      %v1197 = vshrl.u32 %v1196, 7
      %v1198 = vsub.s32 1, %v1197
      %v1199 = vrot.slane %v1190, %v1198
      %v1200 = vlaneseq
      %v1201 = vshrl.u32 %v1200, 7
      %v1202 = vsub.s32 2, %v1201
      %v1203 = vrot.slane %v1190, %v1202
      %v1207 = vadd.f32 %v1116, %v1195
      %v1208 = vadd.f32 %v1118, %v1199
      %v1209 = vadd.f32 %v1187, %v1203
      %v1210 = vld [vmem:[%s6] sm:$0xff]
      %v1211 = vld [vmem:[%s6 + $0x8] sm:$0xff]
      %v1212 = vld [vmem:[%s6 + $0x10] sm:$0xff]
      %v1213 = vld [vmem:[%s6 + $0x18] sm:$0xff]
      %v1214 = vld [vmem:[%s6 + $0x20] sm:$0xff]
      %v1215 = vld [vmem:[%s6 + $0x28] sm:$0xff]
      %v1216 = vld [vmem:[%s6 + $0x30] sm:$0xff]
      %v1217 = vld [vmem:[%s6 + $0x38] sm:$0xff]
      %v1218 = vld [vmem:[%s6 + $0x40] sm:$0xff]
      %v1219 = vld [vmem:[%s6 + $0x48] sm:$0xff]
      %v1220 = vld [vmem:[%s6 + $0x50] sm:$0xff]
      %v1221 = vld [vmem:[%s6 + $0x58] sm:$0xff]
      %v1222 = vld [vmem:[%s6 + $0x60] sm:$0xff]
      %v1223 = vld [vmem:[%s6 + $0x68] sm:$0xff]
      %v1224 = vld [vmem:[%s6 + $0x70] sm:$0xff]
      %v1225 = vld [vmem:[%s6 + $0x78] sm:$0xff]
      %v1226 = vld [vmem:[%s6 + $0x80] sm:$0xff]
      %v1227 = vld [vmem:[%s6 + $0x88] sm:$0xff]
      %v1228 = vld [vmem:[%s6 + $0x90] sm:$0xff]
      %v1229 = vld [vmem:[%s6 + $0x98] sm:$0xff]
      %v1230 = vld [vmem:[%s6 + $0xa0] sm:$0xff]
      %v1231 = vld [vmem:[%s6 + $0xa8] sm:$0xff]
      %v1232 = vld [vmem:[%s6 + $0xb0] sm:$0xff]
      %v1233 = vld [vmem:[%s6 + $0xb8] sm:$0xff]
      %v1234 = vld [vmem:[%s6 + $0xc0] sm:$0xff]
      %v1235 = vld [vmem:[%s6 + $0xc8] sm:$0xff]
      %v1236 = vld [vmem:[%s6 + $0xd0] sm:$0xff]
      %v1237 = vld [vmem:[%s6 + $0xd8] sm:$0xff]
      %v1238 = vld [vmem:[%s6 + $0xe0] sm:$0xff]
      %v1239 = vld [vmem:[%s6 + $0xe8] sm:$0xff]
      %v1240 = vld [vmem:[%s6 + $0xf0] sm:$0xff]
      %v1241 = vld [vmem:[%s6 + $0xf8] sm:$0xff]
      %v1242 = vld [vmem:[%s6 + $0x100] sm:$0xff]
      %v1243 = vld [vmem:[%s6 + $0x108] sm:$0xff]
      %v1244 = vld [vmem:[%s6 + $0x110] sm:$0xff]
      %v1245 = vld [vmem:[%s6 + $0x118] sm:$0xff]
      %s1246 = scalar_lea.vmem %s7, 1
      %v1247 = vld [vmem:[%s1246] ss:$2 sm:$0x7]
      %v1249 = vlaneseq
      %v1250 = vshrl.u32 %v1249, 7
      %v1251 = vsub.s32 0, %v1250
      %v1252 = vrot.slane %v1247, %v1251
      %v1253 = vlaneseq
      %v1254 = vshrl.u32 %v1253, 7
      %v1255 = vsub.s32 1, %v1254
      %v1256 = vrot.slane %v1247, %v1255
      %v1257 = vlaneseq
      %v1258 = vshrl.u32 %v1257, 7
      %v1259 = vsub.s32 2, %v1258
      %v1260 = vrot.slane %v1247, %v1259
      %v1265 = vsel %vm901, %v828, 0
      %1267 = vmatprep.subr.mxu0 0.0
      %1268 = vmatpush1.msra.mxu0 0.0
      %1269 = vmatprep.subr.mxu0 0.0
      %1270 = vmatpush1.msra.mxu0 0.0
      %1271 = vmatprep.subr.mxu0 0.0
      %1272 = vmatpush1.msra.mxu0 0.0
      %1273 = vmatprep.subr.mxu0 0.0
      %1274 = vmatpush1.msra.mxu0 0.0
      %1275 = vmatprep.subr.mxu0 %v1244
      %1276 = vmatpush1.msra.mxu0 %v1243
      %1277 = vmatprep.subr.mxu0 %v1241
      %1278 = vmatpush1.msra.mxu0 %v1240
      %1279 = vmatprep.subr.mxu0 %v1238
      %1280 = vmatpush1.msra.mxu0 %v1237
      %1281 = vmatprep.subr.mxu0 %v1235
      %1282 = vmatpush1.msra.mxu0 %v1234
      %1283 = vmatprep.subr.mxu0 %v1232
      %1284 = vmatpush1.msra.mxu0 %v1231
      %1285 = vmatprep.subr.mxu0 %v1229
      %1286 = vmatpush1.msra.mxu0 %v1228
      %1287 = vmatprep.subr.mxu0 %v1226
      %1288 = vmatpush1.msra.mxu0 %v1225
      %1289 = vmatprep.subr.mxu0 %v1223
      %1290 = vmatpush1.msra.mxu0 %v1222
      %1291 = vmatprep.subr.mxu0 %v1220
      %1292 = vmatpush1.msra.mxu0 %v1219
      %1293 = vmatprep.subr.mxu0 %v1217
      %1294 = vmatpush1.msra.mxu0 %v1216
      %1295 = vmatprep.subr.mxu0 %v1214
      %1296 = vmatpush1.msra.mxu0 %v1213
      %1297 = vmatprep.subr.mxu0 %v1211
      %1298 = vmatpush1.msra.mxu0 %v1210
      %1299 = vmatprep.subr.mxu0 0.0
      %1300 = vmatpush2.msra.mxu0 0.0
      %1301 = vmatprep.subr.mxu0 0.0
      %1302 = vmatpush2.msra.mxu0 0.0
      %1303 = vmatprep.subr.mxu0 0.0
      %1304 = vmatpush2.msra.mxu0 0.0
      %1305 = vmatprep.subr.mxu0 0.0
      %1306 = vmatpush2.msra.mxu0 0.0
      %1307 = vmatprep.subr.mxu0 0.0
      %1308 = vmatpush2.msra.mxu0 0.0
      %1309 = vmatprep.subr.mxu0 0.0
      %1310 = vmatpush2.msra.mxu0 0.0
      %1311 = vmatprep.subr.mxu0 0.0
      %1312 = vmatpush2.msra.mxu0 0.0
      %1313 = vmatprep.subr.mxu0 0.0
      %1314 = vmatpush2.msra.mxu0 0.0
      %1315 = vmatprep.subr.mxu0 0.0
      %1316 = vmatpush2.msra.mxu0 0.0
      %1317 = vmatprep.subr.mxu0 0.0
      %1318 = vmatpush2.msra.mxu0 0.0
      %1319 = vmatprep.subr.mxu0 0.0
      %1320 = vmatpush2.msra.mxu0 0.0
      %1321 = vmatprep.subr.mxu0 0.0
      %1322 = vmatpush2.msra.mxu0 0.0
      %1323 = vmatprep.subr.mxu0 0.0
      %1324 = vmatpush2.msra.mxu0 0.0
      %1325 = vmatprep.subr.mxu0 0.0
      %1326 = vmatpush2.msra.mxu0 0.0
      %1327 = vmatprep.subr.mxu0 0.0
      %1328 = vmatpush2.msra.mxu0 0.0
      %1329 = vmatprep.subr.mxu0 0.0
      %1330 = vmatpush2.msra.mxu0 0.0
      %1331 = vmatprep.mubr.f32.mxu0 0.0
      %1332 = vmatmul.mubr.f32.gmra.mxu0 %v1265
      %v1333 = vpop.f32.mrf.mxu0
      %v1334 = vadd.f32 %v1252, %v1333
      %v1335 = vpop.f32.mrf.mxu0
      %v1336 = vadd.f32 %v1256, %v1335
      %1337 = vdwg.mxu0
      %1338 = vmatprep.subr.mxu0 0.0
      %1339 = vmatpush1.msra.mxu0 0.0
      %1340 = vmatprep.subr.mxu0 0.0
      %1341 = vmatpush1.msra.mxu0 0.0
      %1342 = vmatprep.subr.mxu0 0.0
      %1343 = vmatpush1.msra.mxu0 0.0
      %1344 = vmatprep.subr.mxu0 0.0
      %1345 = vmatpush1.msra.mxu0 0.0
      %1346 = vmatprep.subr.mxu0 0.0
      %1347 = vmatpush1.msra.mxu0 %v1245
      %1348 = vmatprep.subr.mxu0 0.0
      %1349 = vmatpush1.msra.mxu0 %v1242
      %1350 = vmatprep.subr.mxu0 0.0
      %1351 = vmatpush1.msra.mxu0 %v1239
      %1352 = vmatprep.subr.mxu0 0.0
      %1353 = vmatpush1.msra.mxu0 %v1236
      %1354 = vmatprep.subr.mxu0 0.0
      %1355 = vmatpush1.msra.mxu0 %v1233
      %1356 = vmatprep.subr.mxu0 0.0
      %1357 = vmatpush1.msra.mxu0 %v1230
      %1358 = vmatprep.subr.mxu0 0.0
      %1359 = vmatpush1.msra.mxu0 %v1227
      %1360 = vmatprep.subr.mxu0 0.0
      %1361 = vmatpush1.msra.mxu0 %v1224
      %1362 = vmatprep.subr.mxu0 0.0
      %1363 = vmatpush1.msra.mxu0 %v1221
      %1364 = vmatprep.subr.mxu0 0.0
      %1365 = vmatpush1.msra.mxu0 %v1218
      %1366 = vmatprep.subr.mxu0 0.0
      %1367 = vmatpush1.msra.mxu0 %v1215
      %1368 = vmatprep.subr.mxu0 0.0
      %1369 = vmatpush1.msra.mxu0 %v1212
      %1370 = vmatprep.subr.mxu0 0.0
      %1371 = vmatpush2.msra.mxu0 0.0
      %1372 = vmatprep.subr.mxu0 0.0
      %1373 = vmatpush2.msra.mxu0 0.0
      %1374 = vmatprep.subr.mxu0 0.0
      %1375 = vmatpush2.msra.mxu0 0.0
      %1376 = vmatprep.subr.mxu0 0.0
      %1377 = vmatpush2.msra.mxu0 0.0
      %1378 = vmatprep.subr.mxu0 0.0
      %1379 = vmatpush2.msra.mxu0 0.0
      %1380 = vmatprep.subr.mxu0 0.0
      %1381 = vmatpush2.msra.mxu0 0.0
      %1382 = vmatprep.subr.mxu0 0.0
      %1383 = vmatpush2.msra.mxu0 0.0
      %1384 = vmatprep.subr.mxu0 0.0
      %1385 = vmatpush2.msra.mxu0 0.0
      %1386 = vmatprep.subr.mxu0 0.0
      %1387 = vmatpush2.msra.mxu0 0.0
      %1388 = vmatprep.subr.mxu0 0.0
      %1389 = vmatpush2.msra.mxu0 0.0
      %1390 = vmatprep.subr.mxu0 0.0
      %1391 = vmatpush2.msra.mxu0 0.0
      %1392 = vmatprep.subr.mxu0 0.0
      %1393 = vmatpush2.msra.mxu0 0.0
      %1394 = vmatprep.subr.mxu0 0.0
      %1395 = vmatpush2.msra.mxu0 0.0
      %1396 = vmatprep.subr.mxu0 0.0
      %1397 = vmatpush2.msra.mxu0 0.0
      %1398 = vmatprep.subr.mxu0 0.0
      %1399 = vmatpush2.msra.mxu0 0.0
      %1400 = vmatprep.subr.mxu0 0.0
      %1401 = vmatpush2.msra.mxu0 0.0
      %1402 = vmatprep.mubr.f32.mxu0 0.0
      %1403 = vmatmul.mubr.f32.gmra.mxu0 %v1265
      %v1404 = vpop.f32.mrf.mxu0
      %v1405 = vadd.f32 %v1260, %v1404
      %v1406 = vpop.f32.mrf.mxu0
      %1407 = vdwg.mxu0
      %v1408 = vadd.f32 %v1207, %v1334
      %v1409 = vxor.u32 %v1408, 2147483648
      %v1410 = vmul.f32 %v1409, 1.442695
      %v1411 = vpow.pop %v1410
      %v1412 = vadd.f32 %v1411, 1.0
      %v1413 = vrcp.pop %v1412
      %v1414 = vmul.f32 1.0, %v1413
      %v1415 = vadd.f32 %v1208, %v1336
      %v1416 = vxor.u32 %v1415, 2147483648
      %v1417 = vmul.f32 %v1416, 1.442695
      %v1418 = vpow.pop %v1417
      %v1419 = vadd.f32 %v1418, 1.0
      %v1420 = vrcp.pop %v1419
      %v1421 = vmul.f32 1.0, %v1420
      %1424 = vrot.lane.b32.xlu0 %v1336, 64
      %v1425 = vpop.permute.xlu0 %1424
      %1426 = vrot.lane.b32.xlu0 %v1405, 64
      %v1427 = vpop.permute.xlu0 %1426
      %vm1428 = vcmask 523264
      %v1429 = vsel %vm1428, %v1425, %v1427
      %v1431 = vmul.f32 %v1414, %v1429
      %1433 = vrot.lane.b32.xlu0 %v1431, 64
      %v1434 = vpop.permute.xlu0 %1433
      %v1436 = vadd.f32 %v1208, %v1434
      %v1437 = vadd.f32 %v1209, %v1434
      %v1438 = vtanh.pop %v1436
      %v1439 = vtanh.pop %v1437
      %v1440 = vsub.f32 1.0, %v1414
      %v1441 = vsub.f32 1.0, %v1421
      %1444 = vrot.lane.b32.xlu0 %v1438, 32
      %v1445 = vpop.permute.xlu0 %1444
      %1446 = vrot.lane.b32.xlu0 %v1439, 32
      %v1447 = vpop.permute.xlu0 %1446
      %vm1448 = vcmask 261120
      %v1449 = vsel %vm1448, %v1445, %v1447
      %v1452 = vmul.f32 %v1440, %v1445
      %v1453 = vmul.f32 %v1441, %v1449
      %1454 = vrot.lane.b32.xlu0 %v828, 96
      %v1455 = vpop.permute.xlu0 %1454
      %v1457 = vmul.f32 %v1414, %v1455
      %v1458 = vmul.f32 %v1421, %v1455
      %v1459 = vadd.f32 %v1452, %v1457
      %v1460 = vadd.f32 %v1453, %v1458
      %v1461 = vld [vmem:[#allocation2] sm:$0xff]
      %v1462 = vld [vmem:[#allocation2 + $0x8] sm:$0xff]
      %v1463 = vld [vmem:[#allocation2 + $0x10] sm:$0xff]
      %v1464 = vld [vmem:[#allocation2 + $0x18] sm:$0xff]
      %v1465 = vld [vmem:[#allocation2 + $0x20] sm:$0xff]
      %v1466 = vld [vmem:[#allocation2 + $0x28] sm:$0xff]
      %v1467 = vld [vmem:[#allocation2 + $0x30] sm:$0xff]
      %v1468 = vld [vmem:[#allocation2 + $0x38] sm:$0xff]
      %v1469 = vstv %s35
      %vm1470 = vcmp.gt.s32.totalorder %v1469, 0
      %vm1471 = vcmp.gt.s32.totalorder %v1469, 1
      %vm1472 = vcmp.gt.s32.totalorder %v1469, 2
      %vm1473 = vcmp.gt.s32.totalorder %v1469, 3
      %vm1474 = vcmp.gt.s32.totalorder %v1469, 4
      %vm1475 = vcmp.gt.s32.totalorder %v1469, 5
      %vm1476 = vcmp.gt.s32.totalorder %v1469, 6
      %vm1477 = vcmp.gt.s32.totalorder %v1469, 7
      %v1478 = vsel %vm1470, 1, 0
      %v1479 = vsel %vm1471, 1, 0
      %v1480 = vsel %vm1472, 1, 0
      %v1481 = vsel %vm1473, 1, 0
      %v1482 = vsel %vm1474, 1, 0
      %v1483 = vsel %vm1475, 1, 0
      %v1484 = vsel %vm1476, 1, 0
      %v1485 = vsel %vm1477, 1, 0
      %vm1486 = vcmp.eq.s32.totalorder %v1478, 1
      %vm1487 = vcmp.eq.s32.totalorder %v1479, 1
      %vm1488 = vcmp.eq.s32.totalorder %v1480, 1
      %vm1489 = vcmp.eq.s32.totalorder %v1481, 1
      %vm1490 = vcmp.eq.s32.totalorder %v1482, 1
      %vm1491 = vcmp.eq.s32.totalorder %v1483, 1
      %vm1492 = vcmp.eq.s32.totalorder %v1484, 1
      %vm1493 = vcmp.eq.s32.totalorder %v1485, 1
      %v1494 = vsel %vm1486, %v1461, -1e+30
      %v1495 = vsel %vm1487, %v1462, -1e+30
      %v1496 = vsel %vm1488, %v1463, -1e+30
      %v1497 = vsel %vm1489, %v1464, -1e+30
      %v1498 = vsel %vm1490, %v1465, -1e+30
      %v1499 = vsel %vm1491, %v1466, -1e+30
      %v1500 = vsel %vm1492, %v1467, -1e+30
      %v1501 = vsel %vm1493, %v1468, -1e+30
      %vm1502 = vcmask 72704
      %v1503 = vsel %vm1502, %v1494, -inf
      %v1504 = vsel %vm1502, %v1495, -inf
      %v1505 = vsel %vm1502, %v1496, -inf
      %v1506 = vsel %vm1502, %v1497, -inf
      %v1507 = vsel %vm1502, %v1498, -inf
      %v1508 = vmax.f32 %v1503, %v1507
      %v1509 = vsel %vm1502, %v1499, -inf
      %v1510 = vmax.f32 %v1504, %v1509
      %v1511 = vsel %vm1502, %v1500, -inf
      %v1512 = vmax.f32 %v1505, %v1511
      %v1513 = vsel %vm1502, %v1501, -inf
      %v1514 = vmax.f32 %v1506, %v1513
      %v1515 = vmax.f32 %v1508, %v1510
      %v1516 = vmax.f32 %v1512, %v1514
      %v1517 = vmax.f32 %v1515, %v1516
      %v1518 = vsub.f32 %v1494, %v1517
      %v1519 = vsub.f32 %v1495, %v1517
      %v1520 = vsub.f32 %v1496, %v1517
      %v1521 = vsub.f32 %v1497, %v1517
      %v1522 = vsub.f32 %v1498, %v1517
      %v1523 = vsub.f32 %v1499, %v1517
      %v1524 = vsub.f32 %v1500, %v1517
      %v1525 = vsub.f32 %v1501, %v1517
      %v1526 = vmul.f32 %v1518, 1.442695
      %v1527 = vpow.pop %v1526
      %v1528 = vmul.f32 %v1519, 1.442695
      %v1529 = vpow.pop %v1528
      %v1530 = vmul.f32 %v1520, 1.442695
      %v1531 = vpow.pop %v1530
      %v1532 = vmul.f32 %v1521, 1.442695
      %v1533 = vpow.pop %v1532
      %v1534 = vmul.f32 %v1522, 1.442695
      %v1535 = vpow.pop %v1534
      %v1536 = vmul.f32 %v1523, 1.442695
      %v1537 = vpow.pop %v1536
      %v1538 = vmul.f32 %v1524, 1.442695
      %v1539 = vpow.pop %v1538
      %v1540 = vmul.f32 %v1525, 1.442695
      %v1541 = vpow.pop %v1540
      %v1542 = vsel %vm1486, %v1527, 0.0
      %v1543 = vsel %vm1487, %v1529, 0.0
      %v1544 = vsel %vm1488, %v1531, 0.0
      %v1545 = vsel %vm1489, %v1533, 0.0
      %v1546 = vsel %vm1490, %v1535, 0.0
      %v1547 = vsel %vm1491, %v1537, 0.0
      %v1548 = vsel %vm1492, %v1539, 0.0
      %v1549 = vsel %vm1493, %v1541, 0.0
      %v1550 = vsel %vm1502, %v1542, 0.0
      %v1551 = vsel %vm1502, %v1543, 0.0
      %v1552 = vadd.f32 %v1550, %v1551
      %v1553 = vsel %vm1502, %v1544, 0.0
      %v1554 = vadd.f32 %v1552, %v1553
      %v1555 = vsel %vm1502, %v1545, 0.0
      %v1556 = vadd.f32 %v1554, %v1555
      %v1557 = vsel %vm1502, %v1546, 0.0
      %v1558 = vadd.f32 %v1556, %v1557
      %v1559 = vsel %vm1502, %v1547, 0.0
      %v1560 = vadd.f32 %v1558, %v1559
      %v1561 = vsel %vm1502, %v1548, 0.0
      %v1562 = vadd.f32 %v1560, %v1561
      %v1563 = vsel %vm1502, %v1549, 0.0
      %v1564 = vadd.f32 %v1562, %v1563
      %v1565 = vmax.f32 %v1564, 1e-30
      %v1566 = vrcp.pop %v1565
      %v1567 = vmul.f32 %v1542, %v1566
      %v1568 = vmul.f32 %v1543, %v1566
      %v1569 = vmul.f32 %v1544, %v1566
      %v1570 = vmul.f32 %v1545, %v1566
      %v1571 = vmul.f32 %v1546, %v1566
      %v1572 = vmul.f32 %v1547, %v1566
      %v1573 = vmul.f32 %v1548, %v1566
      %v1574 = vmul.f32 %v1549, %v1566
      %v1575 = vsel %vm1502, %v1567, 0.0
      %1576 = vadd.xlane.f32.xlu0 %v1575
      %v1577 = vpop.xlane.xlu0 %1576
      %v1578 = vsel %vm1502, %v1568, 0.0
      %1579 = vadd.xlane.f32.xlu0 %v1578
      %v1580 = vpop.xlane.xlu0 %1579
      %v1581 = vsel %vm1502, %v1569, 0.0
      %1582 = vadd.xlane.f32.xlu0 %v1581
      %v1583 = vpop.xlane.xlu0 %1582
      %v1584 = vsel %vm1502, %v1570, 0.0
      %1585 = vadd.xlane.f32.xlu0 %v1584
      %v1586 = vpop.xlane.xlu0 %1585
      %v1587 = vsel %vm1502, %v1571, 0.0
      %1588 = vadd.xlane.f32.xlu0 %v1587
      %v1589 = vpop.xlane.xlu0 %1588
      %v1590 = vsel %vm1502, %v1572, 0.0
      %1591 = vadd.xlane.f32.xlu0 %v1590
      %v1592 = vpop.xlane.xlu0 %1591
      %v1593 = vsel %vm1502, %v1573, 0.0
      %1594 = vadd.xlane.f32.xlu0 %v1593
      %v1595 = vpop.xlane.xlu0 %1594
      %v1596 = vsel %vm1502, %v1574, 0.0
      %1597 = vadd.xlane.f32.xlu0 %v1596
      %v1598 = vpop.xlane.xlu0 %1597
      %v1607 = vlaneseq
      %v1608 = vand.u32 %v1607, 127
      %v1609 = vlaneseq
      %v1610 = vshrl.u32 %v1609, 7
      %v1611 = vsub.s32 %v1608, %v1610
      %v1612 = vrot.slane %v1577, %v1611
      %v1613 = vlaneseq
      %v1614 = vshrl.u32 %v1613, 7
      %v1615 = vsub.s32 %v1608, %v1614
      %v1616 = vrot.slane %v1580, %v1615
      %v1617 = vlaneseq
      %v1618 = vshrl.u32 %v1617, 7
      %v1619 = vsub.s32 %v1608, %v1618
      %v1620 = vrot.slane %v1583, %v1619
      %v1621 = vlaneseq
      %v1622 = vshrl.u32 %v1621, 7
      %v1623 = vsub.s32 %v1608, %v1622
      %v1624 = vrot.slane %v1586, %v1623
      %v1625 = vlaneseq
      %v1626 = vshrl.u32 %v1625, 7
      %v1627 = vsub.s32 %v1608, %v1626
      %v1628 = vrot.slane %v1589, %v1627
      %v1629 = vlaneseq
      %v1630 = vshrl.u32 %v1629, 7
      %v1631 = vsub.s32 %v1608, %v1630
      %v1632 = vrot.slane %v1592, %v1631
      %v1633 = vlaneseq
      %v1634 = vshrl.u32 %v1633, 7
      %v1635 = vsub.s32 %v1608, %v1634
      %v1636 = vrot.slane %v1595, %v1635
      %v1637 = vlaneseq
      %v1638 = vshrl.u32 %v1637, 7
      %v1639 = vsub.s32 %v1608, %v1638
      %v1640 = vrot.slane %v1598, %v1639
      %vm1641 = vcmask 1041409
      %v1642 = vsel %vm1641, %v1616, %v1612
      %vm1643 = vcmask 1042434
      %v1644 = vsel %vm1643, %v1620, %v1642
      %vm1645 = vcmask 1043459
      %v1646 = vsel %vm1645, %v1624, %v1644
      %vm1647 = vcmask 1044484
      %v1648 = vsel %vm1647, %v1628, %v1646
      %vm1649 = vcmask 1045509
      %v1650 = vsel %vm1649, %v1632, %v1648
      %vm1651 = vcmask 1046534
      %v1652 = vsel %vm1651, %v1636, %v1650
      %vm1653 = vcmask 1047559
      %v1654 = vsel %vm1653, %v1640, %v1652
      %1656 = vxpose.xlu0.b32.start [1/16] %v1654, 128
      %1657 = vxpose.xlu0.b32.cont [2/16] 0.0, 128
      %1658 = vxpose.xlu0.b32.cont [3/16] 0.0, 128
      %1659 = vxpose.xlu0.b32.cont [4/16] 0.0, 128
      %1660 = vxpose.xlu0.b32.cont [5/16] 0.0, 128
      %1661 = vxpose.xlu0.b32.cont [6/16] 0.0, 128
      %1662 = vxpose.xlu0.b32.cont [7/16] 0.0, 128
      %1663 = vxpose.xlu0.b32.cont [8/16] 0.0, 128
      %1664 = vxpose.xlu0.b32.cont [9/16] 0.0, 128
      %1665 = vxpose.xlu0.b32.cont [10/16] 0.0, 128
      %1666 = vxpose.xlu0.b32.cont [11/16] 0.0, 128
      %1667 = vxpose.xlu0.b32.cont [12/16] 0.0, 128
      %1668 = vxpose.xlu0.b32.cont [13/16] 0.0, 128
      %1669 = vxpose.xlu0.b32.cont [14/16] 0.0, 128
      %1670 = vxpose.xlu0.b32.cont [15/16] 0.0, 128
      %1671 = vxpose.xlu0.b32.end [16/16] 0.0, 128
      %v1672 = vpop.trf.xlu0
      %v1673 = vpop.trf.xlu0
      %v1674 = vpop.trf.xlu0
      %v1675 = vpop.trf.xlu0
      %v1676 = vpop.trf.xlu0
      %v1677 = vpop.trf.xlu0
      %v1678 = vpop.trf.xlu0
      %v1679 = vpop.trf.xlu0
      %v1680 = vpop.trf.xlu0
      %v1681 = vpop.trf.xlu0
      %v1682 = vpop.trf.xlu0
      %v1683 = vpop.trf.xlu0
      %v1684 = vpop.trf.xlu0
      %v1685 = vpop.trf.xlu0
      %v1686 = vpop.trf.xlu0
      %v1687 = vpop.trf.xlu0
      %vm1688 = vcmask 64512
      %1689 = vst.msk [vmem:[%s699] sm:$0xff] %vm1688, %v1672
      %v1690 = vld [vmem:[%s17] sm:$0xff]
      %v1691 = vld [vmem:[%s17 + $0x8] sm:$0xff]
      %v1692 = vld [vmem:[%s17 + $0x10] sm:$0xff]
      %v1693 = vld [vmem:[%s17 + $0x18] sm:$0x1]
      %v1694 = vld [vmem:[%s17 + $0x20] sm:$0x1]
      %v1695 = vld [vmem:[%s17 + $0x28] sm:$0x1]
      %v1697 = vsel %vm1502, %v1567, 0
      %v1700 = vsel %vm1502, %v1568, 0
      %v1703 = vsel %vm1502, %v1569, 0
      %v1706 = vsel %vm1502, %v1570, 0
      %v1709 = vsel %vm1502, %v1571, 0
      %v1712 = vsel %vm1502, %v1572, 0
      %v1715 = vsel %vm1502, %v1573, 0
      %v1718 = vsel %vm1502, %v1574, 0
      %vm1720 = vcmask 1040384
      %v1722 = vsel %vm1720, %v1693, 0
      %v1725 = vsel %vm1720, %v1694, 0
      %v1728 = vsel %vm1720, %v1695, 0
      %1730 = vmatprep.subr.mxu0 0.0
      %1731 = vmatpush1.msra.mxu0 0.0
      %1732 = vmatprep.subr.mxu0 0.0
      %1733 = vmatpush1.msra.mxu0 0.0
      %1734 = vmatprep.subr.mxu0 0.0
      %1735 = vmatpush1.msra.mxu0 0.0
      %1736 = vmatprep.subr.mxu0 0.0
      %1737 = vmatpush1.msra.mxu0 0.0
      %1738 = vmatprep.subr.mxu0 0.0
      %1739 = vmatpush1.msra.mxu0 0.0
      %1740 = vmatprep.subr.mxu0 0.0
      %1741 = vmatpush1.msra.mxu0 0.0
      %1742 = vmatprep.subr.mxu0 0.0
      %1743 = vmatpush1.msra.mxu0 0.0
      %1744 = vmatprep.subr.mxu0 0.0
      %1745 = vmatpush1.msra.mxu0 0.0
      %1746 = vmatprep.subr.mxu0 0.0
      %1747 = vmatpush1.msra.mxu0 0.0
      %1748 = vmatprep.subr.mxu0 0.0
      %1749 = vmatpush1.msra.mxu0 0.0
      %1750 = vmatprep.subr.mxu0 0.0
      %1751 = vmatpush1.msra.mxu0 0.0
      %1752 = vmatprep.subr.mxu0 0.0
      %1753 = vmatpush1.msra.mxu0 0.0
      %1754 = vmatprep.subr.mxu0 0.0
      %1755 = vmatpush1.msra.mxu0 0.0
      %1756 = vmatprep.subr.mxu0 0.0
      %1757 = vmatpush1.msra.mxu0 0.0
      %1758 = vmatprep.subr.mxu0 %v1725
      %1759 = vmatpush1.msra.mxu0 %v1722
      %1760 = vmatprep.subr.mxu0 %v1691
      %1761 = vmatpush1.msra.mxu0 %v1690
      %1762 = vmatprep.subr.mxu0 0.0
      %1763 = vmatpush2.msra.mxu0 0.0
      %1764 = vmatprep.subr.mxu0 0.0
      %1765 = vmatpush2.msra.mxu0 0.0
      %1766 = vmatprep.subr.mxu0 0.0
      %1767 = vmatpush2.msra.mxu0 0.0
      %1768 = vmatprep.subr.mxu0 0.0
      %1769 = vmatpush2.msra.mxu0 0.0
      %1770 = vmatprep.subr.mxu0 0.0
      %1771 = vmatpush2.msra.mxu0 0.0
      %1772 = vmatprep.subr.mxu0 0.0
      %1773 = vmatpush2.msra.mxu0 0.0
      %1774 = vmatprep.subr.mxu0 0.0
      %1775 = vmatpush2.msra.mxu0 0.0
      %1776 = vmatprep.subr.mxu0 0.0
      %1777 = vmatpush2.msra.mxu0 0.0
      %1778 = vmatprep.subr.mxu0 0.0
      %1779 = vmatpush2.msra.mxu0 0.0
      %1780 = vmatprep.subr.mxu0 0.0
      %1781 = vmatpush2.msra.mxu0 0.0
      %1782 = vmatprep.subr.mxu0 0.0
      %1783 = vmatpush2.msra.mxu0 0.0
      %1784 = vmatprep.subr.mxu0 0.0
      %1785 = vmatpush2.msra.mxu0 0.0
      %1786 = vmatprep.subr.mxu0 0.0
      %1787 = vmatpush2.msra.mxu0 0.0
      %1788 = vmatprep.subr.mxu0 0.0
      %1789 = vmatpush2.msra.mxu0 0.0
      %1790 = vmatprep.subr.mxu0 0.0
      %1791 = vmatpush2.msra.mxu0 0.0
      %1792 = vmatprep.subr.mxu0 0.0
      %1793 = vmatpush2.msra.mxu0 0.0
      %1794 = vmatprep.mubr.f32.mxu0 0.0
      %1795 = vmatmul.mubr.f32.gmra.mxu0 %v1697
      %v1796 = vpop.f32.mrf.mxu0
      %v1797 = vadd.f32 0.0, %v1796
      %v1798 = vpop.f32.mrf.mxu0
      %v1799 = vadd.f32 0.0, %v1798
      %1800 = vmatprep.mubr.f32.mxu0 0.0
      %1801 = vmatmul.mubr.f32.gmra.mxu0 %v1700
      %v1802 = vpop.f32.mrf.mxu0
      %v1803 = vadd.f32 0.0, %v1802
      %v1804 = vpop.f32.mrf.mxu0
      %v1805 = vadd.f32 0.0, %v1804
      %1806 = vmatprep.mubr.f32.mxu0 0.0
      %1807 = vmatmul.mubr.f32.gmra.mxu0 %v1703
      %v1808 = vpop.f32.mrf.mxu0
      %v1809 = vadd.f32 0.0, %v1808
      %v1810 = vpop.f32.mrf.mxu0
      %v1811 = vadd.f32 0.0, %v1810
      %1812 = vmatprep.mubr.f32.mxu0 0.0
      %1813 = vmatmul.mubr.f32.gmra.mxu0 %v1706
      %v1814 = vpop.f32.mrf.mxu0
      %v1815 = vadd.f32 0.0, %v1814
      %v1816 = vpop.f32.mrf.mxu0
      %v1817 = vadd.f32 0.0, %v1816
      %1818 = vmatprep.mubr.f32.mxu0 0.0
      %1819 = vmatmul.mubr.f32.gmra.mxu0 %v1709
      %v1820 = vpop.f32.mrf.mxu0
      %v1821 = vadd.f32 0.0, %v1820
      %v1822 = vpop.f32.mrf.mxu0
      %v1823 = vadd.f32 0.0, %v1822
      %1824 = vmatprep.mubr.f32.mxu0 0.0
      %1825 = vmatmul.mubr.f32.gmra.mxu0 %v1712
      %v1826 = vpop.f32.mrf.mxu0
      %v1827 = vadd.f32 0.0, %v1826
      %v1828 = vpop.f32.mrf.mxu0
      %v1829 = vadd.f32 0.0, %v1828
      %1830 = vmatprep.mubr.f32.mxu0 0.0
      %1831 = vmatmul.mubr.f32.gmra.mxu0 %v1715
      %v1832 = vpop.f32.mrf.mxu0
      %v1833 = vadd.f32 0.0, %v1832
      %v1834 = vpop.f32.mrf.mxu0
      %v1835 = vadd.f32 0.0, %v1834
      %1836 = vmatprep.mubr.f32.mxu0 0.0
      %1837 = vmatmul.mubr.f32.gmra.mxu0 %v1718
      %v1838 = vpop.f32.mrf.mxu0
      %v1839 = vadd.f32 0.0, %v1838
      %v1840 = vpop.f32.mrf.mxu0
      %v1841 = vadd.f32 0.0, %v1840
      %1842 = vdwg.mxu0
      %1843 = vmatprep.subr.mxu0 0.0
      %1844 = vmatpush1.msra.mxu0 0.0
      %1845 = vmatprep.subr.mxu0 0.0
      %1846 = vmatpush1.msra.mxu0 0.0
      %1847 = vmatprep.subr.mxu0 0.0
      %1848 = vmatpush1.msra.mxu0 0.0
      %1849 = vmatprep.subr.mxu0 0.0
      %1850 = vmatpush1.msra.mxu0 0.0
      %1851 = vmatprep.subr.mxu0 0.0
      %1852 = vmatpush1.msra.mxu0 0.0
      %1853 = vmatprep.subr.mxu0 0.0
      %1854 = vmatpush1.msra.mxu0 0.0
      %1855 = vmatprep.subr.mxu0 0.0
      %1856 = vmatpush1.msra.mxu0 0.0
      %1857 = vmatprep.subr.mxu0 0.0
      %1858 = vmatpush1.msra.mxu0 0.0
      %1859 = vmatprep.subr.mxu0 0.0
      %1860 = vmatpush1.msra.mxu0 0.0
      %1861 = vmatprep.subr.mxu0 0.0
      %1862 = vmatpush1.msra.mxu0 0.0
      %1863 = vmatprep.subr.mxu0 0.0
      %1864 = vmatpush1.msra.mxu0 0.0
      %1865 = vmatprep.subr.mxu0 0.0
      %1866 = vmatpush1.msra.mxu0 0.0
      %1867 = vmatprep.subr.mxu0 0.0
      %1868 = vmatpush1.msra.mxu0 0.0
      %1869 = vmatprep.subr.mxu0 0.0
      %1870 = vmatpush1.msra.mxu0 0.0
      %1871 = vmatprep.subr.mxu0 0.0
      %1872 = vmatpush1.msra.mxu0 %v1728
      %1873 = vmatprep.subr.mxu0 0.0
      %1874 = vmatpush1.msra.mxu0 %v1692
      %1875 = vmatprep.subr.mxu0 0.0
      %1876 = vmatpush2.msra.mxu0 0.0
      %1877 = vmatprep.subr.mxu0 0.0
      %1878 = vmatpush2.msra.mxu0 0.0
      %1879 = vmatprep.subr.mxu0 0.0
      %1880 = vmatpush2.msra.mxu0 0.0
      %1881 = vmatprep.subr.mxu0 0.0
      %1882 = vmatpush2.msra.mxu0 0.0
      %1883 = vmatprep.subr.mxu0 0.0
      %1884 = vmatpush2.msra.mxu0 0.0
      %1885 = vmatprep.subr.mxu0 0.0
      %1886 = vmatpush2.msra.mxu0 0.0
      %1887 = vmatprep.subr.mxu0 0.0
      %1888 = vmatpush2.msra.mxu0 0.0
      %1889 = vmatprep.subr.mxu0 0.0
      %1890 = vmatpush2.msra.mxu0 0.0
      %1891 = vmatprep.subr.mxu0 0.0
      %1892 = vmatpush2.msra.mxu0 0.0
      %1893 = vmatprep.subr.mxu0 0.0
      %1894 = vmatpush2.msra.mxu0 0.0
      %1895 = vmatprep.subr.mxu0 0.0
      %1896 = vmatpush2.msra.mxu0 0.0
      %1897 = vmatprep.subr.mxu0 0.0
      %1898 = vmatpush2.msra.mxu0 0.0
      %1899 = vmatprep.subr.mxu0 0.0
      %1900 = vmatpush2.msra.mxu0 0.0
      %1901 = vmatprep.subr.mxu0 0.0
      %1902 = vmatpush2.msra.mxu0 0.0
      %1903 = vmatprep.subr.mxu0 0.0
      %1904 = vmatpush2.msra.mxu0 0.0
      %1905 = vmatprep.subr.mxu0 0.0
      %1906 = vmatpush2.msra.mxu0 0.0
      %1907 = vmatprep.mubr.f32.mxu0 0.0
      %1908 = vmatmul.mubr.f32.gmra.mxu0 %v1697
      %v1909 = vpop.f32.mrf.mxu0
      %v1910 = vadd.f32 0.0, %v1909
      %v1911 = vpop.f32.mrf.mxu0
      %1912 = vmatprep.mubr.f32.mxu0 0.0
      %1913 = vmatmul.mubr.f32.gmra.mxu0 %v1700
      %v1914 = vpop.f32.mrf.mxu0
      %v1915 = vadd.f32 0.0, %v1914
      %v1916 = vpop.f32.mrf.mxu0
      %1917 = vmatprep.mubr.f32.mxu0 0.0
      %1918 = vmatmul.mubr.f32.gmra.mxu0 %v1703
      %v1919 = vpop.f32.mrf.mxu0
      %v1920 = vadd.f32 0.0, %v1919
      %v1921 = vpop.f32.mrf.mxu0
      %1922 = vmatprep.mubr.f32.mxu0 0.0
      %1923 = vmatmul.mubr.f32.gmra.mxu0 %v1706
      %v1924 = vpop.f32.mrf.mxu0
      %v1925 = vadd.f32 0.0, %v1924
      %v1926 = vpop.f32.mrf.mxu0
      %1927 = vmatprep.mubr.f32.mxu0 0.0
      %1928 = vmatmul.mubr.f32.gmra.mxu0 %v1709
      %v1929 = vpop.f32.mrf.mxu0
      %v1930 = vadd.f32 0.0, %v1929
      %v1931 = vpop.f32.mrf.mxu0
      %1932 = vmatprep.mubr.f32.mxu0 0.0
      %1933 = vmatmul.mubr.f32.gmra.mxu0 %v1712
      %v1934 = vpop.f32.mrf.mxu0
      %v1935 = vadd.f32 0.0, %v1934
      %v1936 = vpop.f32.mrf.mxu0
      %1937 = vmatprep.mubr.f32.mxu0 0.0
      %1938 = vmatmul.mubr.f32.gmra.mxu0 %v1715
      %v1939 = vpop.f32.mrf.mxu0
      %v1940 = vadd.f32 0.0, %v1939
      %v1941 = vpop.f32.mrf.mxu0
      %1942 = vmatprep.mubr.f32.mxu0 0.0
      %1943 = vmatmul.mubr.f32.gmra.mxu0 %v1718
      %v1944 = vpop.f32.mrf.mxu0
      %v1945 = vadd.f32 0.0, %v1944
      %v1946 = vpop.f32.mrf.mxu0
      %1947 = vdwg.mxu0
      %v1948 = vld [vmem:[#allocation3] sm:$0xff]
      %v1949 = vld [vmem:[#allocation3 + $0x8] sm:$0xff]
      %v1950 = vld [vmem:[#allocation3 + $0x10] sm:$0xff]
      %v1951 = vld [vmem:[#allocation3 + $0x18] sm:$0xff]
      %v1952 = vld [vmem:[#allocation3 + $0x20] sm:$0xff]
      %v1953 = vld [vmem:[#allocation3 + $0x28] sm:$0xff]
      %v1954 = vld [vmem:[#allocation3 + $0x30] sm:$0xff]
      %v1955 = vld [vmem:[#allocation3 + $0x38] sm:$0xff]
      %v1956 = vld [vmem:[#allocation3 + $0x40] sm:$0xff]
      %v1957 = vld [vmem:[#allocation3 + $0x48] sm:$0xff]
      %v1958 = vld [vmem:[#allocation3 + $0x50] sm:$0xff]
      %v1959 = vld [vmem:[#allocation3 + $0x58] sm:$0xff]
      %v1960 = vld [vmem:[#allocation3 + $0x60] sm:$0xff]
      %v1961 = vld [vmem:[#allocation3 + $0x68] sm:$0xff]
      %v1962 = vld [vmem:[#allocation3 + $0x70] sm:$0xff]
      %v1963 = vld [vmem:[#allocation3 + $0x78] sm:$0xff]
      %v1964 = vld [vmem:[#allocation3 + $0x80] sm:$0xff]
      %v1965 = vld [vmem:[#allocation3 + $0x88] sm:$0xff]
      %v1966 = vld [vmem:[#allocation3 + $0x90] sm:$0xff]
      %v1967 = vld [vmem:[#allocation3 + $0x98] sm:$0xff]
      %v1968 = vld [vmem:[#allocation3 + $0xa0] sm:$0xff]
      %v1969 = vld [vmem:[#allocation3 + $0xa8] sm:$0xff]
      %v1970 = vld [vmem:[#allocation3 + $0xb0] sm:$0xff]
      %v1971 = vld [vmem:[#allocation3 + $0xb8] sm:$0xff]
      %v1972 = vmul.f32 %v1797, %v1948
      %v1973 = vmul.f32 %v1799, %v1949
      %v1974 = vmul.f32 %v1910, %v1950
      %v1975 = vmul.f32 %v1803, %v1951
      %v1976 = vmul.f32 %v1805, %v1952
      %v1977 = vmul.f32 %v1915, %v1953
      %v1978 = vmul.f32 %v1809, %v1954
      %v1979 = vmul.f32 %v1811, %v1955
      %v1980 = vmul.f32 %v1920, %v1956
      %v1981 = vmul.f32 %v1815, %v1957
      %v1982 = vmul.f32 %v1817, %v1958
      %v1983 = vmul.f32 %v1925, %v1959
      %v1984 = vmul.f32 %v1821, %v1960
      %v1985 = vmul.f32 %v1823, %v1961
      %v1986 = vmul.f32 %v1930, %v1962
      %v1987 = vmul.f32 %v1827, %v1963
      %v1988 = vmul.f32 %v1829, %v1964
      %v1989 = vmul.f32 %v1935, %v1965
      %v1990 = vmul.f32 %v1833, %v1966
      %v1991 = vmul.f32 %v1835, %v1967
      %v1992 = vmul.f32 %v1940, %v1968
      %v1993 = vmul.f32 %v1839, %v1969
      %v1994 = vmul.f32 %v1841, %v1970
      %v1995 = vmul.f32 %v1945, %v1971
      %v1996 = vadd.f32 %v1972, %v1975
      %v1997 = vadd.f32 %v1996, %v1978
      %v1998 = vadd.f32 %v1997, %v1981
      %v1999 = vadd.f32 %v1998, %v1984
      %v2000 = vadd.f32 %v1999, %v1987
      %v2001 = vadd.f32 %v2000, %v1990
      %v2002 = vadd.f32 %v2001, %v1993
      %v2003 = vadd.f32 %v1973, %v1976
      %v2004 = vadd.f32 %v2003, %v1979
      %v2005 = vadd.f32 %v2004, %v1982
      %v2006 = vadd.f32 %v2005, %v1985
      %v2007 = vadd.f32 %v2006, %v1988
      %v2008 = vadd.f32 %v2007, %v1991
      %v2009 = vadd.f32 %v2008, %v1994
      %v2010 = vsel %vm1448, %v1974, 0.0
      %v2011 = vsel %vm1448, %v1977, 0.0
      %v2012 = vadd.f32 %v2010, %v2011
      %v2013 = vsel %vm1448, %v1980, 0.0
      %v2014 = vadd.f32 %v2012, %v2013
      %v2015 = vsel %vm1448, %v1983, 0.0
      %v2016 = vadd.f32 %v2014, %v2015
      %v2017 = vsel %vm1448, %v1986, 0.0
      %v2018 = vadd.f32 %v2016, %v2017
      %v2019 = vsel %vm1448, %v1989, 0.0
      %v2020 = vadd.f32 %v2018, %v2019
      %v2021 = vsel %vm1448, %v1992, 0.0
      %v2022 = vadd.f32 %v2020, %v2021
      %v2023 = vsel %vm1448, %v1995, 0.0
      %v2024 = vadd.f32 %v2022, %v2023
      %v2025 = vld [vmem:[%s18] sm:$0xff]
      %v2026 = vld [vmem:[%s18 + $0x8] sm:$0xff]
      %v2027 = vld [vmem:[%s18 + $0x10] sm:$0xff]
      %v2028 = vld [vmem:[%s18 + $0x18] sm:$0xff]
      %v2029 = vld [vmem:[%s18 + $0x20] sm:$0xff]
      %v2030 = vld [vmem:[%s18 + $0x28] sm:$0xff]
      %v2031 = vld [vmem:[%s18 + $0x30] sm:$0xff]
      %v2032 = vld [vmem:[%s18 + $0x38] sm:$0xff]
      %v2033 = vld [vmem:[%s18 + $0x40] sm:$0xff]
      %v2034 = vld [vmem:[%s18 + $0x48] sm:$0xff]
      %v2035 = vld [vmem:[%s18 + $0x50] sm:$0xff]
      %v2036 = vld [vmem:[%s18 + $0x58] sm:$0xff]
      %v2037 = vld [vmem:[%s18 + $0x60] sm:$0xff]
      %v2038 = vld [vmem:[%s18 + $0x68] sm:$0xff]
      %v2039 = vld [vmem:[%s18 + $0x70] sm:$0xff]
      %v2040 = vld [vmem:[%s18 + $0x78] sm:$0xff]
      %v2041 = vld [vmem:[%s18 + $0x80] sm:$0xff]
      %v2042 = vld [vmem:[%s18 + $0x88] sm:$0xff]
      %v2043 = vld [vmem:[%s18 + $0x90] sm:$0xff]
      %v2044 = vld [vmem:[%s18 + $0x98] sm:$0xff]
      %v2045 = vld [vmem:[%s18 + $0xa0] sm:$0xff]
      %v2046 = vld [vmem:[%s18 + $0xa8] sm:$0xff]
      %v2047 = vld [vmem:[%s18 + $0xb0] sm:$0xff]
      %v2048 = vld [vmem:[%s18 + $0xb8] sm:$0xff]
      %v2049 = vld [vmem:[%s18 + $0xc0] sm:$0xff]
      %v2050 = vld [vmem:[%s18 + $0xc8] sm:$0xff]
      %v2051 = vld [vmem:[%s18 + $0xd0] sm:$0xff]
      %v2052 = vld [vmem:[%s18 + $0xd8] sm:$0xff]
      %v2053 = vld [vmem:[%s18 + $0xe0] sm:$0xff]
      %v2054 = vld [vmem:[%s18 + $0xe8] sm:$0xff]
      %v2055 = vld [vmem:[%s18 + $0xf0] sm:$0xff]
      %v2056 = vld [vmem:[%s18 + $0xf8] sm:$0xff]
      %v2057 = vld [vmem:[%s18 + $0x100] sm:$0xff]
      %v2058 = vld [vmem:[%s18 + $0x108] sm:$0xff]
      %v2059 = vld [vmem:[%s18 + $0x110] sm:$0xff]
      %v2060 = vld [vmem:[%s18 + $0x118] sm:$0xff]
      %v2061 = vld [vmem:[%s19] sm:$0x1]
      %v2063 = vlaneseq
      %v2064 = vshrl.u32 %v2063, 7
      %v2065 = vsub.s32 0, %v2064
      %v2066 = vrot.slane %v2061, %v2065
      %v2069 = vsel %vm1448, %v2024, 0
      %2071 = vmatprep.subr.mxu0 0.0
      %2072 = vmatpush1.msra.mxu0 %v2040
      %2073 = vmatprep.subr.mxu0 0.0
      %2074 = vmatpush1.msra.mxu0 %v2039
      %2075 = vmatprep.subr.mxu0 0.0
      %2076 = vmatpush1.msra.mxu0 %v2038
      %2077 = vmatprep.subr.mxu0 0.0
      %2078 = vmatpush1.msra.mxu0 %v2037
      %2079 = vmatprep.subr.mxu0 0.0
      %2080 = vmatpush1.msra.mxu0 %v2036
      %2081 = vmatprep.subr.mxu0 0.0
      %2082 = vmatpush1.msra.mxu0 %v2035
      %2083 = vmatprep.subr.mxu0 0.0
      %2084 = vmatpush1.msra.mxu0 %v2034
      %2085 = vmatprep.subr.mxu0 0.0
      %2086 = vmatpush1.msra.mxu0 %v2033
      %2087 = vmatprep.subr.mxu0 0.0
      %2088 = vmatpush1.msra.mxu0 %v2032
      %2089 = vmatprep.subr.mxu0 0.0
      %2090 = vmatpush1.msra.mxu0 %v2031
      %2091 = vmatprep.subr.mxu0 0.0
      %2092 = vmatpush1.msra.mxu0 %v2030
      %2093 = vmatprep.subr.mxu0 0.0
      %2094 = vmatpush1.msra.mxu0 %v2029
      %2095 = vmatprep.subr.mxu0 0.0
      %2096 = vmatpush1.msra.mxu0 %v2028
      %2097 = vmatprep.subr.mxu0 0.0
      %2098 = vmatpush1.msra.mxu0 %v2027
      %2099 = vmatprep.subr.mxu0 0.0
      %2100 = vmatpush1.msra.mxu0 %v2026
      %2101 = vmatprep.subr.mxu0 0.0
      %2102 = vmatpush1.msra.mxu0 %v2025
      %2103 = vmatprep.subr.mxu0 0.0
      %2104 = vmatpush2.msra.mxu0 %v2056
      %2105 = vmatprep.subr.mxu0 0.0
      %2106 = vmatpush2.msra.mxu0 %v2055
      %2107 = vmatprep.subr.mxu0 0.0
      %2108 = vmatpush2.msra.mxu0 %v2054
      %2109 = vmatprep.subr.mxu0 0.0
      %2110 = vmatpush2.msra.mxu0 %v2053
      %2111 = vmatprep.subr.mxu0 0.0
      %2112 = vmatpush2.msra.mxu0 %v2052
      %2113 = vmatprep.subr.mxu0 0.0
      %2114 = vmatpush2.msra.mxu0 %v2051
      %2115 = vmatprep.subr.mxu0 0.0
      %2116 = vmatpush2.msra.mxu0 %v2050
      %2117 = vmatprep.subr.mxu0 0.0
      %2118 = vmatpush2.msra.mxu0 %v2049
      %2119 = vmatprep.subr.mxu0 0.0
      %2120 = vmatpush2.msra.mxu0 %v2048
      %2121 = vmatprep.subr.mxu0 0.0
      %2122 = vmatpush2.msra.mxu0 %v2047
      %2123 = vmatprep.subr.mxu0 0.0
      %2124 = vmatpush2.msra.mxu0 %v2046
      %2125 = vmatprep.subr.mxu0 0.0
      %2126 = vmatpush2.msra.mxu0 %v2045
      %2127 = vmatprep.subr.mxu0 0.0
      %2128 = vmatpush2.msra.mxu0 %v2044
      %2129 = vmatprep.subr.mxu0 0.0
      %2130 = vmatpush2.msra.mxu0 %v2043
      %2131 = vmatprep.subr.mxu0 0.0
      %2132 = vmatpush2.msra.mxu0 %v2042
      %2133 = vmatprep.subr.mxu0 0.0
      %2134 = vmatpush2.msra.mxu0 %v2041
      %2135 = vmatprep.mubr.f32.mxu0 %v2009
      %2136 = vmatmul.mubr.f32.gmra.mxu0 %v2002
      %v2137 = vpop.f32.mrf.mxu0
      %v2138 = vadd.f32 %v2066, %v2137
      %v2139 = vpop.f32.mrf.mxu0
      %2140 = vdwg.mxu0
      %2141 = vmatprep.subr.mxu0 0.0
      %2142 = vmatpush1.msra.mxu0 0.0
      %2143 = vmatprep.subr.mxu0 0.0
      %2144 = vmatpush1.msra.mxu0 0.0
      %2145 = vmatprep.subr.mxu0 0.0
      %2146 = vmatpush1.msra.mxu0 0.0
      %2147 = vmatprep.subr.mxu0 0.0
      %2148 = vmatpush1.msra.mxu0 0.0
      %2149 = vmatprep.subr.mxu0 0.0
      %2150 = vmatpush1.msra.mxu0 0.0
      %2151 = vmatprep.subr.mxu0 0.0
      %2152 = vmatpush1.msra.mxu0 0.0
      %2153 = vmatprep.subr.mxu0 0.0
      %2154 = vmatpush1.msra.mxu0 0.0
      %2155 = vmatprep.subr.mxu0 0.0
      %2156 = vmatpush1.msra.mxu0 0.0
      %2157 = vmatprep.subr.mxu0 0.0
      %2158 = vmatpush1.msra.mxu0 0.0
      %2159 = vmatprep.subr.mxu0 0.0
      %2160 = vmatpush1.msra.mxu0 0.0
      %2161 = vmatprep.subr.mxu0 0.0
      %2162 = vmatpush1.msra.mxu0 0.0
      %2163 = vmatprep.subr.mxu0 0.0
      %2164 = vmatpush1.msra.mxu0 0.0
      %2165 = vmatprep.subr.mxu0 0.0
      %2166 = vmatpush1.msra.mxu0 %v2060
      %2167 = vmatprep.subr.mxu0 0.0
      %2168 = vmatpush1.msra.mxu0 %v2059
      %2169 = vmatprep.subr.mxu0 0.0
      %2170 = vmatpush1.msra.mxu0 %v2058
      %2171 = vmatprep.subr.mxu0 0.0
      %2172 = vmatpush1.msra.mxu0 %v2057
      %2173 = vmatprep.subr.mxu0 0.0
      %2174 = vmatpush2.msra.mxu0 0.0
      %2175 = vmatprep.subr.mxu0 0.0
      %2176 = vmatpush2.msra.mxu0 0.0
      %2177 = vmatprep.subr.mxu0 0.0
      %2178 = vmatpush2.msra.mxu0 0.0
      %2179 = vmatprep.subr.mxu0 0.0
      %2180 = vmatpush2.msra.mxu0 0.0
      %2181 = vmatprep.subr.mxu0 0.0
      %2182 = vmatpush2.msra.mxu0 0.0
      %2183 = vmatprep.subr.mxu0 0.0
      %2184 = vmatpush2.msra.mxu0 0.0
      %2185 = vmatprep.subr.mxu0 0.0
      %2186 = vmatpush2.msra.mxu0 0.0
      %2187 = vmatprep.subr.mxu0 0.0
      %2188 = vmatpush2.msra.mxu0 0.0
      %2189 = vmatprep.subr.mxu0 0.0
      %2190 = vmatpush2.msra.mxu0 0.0
      %2191 = vmatprep.subr.mxu0 0.0
      %2192 = vmatpush2.msra.mxu0 0.0
      %2193 = vmatprep.subr.mxu0 0.0
      %2194 = vmatpush2.msra.mxu0 0.0
      %2195 = vmatprep.subr.mxu0 0.0
      %2196 = vmatpush2.msra.mxu0 0.0
      %2197 = vmatprep.subr.mxu0 0.0
      %2198 = vmatpush2.msra.mxu0 0.0
      %2199 = vmatprep.subr.mxu0 0.0
      %2200 = vmatpush2.msra.mxu0 0.0
      %2201 = vmatprep.subr.mxu0 0.0
      %2202 = vmatpush2.msra.mxu0 0.0
      %2203 = vmatprep.subr.mxu0 0.0
      %2204 = vmatpush2.msra.mxu0 0.0
      %2205 = vmatprep.mubr.f32.mxu0 0.0
      %2206 = vmatmul.mubr.f32.gmra.mxu0 %v2069
      %v2207 = vpop.f32.mrf.mxu0
      %v2208 = vadd.f32 %v2138, %v2207
      %v2209 = vpop.f32.mrf.mxu0
      %2210 = vdwg.mxu0
      %v2211 = vlaneseq
      %v2212 = vshrl.u32 %v2211, 7
      %vm2213 = vcmp.lt.s32.totalorder %v2212, 2
      %v2214 = vsel %vm2213, 1, 0
      %vm2215 = vcmp.eq.s32.totalorder %v2214, 1
      %v2216 = vsel %vm2215, %v2208, -1e+30
      %v2217 = vsel %vm1502, %v2216, -inf
      %v2218 = vrot.slane %v2217, 4
      %v2219 = vmax.f32 %v2217, %v2218
      %v2220 = vrot.slane %v2219, 2
      %v2221 = vmax.f32 %v2219, %v2220
      %v2222 = vrot.slane %v2221, 1
      %v2223 = vmax.f32 %v2221, %v2222
      %v2224 = vsub.f32 %v2216, %v2223
      %v2225 = vmul.f32 %v2224, 1.442695
      %v2226 = vpow.pop %v2225
      %v2227 = vsel %vm1502, %v2226, 0.0
      %v2228 = vrot.slane %v2227, 4
      %v2229 = vadd.f32 %v2227, %v2228
      %v2230 = vrot.slane %v2229, 2
      %v2231 = vadd.f32 %v2229, %v2230
      %v2232 = vrot.slane %v2231, 1
      %v2233 = vadd.f32 %v2231, %v2232
      %v2234 = vrcp.pop %v2233
      %v2235 = vmul.f32 %v2226, %v2234
      %v2237 = vsel %vm1502, %v2235, 0
      %2239 = vmatprep.subr.mxu0 0.0
      %2240 = vmatpush1.msra.mxu0 0.0
      %2241 = vmatprep.subr.mxu0 0.0
      %2242 = vmatpush1.msra.mxu0 0.0
      %2243 = vmatprep.subr.mxu0 0.0
      %2244 = vmatpush1.msra.mxu0 0.0
      %2245 = vmatprep.subr.mxu0 0.0
      %2246 = vmatpush1.msra.mxu0 0.0
      %2247 = vmatprep.subr.mxu0 0.0
      %2248 = vmatpush1.msra.mxu0 0.0
      %2249 = vmatprep.subr.mxu0 0.0
      %2250 = vmatpush1.msra.mxu0 0.0
      %2251 = vmatprep.subr.mxu0 0.0
      %2252 = vmatpush1.msra.mxu0 0.0
      %2253 = vmatprep.subr.mxu0 0.0
      %2254 = vmatpush1.msra.mxu0 0.0
      %2255 = vmatprep.subr.mxu0 0.0
      %2256 = vmatpush1.msra.mxu0 0.0
      %2257 = vmatprep.subr.mxu0 0.0
      %2258 = vmatpush1.msra.mxu0 0.0
      %2259 = vmatprep.subr.mxu0 0.0
      %2260 = vmatpush1.msra.mxu0 0.0
      %2261 = vmatprep.subr.mxu0 0.0
      %2262 = vmatpush1.msra.mxu0 0.0
      %2263 = vmatprep.subr.mxu0 0.0
      %2264 = vmatpush1.msra.mxu0 0.0
      %2265 = vmatprep.subr.mxu0 0.0
      %2266 = vmatpush1.msra.mxu0 0.0
      %2267 = vmatprep.subr.mxu0 %v1725
      %2268 = vmatpush1.msra.mxu0 %v1722
      %2269 = vmatprep.subr.mxu0 %v1691
      %2270 = vmatpush1.msra.mxu0 %v1690
      %2271 = vmatprep.subr.mxu0 0.0
      %2272 = vmatpush2.msra.mxu0 0.0
      %2273 = vmatprep.subr.mxu0 0.0
      %2274 = vmatpush2.msra.mxu0 0.0
      %2275 = vmatprep.subr.mxu0 0.0
      %2276 = vmatpush2.msra.mxu0 0.0
      %2277 = vmatprep.subr.mxu0 0.0
      %2278 = vmatpush2.msra.mxu0 0.0
      %2279 = vmatprep.subr.mxu0 0.0
      %2280 = vmatpush2.msra.mxu0 0.0
      %2281 = vmatprep.subr.mxu0 0.0
      %2282 = vmatpush2.msra.mxu0 0.0
      %2283 = vmatprep.subr.mxu0 0.0
      %2284 = vmatpush2.msra.mxu0 0.0
      %2285 = vmatprep.subr.mxu0 0.0
      %2286 = vmatpush2.msra.mxu0 0.0
      %2287 = vmatprep.subr.mxu0 0.0
      %2288 = vmatpush2.msra.mxu0 0.0
      %2289 = vmatprep.subr.mxu0 0.0
      %2290 = vmatpush2.msra.mxu0 0.0
      %2291 = vmatprep.subr.mxu0 0.0
      %2292 = vmatpush2.msra.mxu0 0.0
      %2293 = vmatprep.subr.mxu0 0.0
      %2294 = vmatpush2.msra.mxu0 0.0
      %2295 = vmatprep.subr.mxu0 0.0
      %2296 = vmatpush2.msra.mxu0 0.0
      %2297 = vmatprep.subr.mxu0 0.0
      %2298 = vmatpush2.msra.mxu0 0.0
      %2299 = vmatprep.subr.mxu0 0.0
      %2300 = vmatpush2.msra.mxu0 0.0
      %2301 = vmatprep.subr.mxu0 0.0
      %2302 = vmatpush2.msra.mxu0 0.0
      %2303 = vmatprep.mubr.f32.mxu0 0.0
      %2304 = vmatmul.mubr.f32.gmra.mxu0 %v2237
      %v2305 = vpop.f32.mrf.mxu0
      %v2306 = vadd.f32 1.0, %v2305
      %v2307 = vpop.f32.mrf.mxu0
      %v2308 = vadd.f32 1.0, %v2307
      %2309 = vdwg.mxu0
      %2310 = vmatprep.subr.mxu0 0.0
      %2311 = vmatpush1.msra.mxu0 0.0
      %2312 = vmatprep.subr.mxu0 0.0
      %2313 = vmatpush1.msra.mxu0 0.0
      %2314 = vmatprep.subr.mxu0 0.0
      %2315 = vmatpush1.msra.mxu0 0.0
      %2316 = vmatprep.subr.mxu0 0.0
      %2317 = vmatpush1.msra.mxu0 0.0
      %2318 = vmatprep.subr.mxu0 0.0
      %2319 = vmatpush1.msra.mxu0 0.0
      %2320 = vmatprep.subr.mxu0 0.0
      %2321 = vmatpush1.msra.mxu0 0.0
      %2322 = vmatprep.subr.mxu0 0.0
      %2323 = vmatpush1.msra.mxu0 0.0
      %2324 = vmatprep.subr.mxu0 0.0
      %2325 = vmatpush1.msra.mxu0 0.0
      %2326 = vmatprep.subr.mxu0 0.0
      %2327 = vmatpush1.msra.mxu0 0.0
      %2328 = vmatprep.subr.mxu0 0.0
      %2329 = vmatpush1.msra.mxu0 0.0
      %2330 = vmatprep.subr.mxu0 0.0
      %2331 = vmatpush1.msra.mxu0 0.0
      %2332 = vmatprep.subr.mxu0 0.0
      %2333 = vmatpush1.msra.mxu0 0.0
      %2334 = vmatprep.subr.mxu0 0.0
      %2335 = vmatpush1.msra.mxu0 0.0
      %2336 = vmatprep.subr.mxu0 0.0
      %2337 = vmatpush1.msra.mxu0 0.0
      %2338 = vmatprep.subr.mxu0 0.0
      %2339 = vmatpush1.msra.mxu0 %v1728
      %2340 = vmatprep.subr.mxu0 0.0
      %2341 = vmatpush1.msra.mxu0 %v1692
      %2342 = vmatprep.subr.mxu0 0.0
      %2343 = vmatpush2.msra.mxu0 0.0
      %2344 = vmatprep.subr.mxu0 0.0
      %2345 = vmatpush2.msra.mxu0 0.0
      %2346 = vmatprep.subr.mxu0 0.0
      %2347 = vmatpush2.msra.mxu0 0.0
      %2348 = vmatprep.subr.mxu0 0.0
      %2349 = vmatpush2.msra.mxu0 0.0
      %2350 = vmatprep.subr.mxu0 0.0
      %2351 = vmatpush2.msra.mxu0 0.0
      %2352 = vmatprep.subr.mxu0 0.0
      %2353 = vmatpush2.msra.mxu0 0.0
      %2354 = vmatprep.subr.mxu0 0.0
      %2355 = vmatpush2.msra.mxu0 0.0
      %2356 = vmatprep.subr.mxu0 0.0
      %2357 = vmatpush2.msra.mxu0 0.0
      %2358 = vmatprep.subr.mxu0 0.0
      %2359 = vmatpush2.msra.mxu0 0.0
      %2360 = vmatprep.subr.mxu0 0.0
      %2361 = vmatpush2.msra.mxu0 0.0
      %2362 = vmatprep.subr.mxu0 0.0
      %2363 = vmatpush2.msra.mxu0 0.0
      %2364 = vmatprep.subr.mxu0 0.0
      %2365 = vmatpush2.msra.mxu0 0.0
      %2366 = vmatprep.subr.mxu0 0.0
      %2367 = vmatpush2.msra.mxu0 0.0
      %2368 = vmatprep.subr.mxu0 0.0
      %2369 = vmatpush2.msra.mxu0 0.0
      %2370 = vmatprep.subr.mxu0 0.0
      %2371 = vmatpush2.msra.mxu0 0.0
      %2372 = vmatprep.subr.mxu0 0.0
      %2373 = vmatpush2.msra.mxu0 0.0
      %2374 = vmatprep.mubr.f32.mxu0 0.0
      %2375 = vmatmul.mubr.f32.gmra.mxu0 %v2237
      %v2376 = vpop.f32.mrf.mxu0
      %v2377 = vadd.f32 1.0, %v2376
      %v2378 = vpop.f32.mrf.mxu0
      %2379 = vdwg.mxu0
      %v2380 = vmul.f32 %v2002, %v2306
      %v2381 = vmul.f32 %v2009, %v2308
      %v2382 = vmul.f32 %v2024, %v2377
      %v2383 = vld [vmem:[%s20] sm:$0xff]
      %v2384 = vld [vmem:[%s20 + $0x8] sm:$0xff]
      %v2385 = vld [vmem:[%s20 + $0x10] sm:$0xff]
      %v2386 = vld [vmem:[%s20 + $0x18] sm:$0xff]
      %v2387 = vld [vmem:[%s20 + $0x20] sm:$0xff]
      %v2388 = vld [vmem:[%s20 + $0x28] sm:$0xff]
      %v2389 = vld [vmem:[%s20 + $0x30] sm:$0xff]
      %v2390 = vld [vmem:[%s20 + $0x38] sm:$0xff]
      %v2391 = vld [vmem:[%s20 + $0x40] sm:$0xff]
      %v2392 = vld [vmem:[%s20 + $0x48] sm:$0xff]
      %v2393 = vld [vmem:[%s20 + $0x50] sm:$0xff]
      %v2394 = vld [vmem:[%s20 + $0x58] sm:$0xff]
      %v2395 = vld [vmem:[%s20 + $0x60] sm:$0xff]
      %v2396 = vld [vmem:[%s20 + $0x68] sm:$0xff]
      %v2397 = vld [vmem:[%s20 + $0x70] sm:$0xff]
      %v2398 = vld [vmem:[%s20 + $0x78] sm:$0xff]
      %v2399 = vld [vmem:[%s20 + $0x80] sm:$0xff]
      %v2400 = vld [vmem:[%s20 + $0x88] sm:$0xff]
      %v2401 = vld [vmem:[%s20 + $0x90] sm:$0xff]
      %v2402 = vld [vmem:[%s20 + $0x98] sm:$0xff]
      %v2403 = vld [vmem:[%s20 + $0xa0] sm:$0xff]
      %v2404 = vld [vmem:[%s20 + $0xa8] sm:$0xff]
      %v2405 = vld [vmem:[%s20 + $0xb0] sm:$0xff]
      %v2406 = vld [vmem:[%s20 + $0xb8] sm:$0xff]
      %v2407 = vld [vmem:[%s20 + $0xc0] sm:$0xff]
      %v2408 = vld [vmem:[%s20 + $0xc8] sm:$0xff]
      %v2409 = vld [vmem:[%s20 + $0xd0] sm:$0xff]
      %v2410 = vld [vmem:[%s20 + $0xd8] sm:$0xff]
      %v2411 = vld [vmem:[%s20 + $0xe0] sm:$0xff]
      %v2412 = vld [vmem:[%s20 + $0xe8] sm:$0xff]
      %v2413 = vld [vmem:[%s20 + $0xf0] sm:$0xff]
      %v2414 = vld [vmem:[%s20 + $0xf8] sm:$0xff]
      %v2415 = vld [vmem:[%s20 + $0x100] sm:$0xff]
      %v2416 = vld [vmem:[%s20 + $0x108] sm:$0xff]
      %v2417 = vld [vmem:[%s20 + $0x110] sm:$0xff]
      %v2418 = vld [vmem:[%s20 + $0x118] sm:$0xff]
      %v2419 = vld [vmem:[%s21] sm:$0x1]
      %v2421 = vlaneseq
      %v2422 = vshrl.u32 %v2421, 7
      %v2423 = vsub.s32 0, %v2422
      %v2424 = vrot.slane %v2419, %v2423
      %v2427 = vsel %vm1448, %v2382, 0
      %2429 = vmatprep.subr.mxu0 0.0
      %2430 = vmatpush1.msra.mxu0 %v2398
      %2431 = vmatprep.subr.mxu0 0.0
      %2432 = vmatpush1.msra.mxu0 %v2397
      %2433 = vmatprep.subr.mxu0 0.0
      %2434 = vmatpush1.msra.mxu0 %v2396
      %2435 = vmatprep.subr.mxu0 0.0
      %2436 = vmatpush1.msra.mxu0 %v2395
      %2437 = vmatprep.subr.mxu0 0.0
      %2438 = vmatpush1.msra.mxu0 %v2394
      %2439 = vmatprep.subr.mxu0 0.0
      %2440 = vmatpush1.msra.mxu0 %v2393
      %2441 = vmatprep.subr.mxu0 0.0
      %2442 = vmatpush1.msra.mxu0 %v2392
      %2443 = vmatprep.subr.mxu0 0.0
      %2444 = vmatpush1.msra.mxu0 %v2391
      %2445 = vmatprep.subr.mxu0 0.0
      %2446 = vmatpush1.msra.mxu0 %v2390
      %2447 = vmatprep.subr.mxu0 0.0
      %2448 = vmatpush1.msra.mxu0 %v2389
      %2449 = vmatprep.subr.mxu0 0.0
      %2450 = vmatpush1.msra.mxu0 %v2388
      %2451 = vmatprep.subr.mxu0 0.0
      %2452 = vmatpush1.msra.mxu0 %v2387
      %2453 = vmatprep.subr.mxu0 0.0
      %2454 = vmatpush1.msra.mxu0 %v2386
      %2455 = vmatprep.subr.mxu0 0.0
      %2456 = vmatpush1.msra.mxu0 %v2385
      %2457 = vmatprep.subr.mxu0 0.0
      %2458 = vmatpush1.msra.mxu0 %v2384
      %2459 = vmatprep.subr.mxu0 0.0
      %2460 = vmatpush1.msra.mxu0 %v2383
      %2461 = vmatprep.subr.mxu0 0.0
      %2462 = vmatpush2.msra.mxu0 %v2414
      %2463 = vmatprep.subr.mxu0 0.0
      %2464 = vmatpush2.msra.mxu0 %v2413
      %2465 = vmatprep.subr.mxu0 0.0
      %2466 = vmatpush2.msra.mxu0 %v2412
      %2467 = vmatprep.subr.mxu0 0.0
      %2468 = vmatpush2.msra.mxu0 %v2411
      %2469 = vmatprep.subr.mxu0 0.0
      %2470 = vmatpush2.msra.mxu0 %v2410
      %2471 = vmatprep.subr.mxu0 0.0
      %2472 = vmatpush2.msra.mxu0 %v2409
      %2473 = vmatprep.subr.mxu0 0.0
      %2474 = vmatpush2.msra.mxu0 %v2408
      %2475 = vmatprep.subr.mxu0 0.0
      %2476 = vmatpush2.msra.mxu0 %v2407
      %2477 = vmatprep.subr.mxu0 0.0
      %2478 = vmatpush2.msra.mxu0 %v2406
      %2479 = vmatprep.subr.mxu0 0.0
      %2480 = vmatpush2.msra.mxu0 %v2405
      %2481 = vmatprep.subr.mxu0 0.0
      %2482 = vmatpush2.msra.mxu0 %v2404
      %2483 = vmatprep.subr.mxu0 0.0
      %2484 = vmatpush2.msra.mxu0 %v2403
      %2485 = vmatprep.subr.mxu0 0.0
      %2486 = vmatpush2.msra.mxu0 %v2402
      %2487 = vmatprep.subr.mxu0 0.0
      %2488 = vmatpush2.msra.mxu0 %v2401
      %2489 = vmatprep.subr.mxu0 0.0
      %2490 = vmatpush2.msra.mxu0 %v2400
      %2491 = vmatprep.subr.mxu0 0.0
      %2492 = vmatpush2.msra.mxu0 %v2399
      %2493 = vmatprep.mubr.f32.mxu0 %v2381
      %2494 = vmatmul.mubr.f32.gmra.mxu0 %v2380
      %v2495 = vpop.f32.mrf.mxu0
      %v2496 = vadd.f32 %v2424, %v2495
      %v2497 = vpop.f32.mrf.mxu0
      %2498 = vdwg.mxu0
      %2499 = vmatprep.subr.mxu0 0.0
      %2500 = vmatpush1.msra.mxu0 0.0
      %2501 = vmatprep.subr.mxu0 0.0
      %2502 = vmatpush1.msra.mxu0 0.0
      %2503 = vmatprep.subr.mxu0 0.0
      %2504 = vmatpush1.msra.mxu0 0.0
      %2505 = vmatprep.subr.mxu0 0.0
      %2506 = vmatpush1.msra.mxu0 0.0
      %2507 = vmatprep.subr.mxu0 0.0
      %2508 = vmatpush1.msra.mxu0 0.0
      %2509 = vmatprep.subr.mxu0 0.0
      %2510 = vmatpush1.msra.mxu0 0.0
      %2511 = vmatprep.subr.mxu0 0.0
      %2512 = vmatpush1.msra.mxu0 0.0
      %2513 = vmatprep.subr.mxu0 0.0
      %2514 = vmatpush1.msra.mxu0 0.0
      %2515 = vmatprep.subr.mxu0 0.0
      %2516 = vmatpush1.msra.mxu0 0.0
      %2517 = vmatprep.subr.mxu0 0.0
      %2518 = vmatpush1.msra.mxu0 0.0
      %2519 = vmatprep.subr.mxu0 0.0
      %2520 = vmatpush1.msra.mxu0 0.0
      %2521 = vmatprep.subr.mxu0 0.0
      %2522 = vmatpush1.msra.mxu0 0.0
      %2523 = vmatprep.subr.mxu0 0.0
      %2524 = vmatpush1.msra.mxu0 %v2418
      %2525 = vmatprep.subr.mxu0 0.0
      %2526 = vmatpush1.msra.mxu0 %v2417
      %2527 = vmatprep.subr.mxu0 0.0
      %2528 = vmatpush1.msra.mxu0 %v2416
      %2529 = vmatprep.subr.mxu0 0.0
      %2530 = vmatpush1.msra.mxu0 %v2415
      %2531 = vmatprep.subr.mxu0 0.0
      %2532 = vmatpush2.msra.mxu0 0.0
      %2533 = vmatprep.subr.mxu0 0.0
      %2534 = vmatpush2.msra.mxu0 0.0
      %2535 = vmatprep.subr.mxu0 0.0
      %2536 = vmatpush2.msra.mxu0 0.0
      %2537 = vmatprep.subr.mxu0 0.0
      %2538 = vmatpush2.msra.mxu0 0.0
      %2539 = vmatprep.subr.mxu0 0.0
      %2540 = vmatpush2.msra.mxu0 0.0
      %2541 = vmatprep.subr.mxu0 0.0
      %2542 = vmatpush2.msra.mxu0 0.0
      %2543 = vmatprep.subr.mxu0 0.0
      %2544 = vmatpush2.msra.mxu0 0.0
      %2545 = vmatprep.subr.mxu0 0.0
      %2546 = vmatpush2.msra.mxu0 0.0
      %2547 = vmatprep.subr.mxu0 0.0
      %2548 = vmatpush2.msra.mxu0 0.0
      %2549 = vmatprep.subr.mxu0 0.0
      %2550 = vmatpush2.msra.mxu0 0.0
      %2551 = vmatprep.subr.mxu0 0.0
      %2552 = vmatpush2.msra.mxu0 0.0
      %2553 = vmatprep.subr.mxu0 0.0
      %2554 = vmatpush2.msra.mxu0 0.0
      %2555 = vmatprep.subr.mxu0 0.0
      %2556 = vmatpush2.msra.mxu0 0.0
      %2557 = vmatprep.subr.mxu0 0.0
      %2558 = vmatpush2.msra.mxu0 0.0
      %2559 = vmatprep.subr.mxu0 0.0
      %2560 = vmatpush2.msra.mxu0 0.0
      %2561 = vmatprep.subr.mxu0 0.0
      %2562 = vmatpush2.msra.mxu0 0.0
      %2563 = vmatprep.mubr.f32.mxu0 0.0
      %2564 = vmatmul.mubr.f32.gmra.mxu0 %v2427
      %v2565 = vpop.f32.mrf.mxu0
      %v2566 = vadd.f32 %v2496, %v2565
      %v2567 = vpop.f32.mrf.mxu0
      %2568 = vdwg.mxu0
      %p2569 = scmp.gt.s32.totalorder %s35, 0
      %s2570 = scalar_select %p2569, 1, 0
      %s2571 = scvt.s32.f32 %s2570
      %v2572 = vstv %s2571
      %v2573 = vmul.f32 %v2566, %v2572
      %v2574 = vld [vmem:[%s8] sm:$0xff]
      %v2575 = vld [vmem:[%s8 + $0x8] sm:$0xff]
      %v2576 = vld [vmem:[%s8 + $0x10] sm:$0xff]
      %v2577 = vld [vmem:[%s8 + $0x18] sm:$0xff]
      %v2578 = vld [vmem:[%s8 + $0x20] sm:$0xff]
      %v2579 = vld [vmem:[%s8 + $0x28] sm:$0xff]
      %v2580 = vld [vmem:[%s8 + $0x30] sm:$0xff]
      %v2581 = vld [vmem:[%s8 + $0x38] sm:$0xff]
      %v2582 = vld [vmem:[%s8 + $0x40] sm:$0xff]
      %v2583 = vld [vmem:[%s8 + $0x48] sm:$0xff]
      %v2584 = vld [vmem:[%s8 + $0x50] sm:$0xff]
      %v2585 = vld [vmem:[%s8 + $0x58] sm:$0xff]
      %v2586 = vld [vmem:[%s8 + $0x60] sm:$0xff]
      %v2587 = vld [vmem:[%s8 + $0x68] sm:$0xff]
      %v2588 = vld [vmem:[%s8 + $0x70] sm:$0xff]
      %v2589 = vld [vmem:[%s8 + $0x78] sm:$0xff]
      %v2590 = vld [vmem:[%s8 + $0x80] sm:$0xff]
      %v2591 = vld [vmem:[%s8 + $0x88] sm:$0xff]
      %v2592 = vld [vmem:[%s8 + $0x90] sm:$0xff]
      %v2593 = vld [vmem:[%s8 + $0x98] sm:$0xff]
      %v2594 = vld [vmem:[%s8 + $0xa0] sm:$0xff]
      %v2595 = vld [vmem:[%s8 + $0xa8] sm:$0xff]
      %v2596 = vld [vmem:[%s8 + $0xb0] sm:$0xff]
      %v2597 = vld [vmem:[%s8 + $0xb8] sm:$0xff]
      %v2598 = vld [vmem:[%s8 + $0xc0] sm:$0xff]
      %v2599 = vld [vmem:[%s8 + $0xc8] sm:$0xff]
      %v2600 = vld [vmem:[%s8 + $0xd0] sm:$0xff]
      %v2601 = vld [vmem:[%s8 + $0xd8] sm:$0xff]
      %v2602 = vld [vmem:[%s8 + $0xe0] sm:$0xff]
      %v2603 = vld [vmem:[%s8 + $0xe8] sm:$0xff]
      %v2604 = vld [vmem:[%s8 + $0xf0] sm:$0xff]
      %v2605 = vld [vmem:[%s8 + $0xf8] sm:$0xff]
      %v2606 = vld [vmem:[%s8 + $0x100] sm:$0xff]
      %v2607 = vld [vmem:[%s8 + $0x108] sm:$0xff]
      %v2608 = vld [vmem:[%s8 + $0x110] sm:$0xff]
      %v2609 = vld [vmem:[%s8 + $0x118] sm:$0xff]
      %v2610 = vld [vmem:[%s9] sm:$0xff]
      %v2611 = vld [vmem:[%s9 + $0x8] sm:$0xff]
      %v2612 = vld [vmem:[%s9 + $0x10] sm:$0xff]
      %v2613 = vld [vmem:[%s9 + $0x18] sm:$0xff]
      %v2614 = vld [vmem:[%s9 + $0x20] sm:$0xff]
      %v2615 = vld [vmem:[%s9 + $0x28] sm:$0xff]
      %v2616 = vld [vmem:[%s9 + $0x30] sm:$0xff]
      %v2617 = vld [vmem:[%s9 + $0x38] sm:$0xff]
      %v2618 = vld [vmem:[%s9 + $0x40] sm:$0xff]
      %v2619 = vld [vmem:[%s9 + $0x48] sm:$0xff]
      %v2620 = vld [vmem:[%s9 + $0x50] sm:$0xff]
      %v2621 = vld [vmem:[%s9 + $0x58] sm:$0xff]
      %v2622 = vld [vmem:[%s9 + $0x60] sm:$0xff]
      %v2623 = vld [vmem:[%s9 + $0x68] sm:$0xff]
      %v2624 = vld [vmem:[%s9 + $0x70] sm:$0xff]
      %v2625 = vld [vmem:[%s9 + $0x78] sm:$0xff]
      %v2626 = vld [vmem:[%s9 + $0x80] sm:$0xff]
      %v2627 = vld [vmem:[%s9 + $0x88] sm:$0xff]
      %v2628 = vld [vmem:[%s9 + $0x90] sm:$0xff]
      %v2629 = vld [vmem:[%s9 + $0x98] sm:$0xff]
      %v2630 = vld [vmem:[%s9 + $0xa0] sm:$0xff]
      %v2631 = vld [vmem:[%s9 + $0xa8] sm:$0xff]
      %v2632 = vld [vmem:[%s9 + $0xb0] sm:$0xff]
      %v2633 = vld [vmem:[%s9 + $0xb8] sm:$0xff]
      %v2634 = vld [vmem:[%s9 + $0xc0] sm:$0xff]
      %v2635 = vld [vmem:[%s9 + $0xc8] sm:$0xff]
      %v2636 = vld [vmem:[%s9 + $0xd0] sm:$0xff]
      %v2637 = vld [vmem:[%s9 + $0xd8] sm:$0xff]
      %v2638 = vld [vmem:[%s9 + $0xe0] sm:$0xff]
      %v2639 = vld [vmem:[%s9 + $0xe8] sm:$0xff]
      %v2640 = vld [vmem:[%s9 + $0xf0] sm:$0xff]
      %v2641 = vld [vmem:[%s9 + $0xf8] sm:$0xff]
      %v2642 = vld [vmem:[%s9 + $0x100] sm:$0xff]
      %v2643 = vld [vmem:[%s9 + $0x108] sm:$0xff]
      %v2644 = vld [vmem:[%s9 + $0x110] sm:$0xff]
      %v2645 = vld [vmem:[%s9 + $0x118] sm:$0xff]
      %v2647 = vsel %vm901, %v2573, 0
      %2649 = vmatprep.subr.mxu0 0.0
      %2650 = vmatpush1.msra.mxu0 0.0
      %2651 = vmatprep.subr.mxu0 0.0
      %2652 = vmatpush1.msra.mxu0 0.0
      %2653 = vmatprep.subr.mxu0 0.0
      %2654 = vmatpush1.msra.mxu0 0.0
      %2655 = vmatprep.subr.mxu0 0.0
      %2656 = vmatpush1.msra.mxu0 0.0
      %2657 = vmatprep.subr.mxu0 %v2644
      %2658 = vmatpush1.msra.mxu0 %v2643
      %2659 = vmatprep.subr.mxu0 %v2641
      %2660 = vmatpush1.msra.mxu0 %v2640
      %2661 = vmatprep.subr.mxu0 %v2638
      %2662 = vmatpush1.msra.mxu0 %v2637
      %2663 = vmatprep.subr.mxu0 %v2635
      %2664 = vmatpush1.msra.mxu0 %v2634
      %2665 = vmatprep.subr.mxu0 %v2632
      %2666 = vmatpush1.msra.mxu0 %v2631
      %2667 = vmatprep.subr.mxu0 %v2629
      %2668 = vmatpush1.msra.mxu0 %v2628
      %2669 = vmatprep.subr.mxu0 %v2626
      %2670 = vmatpush1.msra.mxu0 %v2625
      %2671 = vmatprep.subr.mxu0 %v2623
      %2672 = vmatpush1.msra.mxu0 %v2622
      %2673 = vmatprep.subr.mxu0 %v2620
      %2674 = vmatpush1.msra.mxu0 %v2619
      %2675 = vmatprep.subr.mxu0 %v2617
      %2676 = vmatpush1.msra.mxu0 %v2616
      %2677 = vmatprep.subr.mxu0 %v2614
      %2678 = vmatpush1.msra.mxu0 %v2613
      %2679 = vmatprep.subr.mxu0 %v2611
      %2680 = vmatpush1.msra.mxu0 %v2610
      %2681 = vmatprep.subr.mxu0 0.0
      %2682 = vmatpush2.msra.mxu0 0.0
      %2683 = vmatprep.subr.mxu0 0.0
      %2684 = vmatpush2.msra.mxu0 0.0
      %2685 = vmatprep.subr.mxu0 0.0
      %2686 = vmatpush2.msra.mxu0 0.0
      %2687 = vmatprep.subr.mxu0 0.0
      %2688 = vmatpush2.msra.mxu0 0.0
      %2689 = vmatprep.subr.mxu0 0.0
      %2690 = vmatpush2.msra.mxu0 0.0
      %2691 = vmatprep.subr.mxu0 0.0
      %2692 = vmatpush2.msra.mxu0 0.0
      %2693 = vmatprep.subr.mxu0 0.0
      %2694 = vmatpush2.msra.mxu0 0.0
      %2695 = vmatprep.subr.mxu0 0.0
      %2696 = vmatpush2.msra.mxu0 0.0
      %2697 = vmatprep.subr.mxu0 0.0
      %2698 = vmatpush2.msra.mxu0 0.0
      %2699 = vmatprep.subr.mxu0 0.0
      %2700 = vmatpush2.msra.mxu0 0.0
      %2701 = vmatprep.subr.mxu0 0.0
      %2702 = vmatpush2.msra.mxu0 0.0
      %2703 = vmatprep.subr.mxu0 0.0
      %2704 = vmatpush2.msra.mxu0 0.0
      %2705 = vmatprep.subr.mxu0 0.0
      %2706 = vmatpush2.msra.mxu0 0.0
      %2707 = vmatprep.subr.mxu0 0.0
      %2708 = vmatpush2.msra.mxu0 0.0
      %2709 = vmatprep.subr.mxu0 0.0
      %2710 = vmatpush2.msra.mxu0 0.0
      %2711 = vmatprep.subr.mxu0 0.0
      %2712 = vmatpush2.msra.mxu0 0.0
      %2713 = vmatprep.mubr.f32.mxu0 0.0
      %2714 = vmatmul.mubr.f32.gmra.mxu0 %v2647
      %v2715 = vpop.f32.mrf.mxu0
      %v2716 = vadd.f32 0.0, %v2715
      %v2717 = vpop.f32.mrf.mxu0
      %v2718 = vadd.f32 0.0, %v2717
      %2719 = vdwg.mxu0
      %2720 = vmatprep.subr.mxu0 0.0
      %2721 = vmatpush1.msra.mxu0 0.0
      %2722 = vmatprep.subr.mxu0 0.0
      %2723 = vmatpush1.msra.mxu0 0.0
      %2724 = vmatprep.subr.mxu0 0.0
      %2725 = vmatpush1.msra.mxu0 0.0
      %2726 = vmatprep.subr.mxu0 0.0
      %2727 = vmatpush1.msra.mxu0 0.0
      %2728 = vmatprep.subr.mxu0 0.0
      %2729 = vmatpush1.msra.mxu0 %v2645
      %2730 = vmatprep.subr.mxu0 0.0
      %2731 = vmatpush1.msra.mxu0 %v2642
      %2732 = vmatprep.subr.mxu0 0.0
      %2733 = vmatpush1.msra.mxu0 %v2639
      %2734 = vmatprep.subr.mxu0 0.0
      %2735 = vmatpush1.msra.mxu0 %v2636
      %2736 = vmatprep.subr.mxu0 0.0
      %2737 = vmatpush1.msra.mxu0 %v2633
      %2738 = vmatprep.subr.mxu0 0.0
      %2739 = vmatpush1.msra.mxu0 %v2630
      %2740 = vmatprep.subr.mxu0 0.0
      %2741 = vmatpush1.msra.mxu0 %v2627
      %2742 = vmatprep.subr.mxu0 0.0
      %2743 = vmatpush1.msra.mxu0 %v2624
      %2744 = vmatprep.subr.mxu0 0.0
      %2745 = vmatpush1.msra.mxu0 %v2621
      %2746 = vmatprep.subr.mxu0 0.0
      %2747 = vmatpush1.msra.mxu0 %v2618
      %2748 = vmatprep.subr.mxu0 0.0
      %2749 = vmatpush1.msra.mxu0 %v2615
      %2750 = vmatprep.subr.mxu0 0.0
      %2751 = vmatpush1.msra.mxu0 %v2612
      %2752 = vmatprep.subr.mxu0 0.0
      %2753 = vmatpush2.msra.mxu0 0.0
      %2754 = vmatprep.subr.mxu0 0.0
      %2755 = vmatpush2.msra.mxu0 0.0
      %2756 = vmatprep.subr.mxu0 0.0
      %2757 = vmatpush2.msra.mxu0 0.0
      %2758 = vmatprep.subr.mxu0 0.0
      %2759 = vmatpush2.msra.mxu0 0.0
      %2760 = vmatprep.subr.mxu0 0.0
      %2761 = vmatpush2.msra.mxu0 0.0
      %2762 = vmatprep.subr.mxu0 0.0
      %2763 = vmatpush2.msra.mxu0 0.0
      %2764 = vmatprep.subr.mxu0 0.0
      %2765 = vmatpush2.msra.mxu0 0.0
      %2766 = vmatprep.subr.mxu0 0.0
      %2767 = vmatpush2.msra.mxu0 0.0
      %2768 = vmatprep.subr.mxu0 0.0
      %2769 = vmatpush2.msra.mxu0 0.0
      %2770 = vmatprep.subr.mxu0 0.0
      %2771 = vmatpush2.msra.mxu0 0.0
      %2772 = vmatprep.subr.mxu0 0.0
      %2773 = vmatpush2.msra.mxu0 0.0
      %2774 = vmatprep.subr.mxu0 0.0
      %2775 = vmatpush2.msra.mxu0 0.0
      %2776 = vmatprep.subr.mxu0 0.0
      %2777 = vmatpush2.msra.mxu0 0.0
      %2778 = vmatprep.subr.mxu0 0.0
      %2779 = vmatpush2.msra.mxu0 0.0
      %2780 = vmatprep.subr.mxu0 0.0
      %2781 = vmatpush2.msra.mxu0 0.0
      %2782 = vmatprep.subr.mxu0 0.0
      %2783 = vmatpush2.msra.mxu0 0.0
      %2784 = vmatprep.mubr.f32.mxu0 0.0
      %2785 = vmatmul.mubr.f32.gmra.mxu0 %v2647
      %v2786 = vpop.f32.mrf.mxu0
      %v2787 = vadd.f32 0.0, %v2786
      %v2788 = vpop.f32.mrf.mxu0
      %2789 = vdwg.mxu0
      %2790 = vmatprep.subr.mxu0 0.0
      %2791 = vmatpush1.msra.mxu0 0.0
      %2792 = vmatprep.subr.mxu0 0.0
      %2793 = vmatpush1.msra.mxu0 0.0
      %2794 = vmatprep.subr.mxu0 0.0
      %2795 = vmatpush1.msra.mxu0 0.0
      %2796 = vmatprep.subr.mxu0 0.0
      %2797 = vmatpush1.msra.mxu0 0.0
      %2798 = vmatprep.subr.mxu0 %v2608
      %2799 = vmatpush1.msra.mxu0 %v2607
      %2800 = vmatprep.subr.mxu0 %v2605
      %2801 = vmatpush1.msra.mxu0 %v2604
      %2802 = vmatprep.subr.mxu0 %v2602
      %2803 = vmatpush1.msra.mxu0 %v2601
      %2804 = vmatprep.subr.mxu0 %v2599
      %2805 = vmatpush1.msra.mxu0 %v2598
      %2806 = vmatprep.subr.mxu0 %v2596
      %2807 = vmatpush1.msra.mxu0 %v2595
      %2808 = vmatprep.subr.mxu0 %v2593
      %2809 = vmatpush1.msra.mxu0 %v2592
      %2810 = vmatprep.subr.mxu0 %v2590
      %2811 = vmatpush1.msra.mxu0 %v2589
      %2812 = vmatprep.subr.mxu0 %v2587
      %2813 = vmatpush1.msra.mxu0 %v2586
      %2814 = vmatprep.subr.mxu0 %v2584
      %2815 = vmatpush1.msra.mxu0 %v2583
      %2816 = vmatprep.subr.mxu0 %v2581
      %2817 = vmatpush1.msra.mxu0 %v2580
      %2818 = vmatprep.subr.mxu0 %v2578
      %2819 = vmatpush1.msra.mxu0 %v2577
      %2820 = vmatprep.subr.mxu0 %v2575
      %2821 = vmatpush1.msra.mxu0 %v2574
      %2822 = vmatprep.subr.mxu0 0.0
      %2823 = vmatpush2.msra.mxu0 0.0
      %2824 = vmatprep.subr.mxu0 0.0
      %2825 = vmatpush2.msra.mxu0 0.0
      %2826 = vmatprep.subr.mxu0 0.0
      %2827 = vmatpush2.msra.mxu0 0.0
      %2828 = vmatprep.subr.mxu0 0.0
      %2829 = vmatpush2.msra.mxu0 0.0
      %2830 = vmatprep.subr.mxu0 0.0
      %2831 = vmatpush2.msra.mxu0 0.0
      %2832 = vmatprep.subr.mxu0 0.0
      %2833 = vmatpush2.msra.mxu0 0.0
      %2834 = vmatprep.subr.mxu0 0.0
      %2835 = vmatpush2.msra.mxu0 0.0
      %2836 = vmatprep.subr.mxu0 0.0
      %2837 = vmatpush2.msra.mxu0 0.0
      %2838 = vmatprep.subr.mxu0 0.0
      %2839 = vmatpush2.msra.mxu0 0.0
      %2840 = vmatprep.subr.mxu0 0.0
      %2841 = vmatpush2.msra.mxu0 0.0
      %2842 = vmatprep.subr.mxu0 0.0
      %2843 = vmatpush2.msra.mxu0 0.0
      %2844 = vmatprep.subr.mxu0 0.0
      %2845 = vmatpush2.msra.mxu0 0.0
      %2846 = vmatprep.subr.mxu0 0.0
      %2847 = vmatpush2.msra.mxu0 0.0
      %2848 = vmatprep.subr.mxu0 0.0
      %2849 = vmatpush2.msra.mxu0 0.0
      %2850 = vmatprep.subr.mxu0 0.0
      %2851 = vmatpush2.msra.mxu0 0.0
      %2852 = vmatprep.subr.mxu0 0.0
      %2853 = vmatpush2.msra.mxu0 0.0
      %2854 = vmatprep.mubr.f32.mxu0 0.0
      %2855 = vmatmul.mubr.f32.gmra.mxu0 %v1047
      %v2856 = vpop.f32.mrf.mxu0
      %v2857 = vadd.f32 %v2716, %v2856
      %v2858 = vpop.f32.mrf.mxu0
      %v2859 = vadd.f32 %v2718, %v2858
      %2860 = vdwg.mxu0
      %2861 = vmatprep.subr.mxu0 0.0
      %2862 = vmatpush1.msra.mxu0 0.0
      %2863 = vmatprep.subr.mxu0 0.0
      %2864 = vmatpush1.msra.mxu0 0.0
      %2865 = vmatprep.subr.mxu0 0.0
      %2866 = vmatpush1.msra.mxu0 0.0
      %2867 = vmatprep.subr.mxu0 0.0
      %2868 = vmatpush1.msra.mxu0 0.0
      %2869 = vmatprep.subr.mxu0 0.0
      %2870 = vmatpush1.msra.mxu0 %v2609
      %2871 = vmatprep.subr.mxu0 0.0
      %2872 = vmatpush1.msra.mxu0 %v2606
      %2873 = vmatprep.subr.mxu0 0.0
      %2874 = vmatpush1.msra.mxu0 %v2603
      %2875 = vmatprep.subr.mxu0 0.0
      %2876 = vmatpush1.msra.mxu0 %v2600
      %2877 = vmatprep.subr.mxu0 0.0
      %2878 = vmatpush1.msra.mxu0 %v2597
      %2879 = vmatprep.subr.mxu0 0.0
      %2880 = vmatpush1.msra.mxu0 %v2594
      %2881 = vmatprep.subr.mxu0 0.0
      %2882 = vmatpush1.msra.mxu0 %v2591
      %2883 = vmatprep.subr.mxu0 0.0
      %2884 = vmatpush1.msra.mxu0 %v2588
      %2885 = vmatprep.subr.mxu0 0.0
      %2886 = vmatpush1.msra.mxu0 %v2585
      %2887 = vmatprep.subr.mxu0 0.0
      %2888 = vmatpush1.msra.mxu0 %v2582
      %2889 = vmatprep.subr.mxu0 0.0
      %2890 = vmatpush1.msra.mxu0 %v2579
      %2891 = vmatprep.subr.mxu0 0.0
      %2892 = vmatpush1.msra.mxu0 %v2576
      %2893 = vmatprep.subr.mxu0 0.0
      %2894 = vmatpush2.msra.mxu0 0.0
      %2895 = vmatprep.subr.mxu0 0.0
      %2896 = vmatpush2.msra.mxu0 0.0
      %2897 = vmatprep.subr.mxu0 0.0
      %2898 = vmatpush2.msra.mxu0 0.0
      %2899 = vmatprep.subr.mxu0 0.0
      %2900 = vmatpush2.msra.mxu0 0.0
      %2901 = vmatprep.subr.mxu0 0.0
      %2902 = vmatpush2.msra.mxu0 0.0
      %2903 = vmatprep.subr.mxu0 0.0
      %2904 = vmatpush2.msra.mxu0 0.0
      %2905 = vmatprep.subr.mxu0 0.0
      %2906 = vmatpush2.msra.mxu0 0.0
      %2907 = vmatprep.subr.mxu0 0.0
      %2908 = vmatpush2.msra.mxu0 0.0
      %2909 = vmatprep.subr.mxu0 0.0
      %2910 = vmatpush2.msra.mxu0 0.0
      %2911 = vmatprep.subr.mxu0 0.0
      %2912 = vmatpush2.msra.mxu0 0.0
      %2913 = vmatprep.subr.mxu0 0.0
      %2914 = vmatpush2.msra.mxu0 0.0
      %2915 = vmatprep.subr.mxu0 0.0
      %2916 = vmatpush2.msra.mxu0 0.0
      %2917 = vmatprep.subr.mxu0 0.0
      %2918 = vmatpush2.msra.mxu0 0.0
      %2919 = vmatprep.subr.mxu0 0.0
      %2920 = vmatpush2.msra.mxu0 0.0
      %2921 = vmatprep.subr.mxu0 0.0
      %2922 = vmatpush2.msra.mxu0 0.0
      %2923 = vmatprep.subr.mxu0 0.0
      %2924 = vmatpush2.msra.mxu0 0.0
      %2925 = vmatprep.mubr.f32.mxu0 0.0
      %2926 = vmatmul.mubr.f32.gmra.mxu0 %v1047
      %v2927 = vpop.f32.mrf.mxu0
      %v2928 = vadd.f32 %v2787, %v2927
      %v2929 = vpop.f32.mrf.mxu0
      %2930 = vdwg.mxu0
      %v2931 = vld [vmem:[%s11] ss:$2 sm:$0x7]
      %v2933 = vlaneseq
      %v2934 = vshrl.u32 %v2933, 7
      %v2935 = vsub.s32 0, %v2934
      %v2936 = vrot.slane %v2931, %v2935
      %v2937 = vlaneseq
      %v2938 = vshrl.u32 %v2937, 7
      %v2939 = vsub.s32 1, %v2938
      %v2940 = vrot.slane %v2931, %v2939
      %v2941 = vlaneseq
      %v2942 = vshrl.u32 %v2941, 7
      %v2943 = vsub.s32 2, %v2942
      %v2944 = vrot.slane %v2931, %v2943
      %v2948 = vadd.f32 %v2857, %v2936
      %v2949 = vadd.f32 %v2859, %v2940
      %v2950 = vadd.f32 %v2928, %v2944
      %v2951 = vld [vmem:[%s3] sm:$0xff]
      %v2952 = vld [vmem:[%s3 + $0x8] sm:$0xff]
      %v2954 = vsel %vm1688, %v2951, 0
      %v2957 = vsel %vm1688, %v2952, 0
      %2959 = vmatprep.subr.mxu0 0.0
      %2960 = vmatpush1.msra.mxu0 0.0
      %2961 = vmatprep.subr.mxu0 0.0
      %2962 = vmatpush1.msra.mxu0 0.0
      %2963 = vmatprep.subr.mxu0 0.0
      %2964 = vmatpush1.msra.mxu0 0.0
      %2965 = vmatprep.subr.mxu0 0.0
      %2966 = vmatpush1.msra.mxu0 0.0
      %2967 = vmatprep.subr.mxu0 0.0
      %2968 = vmatpush1.msra.mxu0 0.0
      %2969 = vmatprep.subr.mxu0 0.0
      %2970 = vmatpush1.msra.mxu0 0.0
      %2971 = vmatprep.subr.mxu0 0.0
      %2972 = vmatpush1.msra.mxu0 0.0
      %2973 = vmatprep.subr.mxu0 0.0
      %2974 = vmatpush1.msra.mxu0 0.0
      %2975 = vmatprep.subr.mxu0 0.0
      %2976 = vmatpush1.msra.mxu0 0.0
      %2977 = vmatprep.subr.mxu0 0.0
      %2978 = vmatpush1.msra.mxu0 0.0
      %2979 = vmatprep.subr.mxu0 0.0
      %2980 = vmatpush1.msra.mxu0 0.0
      %2981 = vmatprep.subr.mxu0 0.0
      %2982 = vmatpush1.msra.mxu0 0.0
      %2983 = vmatprep.subr.mxu0 0.0
      %2984 = vmatpush1.msra.mxu0 0.0
      %2985 = vmatprep.subr.mxu0 0.0
      %2986 = vmatpush1.msra.mxu0 0.0
      %2987 = vmatprep.subr.mxu0 0.0
      %2988 = vmatpush1.msra.mxu0 0.0
      %2989 = vmatprep.subr.mxu0 %v2949
      %2990 = vmatpush1.msra.mxu0 %v2948
      %2991 = vmatprep.subr.mxu0 0.0
      %2992 = vmatpush2.msra.mxu0 0.0
      %2993 = vmatprep.subr.mxu0 0.0
      %2994 = vmatpush2.msra.mxu0 0.0
      %2995 = vmatprep.subr.mxu0 0.0
      %2996 = vmatpush2.msra.mxu0 0.0
      %2997 = vmatprep.subr.mxu0 0.0
      %2998 = vmatpush2.msra.mxu0 0.0
      %2999 = vmatprep.subr.mxu0 0.0
      %3000 = vmatpush2.msra.mxu0 0.0
      %3001 = vmatprep.subr.mxu0 0.0
      %3002 = vmatpush2.msra.mxu0 0.0
      %3003 = vmatprep.subr.mxu0 0.0
      %3004 = vmatpush2.msra.mxu0 0.0
      %3005 = vmatprep.subr.mxu0 0.0
      %3006 = vmatpush2.msra.mxu0 0.0
      %3007 = vmatprep.subr.mxu0 0.0
      %3008 = vmatpush2.msra.mxu0 0.0
      %3009 = vmatprep.subr.mxu0 0.0
      %3010 = vmatpush2.msra.mxu0 0.0
      %3011 = vmatprep.subr.mxu0 0.0
      %3012 = vmatpush2.msra.mxu0 0.0
      %3013 = vmatprep.subr.mxu0 0.0
      %3014 = vmatpush2.msra.mxu0 0.0
      %3015 = vmatprep.subr.mxu0 0.0
      %3016 = vmatpush2.msra.mxu0 0.0
      %3017 = vmatprep.subr.mxu0 0.0
      %3018 = vmatpush2.msra.mxu0 0.0
      %3019 = vmatprep.subr.mxu0 0.0
      %3020 = vmatpush2.msra.mxu0 0.0
      %3021 = vmatprep.subr.mxu0 0.0
      %3022 = vmatpush2.msra.mxu0 0.0
      %3023 = vmatprep.mubr.f32.mxu0 0.0
      %3024 = vmatmul.mubr.f32.gmra.mxu0 %v2954
      %v3025 = vpop.f32.mrf.mxu0
      %v3026 = vadd.f32 0.0, %v3025
      %v3027 = vpop.f32.mrf.mxu0
      %v3028 = vadd.f32 0.0, %v3027
      %3029 = vmatprep.mubr.f32.mxu0 0.0
      %3030 = vmatmul.mubr.f32.gmra.mxu0 %v2957
      %v3031 = vpop.f32.mrf.mxu0
      %v3032 = vadd.f32 0.0, %v3031
      %v3033 = vpop.f32.mrf.mxu0
      %v3034 = vadd.f32 0.0, %v3033
      %3035 = vdwg.mxu0
      %3036 = vmatprep.subr.mxu0 0.0
      %3037 = vmatpush1.msra.mxu0 0.0
      %3038 = vmatprep.subr.mxu0 0.0
      %3039 = vmatpush1.msra.mxu0 0.0
      %3040 = vmatprep.subr.mxu0 0.0
      %3041 = vmatpush1.msra.mxu0 0.0
      %3042 = vmatprep.subr.mxu0 0.0
      %3043 = vmatpush1.msra.mxu0 0.0
      %3044 = vmatprep.subr.mxu0 0.0
      %3045 = vmatpush1.msra.mxu0 0.0
      %3046 = vmatprep.subr.mxu0 0.0
      %3047 = vmatpush1.msra.mxu0 0.0
      %3048 = vmatprep.subr.mxu0 0.0
      %3049 = vmatpush1.msra.mxu0 0.0
      %3050 = vmatprep.subr.mxu0 0.0
      %3051 = vmatpush1.msra.mxu0 0.0
      %3052 = vmatprep.subr.mxu0 0.0
      %3053 = vmatpush1.msra.mxu0 0.0
      %3054 = vmatprep.subr.mxu0 0.0
      %3055 = vmatpush1.msra.mxu0 0.0
      %3056 = vmatprep.subr.mxu0 0.0
      %3057 = vmatpush1.msra.mxu0 0.0
      %3058 = vmatprep.subr.mxu0 0.0
      %3059 = vmatpush1.msra.mxu0 0.0
      %3060 = vmatprep.subr.mxu0 0.0
      %3061 = vmatpush1.msra.mxu0 0.0
      %3062 = vmatprep.subr.mxu0 0.0
      %3063 = vmatpush1.msra.mxu0 0.0
      %3064 = vmatprep.subr.mxu0 0.0
      %3065 = vmatpush1.msra.mxu0 0.0
      %3066 = vmatprep.subr.mxu0 0.0
      %3067 = vmatpush1.msra.mxu0 %v2950
      %3068 = vmatprep.subr.mxu0 0.0
      %3069 = vmatpush2.msra.mxu0 0.0
      %3070 = vmatprep.subr.mxu0 0.0
      %3071 = vmatpush2.msra.mxu0 0.0
      %3072 = vmatprep.subr.mxu0 0.0
      %3073 = vmatpush2.msra.mxu0 0.0
      %3074 = vmatprep.subr.mxu0 0.0
      %3075 = vmatpush2.msra.mxu0 0.0
      %3076 = vmatprep.subr.mxu0 0.0
      %3077 = vmatpush2.msra.mxu0 0.0
      %3078 = vmatprep.subr.mxu0 0.0
      %3079 = vmatpush2.msra.mxu0 0.0
      %3080 = vmatprep.subr.mxu0 0.0
      %3081 = vmatpush2.msra.mxu0 0.0
      %3082 = vmatprep.subr.mxu0 0.0
      %3083 = vmatpush2.msra.mxu0 0.0
      %3084 = vmatprep.subr.mxu0 0.0
      %3085 = vmatpush2.msra.mxu0 0.0
      %3086 = vmatprep.subr.mxu0 0.0
      %3087 = vmatpush2.msra.mxu0 0.0
      %3088 = vmatprep.subr.mxu0 0.0
      %3089 = vmatpush2.msra.mxu0 0.0
      %3090 = vmatprep.subr.mxu0 0.0
      %3091 = vmatpush2.msra.mxu0 0.0
      %3092 = vmatprep.subr.mxu0 0.0
      %3093 = vmatpush2.msra.mxu0 0.0
      %3094 = vmatprep.subr.mxu0 0.0
      %3095 = vmatpush2.msra.mxu0 0.0
      %3096 = vmatprep.subr.mxu0 0.0
      %3097 = vmatpush2.msra.mxu0 0.0
      %3098 = vmatprep.subr.mxu0 0.0
      %3099 = vmatpush2.msra.mxu0 0.0
      %3100 = vmatprep.mubr.f32.mxu0 0.0
      %3101 = vmatmul.mubr.f32.gmra.mxu0 %v2954
      %v3102 = vpop.f32.mrf.mxu0
      %v3103 = vadd.f32 0.0, %v3102
      %v3104 = vpop.f32.mrf.mxu0
      %3105 = vmatprep.mubr.f32.mxu0 0.0
      %3106 = vmatmul.mubr.f32.gmra.mxu0 %v2957
      %v3107 = vpop.f32.mrf.mxu0
      %v3108 = vadd.f32 0.0, %v3107
      %v3109 = vpop.f32.mrf.mxu0
      %3110 = vdwg.mxu0
      %v3111 = vld [vmem:[%s10] sm:$0xff]
      %v3112 = vld [vmem:[%s10 + $0x8] sm:$0xff]
      %v3113 = vld [vmem:[%s10 + $0x10] sm:$0xff]
      %v3114 = vld [vmem:[%s10 + $0x18] sm:$0xff]
      %v3115 = vld [vmem:[%s10 + $0x20] sm:$0xff]
      %v3116 = vld [vmem:[%s10 + $0x28] sm:$0xff]
      %v3117 = vld [vmem:[%s10 + $0x30] sm:$0xff]
      %v3118 = vld [vmem:[%s10 + $0x38] sm:$0xff]
      %v3119 = vld [vmem:[%s10 + $0x40] sm:$0xff]
      %v3120 = vld [vmem:[%s10 + $0x48] sm:$0xff]
      %v3121 = vld [vmem:[%s10 + $0x50] sm:$0xff]
      %v3122 = vld [vmem:[%s10 + $0x58] sm:$0xff]
      %v3123 = vld [vmem:[%s10 + $0x60] sm:$0xff]
      %v3124 = vld [vmem:[%s10 + $0x68] sm:$0xff]
      %v3125 = vld [vmem:[%s10 + $0x70] sm:$0xff]
      %v3126 = vld [vmem:[%s10 + $0x78] sm:$0xff]
      %v3127 = vld [vmem:[%s10 + $0x80] sm:$0xff]
      %v3128 = vld [vmem:[%s10 + $0x88] sm:$0xff]
      %v3129 = vld [vmem:[%s10 + $0x90] sm:$0xff]
      %v3130 = vld [vmem:[%s10 + $0x98] sm:$0xff]
      %v3131 = vld [vmem:[%s10 + $0xa0] sm:$0xff]
      %v3132 = vld [vmem:[%s10 + $0xa8] sm:$0xff]
      %v3133 = vld [vmem:[%s10 + $0xb0] sm:$0xff]
      %v3134 = vld [vmem:[%s10 + $0xb8] sm:$0xff]
      %v3135 = vld [vmem:[%s10 + $0xc0] sm:$0xff]
      %v3136 = vld [vmem:[%s10 + $0xc8] sm:$0xff]
      %v3137 = vld [vmem:[%s10 + $0xd0] sm:$0xff]
      %v3138 = vld [vmem:[%s10 + $0xd8] sm:$0xff]
      %v3139 = vld [vmem:[%s10 + $0xe0] sm:$0xff]
      %v3140 = vld [vmem:[%s10 + $0xe8] sm:$0xff]
      %v3141 = vld [vmem:[%s10 + $0xf0] sm:$0xff]
      %v3142 = vld [vmem:[%s10 + $0xf8] sm:$0xff]
      %v3143 = vld [vmem:[%s10 + $0x100] sm:$0xff]
      %v3144 = vld [vmem:[%s10 + $0x108] sm:$0xff]
      %v3145 = vld [vmem:[%s10 + $0x110] sm:$0xff]
      %v3146 = vld [vmem:[%s10 + $0x118] sm:$0xff]
      %s3147 = scalar_lea.vmem %s11, 1
      %v3148 = vld [vmem:[%s3147] ss:$2 sm:$0x7]
      %v3150 = vlaneseq
      %v3151 = vshrl.u32 %v3150, 7
      %v3152 = vsub.s32 0, %v3151
      %v3153 = vrot.slane %v3148, %v3152
      %v3154 = vlaneseq
      %v3155 = vshrl.u32 %v3154, 7
      %v3156 = vsub.s32 1, %v3155
      %v3157 = vrot.slane %v3148, %v3156
      %v3158 = vlaneseq
      %v3159 = vshrl.u32 %v3158, 7
      %v3160 = vsub.s32 2, %v3159
      %v3161 = vrot.slane %v3148, %v3160
      %v3166 = vsel %vm901, %v752, 0
      %v3169 = vsel %vm901, %v753, 0
      %3171 = vmatprep.subr.mxu0 0.0
      %3172 = vmatpush1.msra.mxu0 0.0
      %3173 = vmatprep.subr.mxu0 0.0
      %3174 = vmatpush1.msra.mxu0 0.0
      %3175 = vmatprep.subr.mxu0 0.0
      %3176 = vmatpush1.msra.mxu0 0.0
      %3177 = vmatprep.subr.mxu0 0.0
      %3178 = vmatpush1.msra.mxu0 0.0
      %3179 = vmatprep.subr.mxu0 %v3145
      %3180 = vmatpush1.msra.mxu0 %v3144
      %3181 = vmatprep.subr.mxu0 %v3142
      %3182 = vmatpush1.msra.mxu0 %v3141
      %3183 = vmatprep.subr.mxu0 %v3139
      %3184 = vmatpush1.msra.mxu0 %v3138
      %3185 = vmatprep.subr.mxu0 %v3136
      %3186 = vmatpush1.msra.mxu0 %v3135
      %3187 = vmatprep.subr.mxu0 %v3133
      %3188 = vmatpush1.msra.mxu0 %v3132
      %3189 = vmatprep.subr.mxu0 %v3130
      %3190 = vmatpush1.msra.mxu0 %v3129
      %3191 = vmatprep.subr.mxu0 %v3127
      %3192 = vmatpush1.msra.mxu0 %v3126
      %3193 = vmatprep.subr.mxu0 %v3124
      %3194 = vmatpush1.msra.mxu0 %v3123
      %3195 = vmatprep.subr.mxu0 %v3121
      %3196 = vmatpush1.msra.mxu0 %v3120
      %3197 = vmatprep.subr.mxu0 %v3118
      %3198 = vmatpush1.msra.mxu0 %v3117
      %3199 = vmatprep.subr.mxu0 %v3115
      %3200 = vmatpush1.msra.mxu0 %v3114
      %3201 = vmatprep.subr.mxu0 %v3112
      %3202 = vmatpush1.msra.mxu0 %v3111
      %3203 = vmatprep.subr.mxu0 0.0
      %3204 = vmatpush2.msra.mxu0 0.0
      %3205 = vmatprep.subr.mxu0 0.0
      %3206 = vmatpush2.msra.mxu0 0.0
      %3207 = vmatprep.subr.mxu0 0.0
      %3208 = vmatpush2.msra.mxu0 0.0
      %3209 = vmatprep.subr.mxu0 0.0
      %3210 = vmatpush2.msra.mxu0 0.0
      %3211 = vmatprep.subr.mxu0 0.0
      %3212 = vmatpush2.msra.mxu0 0.0
      %3213 = vmatprep.subr.mxu0 0.0
      %3214 = vmatpush2.msra.mxu0 0.0
      %3215 = vmatprep.subr.mxu0 0.0
      %3216 = vmatpush2.msra.mxu0 0.0
      %3217 = vmatprep.subr.mxu0 0.0
      %3218 = vmatpush2.msra.mxu0 0.0
      %3219 = vmatprep.subr.mxu0 0.0
      %3220 = vmatpush2.msra.mxu0 0.0
      %3221 = vmatprep.subr.mxu0 0.0
      %3222 = vmatpush2.msra.mxu0 0.0
      %3223 = vmatprep.subr.mxu0 0.0
      %3224 = vmatpush2.msra.mxu0 0.0
      %3225 = vmatprep.subr.mxu0 0.0
      %3226 = vmatpush2.msra.mxu0 0.0
      %3227 = vmatprep.subr.mxu0 0.0
      %3228 = vmatpush2.msra.mxu0 0.0
      %3229 = vmatprep.subr.mxu0 0.0
      %3230 = vmatpush2.msra.mxu0 0.0
      %3231 = vmatprep.subr.mxu0 0.0
      %3232 = vmatpush2.msra.mxu0 0.0
      %3233 = vmatprep.subr.mxu0 0.0
      %3234 = vmatpush2.msra.mxu0 0.0
      %3235 = vmatprep.mubr.f32.mxu0 0.0
      %3236 = vmatmul.mubr.f32.gmra.mxu0 %v3166
      %v3237 = vpop.f32.mrf.mxu0
      %v3238 = vadd.f32 %v3153, %v3237
      %v3239 = vpop.f32.mrf.mxu0
      %v3240 = vadd.f32 %v3157, %v3239
      %3241 = vmatprep.mubr.f32.mxu0 0.0
      %3242 = vmatmul.mubr.f32.gmra.mxu0 %v3169
      %v3243 = vpop.f32.mrf.mxu0
      %v3244 = vadd.f32 %v3153, %v3243
      %v3245 = vpop.f32.mrf.mxu0
      %v3246 = vadd.f32 %v3157, %v3245
      %3247 = vdwg.mxu0
      %3248 = vmatprep.subr.mxu0 0.0
      %3249 = vmatpush1.msra.mxu0 0.0
      %3250 = vmatprep.subr.mxu0 0.0
      %3251 = vmatpush1.msra.mxu0 0.0
      %3252 = vmatprep.subr.mxu0 0.0
      %3253 = vmatpush1.msra.mxu0 0.0
      %3254 = vmatprep.subr.mxu0 0.0
      %3255 = vmatpush1.msra.mxu0 0.0
      %3256 = vmatprep.subr.mxu0 0.0
      %3257 = vmatpush1.msra.mxu0 %v3146
      %3258 = vmatprep.subr.mxu0 0.0
      %3259 = vmatpush1.msra.mxu0 %v3143
      %3260 = vmatprep.subr.mxu0 0.0
      %3261 = vmatpush1.msra.mxu0 %v3140
      %3262 = vmatprep.subr.mxu0 0.0
      %3263 = vmatpush1.msra.mxu0 %v3137
      %3264 = vmatprep.subr.mxu0 0.0
      %3265 = vmatpush1.msra.mxu0 %v3134
      %3266 = vmatprep.subr.mxu0 0.0
      %3267 = vmatpush1.msra.mxu0 %v3131
      %3268 = vmatprep.subr.mxu0 0.0
      %3269 = vmatpush1.msra.mxu0 %v3128
      %3270 = vmatprep.subr.mxu0 0.0
      %3271 = vmatpush1.msra.mxu0 %v3125
      %3272 = vmatprep.subr.mxu0 0.0
      %3273 = vmatpush1.msra.mxu0 %v3122
      %3274 = vmatprep.subr.mxu0 0.0
      %3275 = vmatpush1.msra.mxu0 %v3119
      %3276 = vmatprep.subr.mxu0 0.0
      %3277 = vmatpush1.msra.mxu0 %v3116
      %3278 = vmatprep.subr.mxu0 0.0
      %3279 = vmatpush1.msra.mxu0 %v3113
      %3280 = vmatprep.subr.mxu0 0.0
      %3281 = vmatpush2.msra.mxu0 0.0
      %3282 = vmatprep.subr.mxu0 0.0
      %3283 = vmatpush2.msra.mxu0 0.0
      %3284 = vmatprep.subr.mxu0 0.0
      %3285 = vmatpush2.msra.mxu0 0.0
      %3286 = vmatprep.subr.mxu0 0.0
      %3287 = vmatpush2.msra.mxu0 0.0
      %3288 = vmatprep.subr.mxu0 0.0
      %3289 = vmatpush2.msra.mxu0 0.0
      %3290 = vmatprep.subr.mxu0 0.0
      %3291 = vmatpush2.msra.mxu0 0.0
      %3292 = vmatprep.subr.mxu0 0.0
      %3293 = vmatpush2.msra.mxu0 0.0
      %3294 = vmatprep.subr.mxu0 0.0
      %3295 = vmatpush2.msra.mxu0 0.0
      %3296 = vmatprep.subr.mxu0 0.0
      %3297 = vmatpush2.msra.mxu0 0.0
      %3298 = vmatprep.subr.mxu0 0.0
      %3299 = vmatpush2.msra.mxu0 0.0
      %3300 = vmatprep.subr.mxu0 0.0
      %3301 = vmatpush2.msra.mxu0 0.0
      %3302 = vmatprep.subr.mxu0 0.0
      %3303 = vmatpush2.msra.mxu0 0.0
      %3304 = vmatprep.subr.mxu0 0.0
      %3305 = vmatpush2.msra.mxu0 0.0
      %3306 = vmatprep.subr.mxu0 0.0
      %3307 = vmatpush2.msra.mxu0 0.0
      %3308 = vmatprep.subr.mxu0 0.0
      %3309 = vmatpush2.msra.mxu0 0.0
      %3310 = vmatprep.subr.mxu0 0.0
      %3311 = vmatpush2.msra.mxu0 0.0
      %3312 = vmatprep.mubr.f32.mxu0 0.0
      %3313 = vmatmul.mubr.f32.gmra.mxu0 %v3166
      %v3314 = vpop.f32.mrf.mxu0
      %v3315 = vadd.f32 %v3161, %v3314
      %v3316 = vpop.f32.mrf.mxu0
      %3317 = vmatprep.mubr.f32.mxu0 0.0
      %3318 = vmatmul.mubr.f32.gmra.mxu0 %v3169
      %v3319 = vpop.f32.mrf.mxu0
      %v3320 = vadd.f32 %v3161, %v3319
      %v3321 = vpop.f32.mrf.mxu0
      %3322 = vdwg.mxu0
      %v3323 = vadd.f32 %v3026, %v3238
      %v3324 = vadd.f32 %v3032, %v3244
      %v3325 = vxor.u32 %v3323, 2147483648
      %v3326 = vxor.u32 %v3324, 2147483648
      %v3327 = vmul.f32 %v3325, 1.442695
      %v3328 = vpow.pop %v3327
      %v3329 = vmul.f32 %v3326, 1.442695
      %v3330 = vpow.pop %v3329
      %v3331 = vadd.f32 %v3328, 1.0
      %v3332 = vadd.f32 %v3330, 1.0
      %v3333 = vrcp.pop %v3331
      %v3334 = vmul.f32 1.0, %v3333
      %v3335 = vrcp.pop %v3332
      %v3336 = vmul.f32 1.0, %v3335
      %v3337 = vadd.f32 %v3028, %v3240
      %v3338 = vadd.f32 %v3034, %v3246
      %v3339 = vxor.u32 %v3337, 2147483648
      %v3340 = vxor.u32 %v3338, 2147483648
      %v3341 = vmul.f32 %v3339, 1.442695
      %v3342 = vpow.pop %v3341
      %v3343 = vmul.f32 %v3340, 1.442695
      %v3344 = vpow.pop %v3343
      %v3345 = vadd.f32 %v3342, 1.0
      %v3346 = vadd.f32 %v3344, 1.0
      %v3347 = vrcp.pop %v3345
      %v3348 = vmul.f32 1.0, %v3347
      %v3349 = vrcp.pop %v3346
      %v3350 = vmul.f32 1.0, %v3349
      %3355 = vrot.lane.b32.xlu0 %v3240, 64
      %v3356 = vpop.permute.xlu0 %3355
      %3357 = vrot.lane.b32.xlu0 %v3315, 64
      %v3358 = vpop.permute.xlu0 %3357
      %3359 = vrot.lane.b32.xlu0 %v3246, 64
      %v3360 = vpop.permute.xlu0 %3359
      %3361 = vrot.lane.b32.xlu0 %v3320, 64
      %v3362 = vpop.permute.xlu0 %3361
      %v3363 = vsel %vm1428, %v3356, %v3358
      %v3364 = vsel %vm1428, %v3360, %v3362
      %v3367 = vmul.f32 %v3334, %v3363
      %v3368 = vmul.f32 %v3336, %v3364
      %3371 = vrot.lane.b32.xlu0 %v3367, 64
      %v3372 = vpop.permute.xlu0 %3371
      %3373 = vrot.lane.b32.xlu0 %v3368, 64
      %v3374 = vpop.permute.xlu0 %3373
      %v3377 = vadd.f32 %v3028, %v3372
      %v3378 = vadd.f32 %v3103, %v3372
      %v3379 = vadd.f32 %v3034, %v3374
      %v3380 = vadd.f32 %v3108, %v3374
      %v3381 = vtanh.pop %v3377
      %v3382 = vtanh.pop %v3378
      %v3383 = vtanh.pop %v3379
      %v3384 = vtanh.pop %v3380
      %v3385 = vsub.f32 1.0, %v3334
      %v3386 = vsub.f32 1.0, %v3348
      %v3387 = vsub.f32 1.0, %v3336
      %v3388 = vsub.f32 1.0, %v3350
      %3393 = vrot.lane.b32.xlu0 %v3381, 32
      %v3394 = vpop.permute.xlu0 %3393
      %3395 = vrot.lane.b32.xlu0 %v3382, 32
      %v3396 = vpop.permute.xlu0 %3395
      %3397 = vrot.lane.b32.xlu0 %v3383, 32
      %v3398 = vpop.permute.xlu0 %3397
      %3399 = vrot.lane.b32.xlu0 %v3384, 32
      %v3400 = vpop.permute.xlu0 %3399
      %v3401 = vsel %vm1448, %v3394, %v3396
      %v3402 = vsel %vm1448, %v3398, %v3400
      %v3407 = vmul.f32 %v3385, %v3394
      %v3408 = vmul.f32 %v3386, %v3401
      %v3409 = vmul.f32 %v3387, %v3398
      %v3410 = vmul.f32 %v3388, %v3402
      %3411 = vrot.lane.b32.xlu0 %v752, 96
      %v3412 = vpop.permute.xlu0 %3411
      %3413 = vrot.lane.b32.xlu0 %v753, 96
      %v3414 = vpop.permute.xlu0 %3413
      %v3417 = vmul.f32 %v3334, %v3412
      %v3418 = vmul.f32 %v3348, %v3412
      %v3419 = vmul.f32 %v3336, %v3414
      %v3420 = vmul.f32 %v3350, %v3414
      %v3421 = vadd.f32 %v3407, %v3417
      %v3422 = vadd.f32 %v3408, %v3418
      %v3423 = vadd.f32 %v3409, %v3419
      %v3424 = vadd.f32 %v3410, %v3420
      %v3425 = vsub.f32 1.0, %v750
      %v3426 = vsub.f32 1.0, %v751
      %3428 = vset.pattern.permute.xlu0 0
      %3429 = vperm.xlu0 %3428, %v3425
      %v3430 = vpop.permute.xlu0 %3429
      %3433 = vset.pattern.permute.xlu0 0
      %3434 = vperm.xlu0 %3433, %v3426
      %v3435 = vpop.permute.xlu0 %3434
      %v3437 = vmul.f32 %v752, %v3430
      %v3438 = vmul.f32 %v753, %v3435
      %3440 = vset.pattern.permute.xlu0 0
      %3441 = vperm.xlu0 %3440, %v750
      %v3442 = vpop.permute.xlu0 %3441
      %3445 = vset.pattern.permute.xlu0 0
      %3446 = vperm.xlu0 %3445, %v751
      %v3447 = vpop.permute.xlu0 %3446
      %v3449 = vmul.f32 %v3421, %v3442
      %v3450 = vmul.f32 %v3422, %v3442
      %v3451 = vmul.f32 %v3423, %v3447
      %v3452 = vmul.f32 %v3424, %v3447
      %3457 = vrot.lane.b32.xlu0 %v3449, 32
      %v3458 = vpop.permute.xlu0 %3457
      %3459 = vrot.lane.b32.xlu0 %v3450, 32
      %v3460 = vpop.permute.xlu0 %3459
      %3461 = vrot.lane.b32.xlu0 %v3451, 32
      %v3462 = vpop.permute.xlu0 %3461
      %3463 = vrot.lane.b32.xlu0 %v3452, 32
      %v3464 = vpop.permute.xlu0 %3463
      %v3465 = vsel %vm1448, %v3458, %v3460
      %v3466 = vsel %vm1448, %v3462, %v3464
      %v3469 = vadd.f32 %v3437, %v3465
      %v3470 = vadd.f32 %v3438, %v3466
      %3471 = vst.msk [vmem:[#allocation5] sm:$0xff] %vm901, %v3469
      %3472 = vst.msk [vmem:[#allocation5 + $0x8] sm:$0xff] %vm901, %v3470
      %3473 = vmatprep.subr.mxu0 0.0
      %3474 = vmatpush1.msra.mxu0 0.0
      %3475 = vmatprep.subr.mxu0 0.0
      %3476 = vmatpush1.msra.mxu0 0.0
      %3477 = vmatprep.subr.mxu0 0.0
      %3478 = vmatpush1.msra.mxu0 0.0
      %3479 = vmatprep.subr.mxu0 0.0
      %3480 = vmatpush1.msra.mxu0 0.0
      %3481 = vmatprep.subr.mxu0 0.0
      %3482 = vmatpush1.msra.mxu0 0.0
      %3483 = vmatprep.subr.mxu0 0.0
      %3484 = vmatpush1.msra.mxu0 0.0
      %3485 = vmatprep.subr.mxu0 0.0
      %3486 = vmatpush1.msra.mxu0 0.0
      %3487 = vmatprep.subr.mxu0 0.0
      %3488 = vmatpush1.msra.mxu0 0.0
      %3489 = vmatprep.subr.mxu0 0.0
      %3490 = vmatpush1.msra.mxu0 0.0
      %3491 = vmatprep.subr.mxu0 0.0
      %3492 = vmatpush1.msra.mxu0 0.0
      %3493 = vmatprep.subr.mxu0 0.0
      %3494 = vmatpush1.msra.mxu0 0.0
      %3495 = vmatprep.subr.mxu0 0.0
      %3496 = vmatpush1.msra.mxu0 0.0
      %3497 = vmatprep.subr.mxu0 0.0
      %3498 = vmatpush1.msra.mxu0 0.0
      %3499 = vmatprep.subr.mxu0 0.0
      %3500 = vmatpush1.msra.mxu0 0.0
      %3501 = vmatprep.subr.mxu0 0.0
      %3502 = vmatpush1.msra.mxu0 %v3470
      %3503 = vmatprep.subr.mxu0 0.0
      %3504 = vmatpush1.msra.mxu0 %v3469
      %3505 = vmatprep.subr.mxu0 0.0
      %3506 = vmatpush2.msra.mxu0 0.0
      %3507 = vmatprep.subr.mxu0 0.0
      %3508 = vmatpush2.msra.mxu0 0.0
      %3509 = vmatprep.subr.mxu0 0.0
      %3510 = vmatpush2.msra.mxu0 0.0
      %3511 = vmatprep.subr.mxu0 0.0
      %3512 = vmatpush2.msra.mxu0 0.0
      %3513 = vmatprep.subr.mxu0 0.0
      %3514 = vmatpush2.msra.mxu0 0.0
      %3515 = vmatprep.subr.mxu0 0.0
      %3516 = vmatpush2.msra.mxu0 0.0
      %3517 = vmatprep.subr.mxu0 0.0
      %3518 = vmatpush2.msra.mxu0 0.0
      %3519 = vmatprep.subr.mxu0 0.0
      %3520 = vmatpush2.msra.mxu0 0.0
      %3521 = vmatprep.subr.mxu0 0.0
      %3522 = vmatpush2.msra.mxu0 0.0
      %3523 = vmatprep.subr.mxu0 0.0
      %3524 = vmatpush2.msra.mxu0 0.0
      %3525 = vmatprep.subr.mxu0 0.0
      %3526 = vmatpush2.msra.mxu0 0.0
      %3527 = vmatprep.subr.mxu0 0.0
      %3528 = vmatpush2.msra.mxu0 0.0
      %3529 = vmatprep.subr.mxu0 0.0
      %3530 = vmatpush2.msra.mxu0 0.0
      %3531 = vmatprep.subr.mxu0 0.0
      %3532 = vmatpush2.msra.mxu0 0.0
      %3533 = vmatprep.subr.mxu0 0.0
      %3534 = vmatpush2.msra.mxu0 0.0
      %3535 = vmatprep.subr.mxu0 0.0
      %3536 = vmatpush2.msra.mxu0 0.0
      %3537 = vmatprep.mubr.f32.mxu0 0.0
      %3538 = vmatmul.mubr.f32.gmra.mxu0 %v756
      %v3539 = vpop.f32.mrf.mxu0
      %v3540 = vadd.f32 0.0, %v3539
      %v3541 = vpop.f32.mrf.mxu0
      %3542 = vdwg.mxu0
      %v3543 = vld [vmem:[#allocation6] sm:$0xff]
      %v3544 = vld [vmem:[%s12] sm:$0xff]
      %v3545 = vld [vmem:[%s12 + $0x8] sm:$0xff]
      %v3546 = vld [vmem:[%s12 + $0x10] sm:$0xff]
      %v3547 = vld [vmem:[%s12 + $0x18] sm:$0xff]
      %v3548 = vld [vmem:[%s12 + $0x20] sm:$0xff]
      %v3549 = vld [vmem:[%s12 + $0x28] sm:$0xff]
      %v3550 = vld [vmem:[%s12 + $0x30] sm:$0xff]
      %v3551 = vld [vmem:[%s12 + $0x38] sm:$0xff]
      %v3552 = vld [vmem:[%s12 + $0x40] sm:$0xff]
      %v3553 = vld [vmem:[%s12 + $0x48] sm:$0xff]
      %v3554 = vld [vmem:[%s12 + $0x50] sm:$0xff]
      %v3555 = vld [vmem:[%s12 + $0x58] sm:$0xff]
      %v3556 = vld [vmem:[%s12 + $0x60] sm:$0xff]
      %v3557 = vld [vmem:[%s12 + $0x68] sm:$0xff]
      %v3558 = vld [vmem:[%s12 + $0x70] sm:$0xff]
      %v3559 = vld [vmem:[%s12 + $0x78] sm:$0xff]
      %v3560 = vld [vmem:[%s12 + $0x80] sm:$0xff]
      %v3561 = vld [vmem:[%s12 + $0x88] sm:$0xff]
      %v3562 = vld [vmem:[%s12 + $0x90] sm:$0xff]
      %v3563 = vld [vmem:[%s12 + $0x98] sm:$0xff]
      %v3564 = vld [vmem:[%s12 + $0xa0] sm:$0xff]
      %v3565 = vld [vmem:[%s12 + $0xa8] sm:$0xff]
      %v3566 = vld [vmem:[%s12 + $0xb0] sm:$0xff]
      %v3567 = vld [vmem:[%s12 + $0xb8] sm:$0xff]
      %v3568 = vld [vmem:[%s12 + $0xc0] sm:$0xff]
      %v3569 = vld [vmem:[%s12 + $0xc8] sm:$0xff]
      %v3570 = vld [vmem:[%s12 + $0xd0] sm:$0xff]
      %v3571 = vld [vmem:[%s12 + $0xd8] sm:$0xff]
      %v3572 = vld [vmem:[%s12 + $0xe0] sm:$0xff]
      %v3573 = vld [vmem:[%s12 + $0xe8] sm:$0xff]
      %v3574 = vld [vmem:[%s12 + $0xf0] sm:$0xff]
      %v3575 = vld [vmem:[%s12 + $0xf8] sm:$0xff]
      %v3576 = vld [vmem:[%s12 + $0x100] sm:$0xff]
      %v3577 = vld [vmem:[%s12 + $0x108] sm:$0xff]
      %v3578 = vld [vmem:[%s12 + $0x110] sm:$0xff]
      %v3579 = vld [vmem:[%s12 + $0x118] sm:$0xff]
      %v3580 = vld [vmem:[%s14] ss:$2 sm:$0x7]
      %v3582 = vlaneseq
      %v3583 = vshrl.u32 %v3582, 7
      %v3584 = vsub.s32 0, %v3583
      %v3585 = vrot.slane %v3580, %v3584
      %v3586 = vlaneseq
      %v3587 = vshrl.u32 %v3586, 7
      %v3588 = vsub.s32 1, %v3587
      %v3589 = vrot.slane %v3580, %v3588
      %v3590 = vlaneseq
      %v3591 = vshrl.u32 %v3590, 7
      %v3592 = vsub.s32 2, %v3591
      %v3593 = vrot.slane %v3580, %v3592
      %v3598 = vsel %vm901, %v3540, 0
      %3600 = vmatprep.subr.mxu0 0.0
      %3601 = vmatpush1.msra.mxu0 0.0
      %3602 = vmatprep.subr.mxu0 0.0
      %3603 = vmatpush1.msra.mxu0 0.0
      %3604 = vmatprep.subr.mxu0 0.0
      %3605 = vmatpush1.msra.mxu0 0.0
      %3606 = vmatprep.subr.mxu0 0.0
      %3607 = vmatpush1.msra.mxu0 0.0
      %3608 = vmatprep.subr.mxu0 %v3578
      %3609 = vmatpush1.msra.mxu0 %v3577
      %3610 = vmatprep.subr.mxu0 %v3575
      %3611 = vmatpush1.msra.mxu0 %v3574
      %3612 = vmatprep.subr.mxu0 %v3572
      %3613 = vmatpush1.msra.mxu0 %v3571
      %3614 = vmatprep.subr.mxu0 %v3569
      %3615 = vmatpush1.msra.mxu0 %v3568
      %3616 = vmatprep.subr.mxu0 %v3566
      %3617 = vmatpush1.msra.mxu0 %v3565
      %3618 = vmatprep.subr.mxu0 %v3563
      %3619 = vmatpush1.msra.mxu0 %v3562
      %3620 = vmatprep.subr.mxu0 %v3560
      %3621 = vmatpush1.msra.mxu0 %v3559
      %3622 = vmatprep.subr.mxu0 %v3557
      %3623 = vmatpush1.msra.mxu0 %v3556
      %3624 = vmatprep.subr.mxu0 %v3554
      %3625 = vmatpush1.msra.mxu0 %v3553
      %3626 = vmatprep.subr.mxu0 %v3551
      %3627 = vmatpush1.msra.mxu0 %v3550
      %3628 = vmatprep.subr.mxu0 %v3548
      %3629 = vmatpush1.msra.mxu0 %v3547
      %3630 = vmatprep.subr.mxu0 %v3545
      %3631 = vmatpush1.msra.mxu0 %v3544
      %3632 = vmatprep.subr.mxu0 0.0
      %3633 = vmatpush2.msra.mxu0 0.0
      %3634 = vmatprep.subr.mxu0 0.0
      %3635 = vmatpush2.msra.mxu0 0.0
      %3636 = vmatprep.subr.mxu0 0.0
      %3637 = vmatpush2.msra.mxu0 0.0
      %3638 = vmatprep.subr.mxu0 0.0
      %3639 = vmatpush2.msra.mxu0 0.0
      %3640 = vmatprep.subr.mxu0 0.0
      %3641 = vmatpush2.msra.mxu0 0.0
      %3642 = vmatprep.subr.mxu0 0.0
      %3643 = vmatpush2.msra.mxu0 0.0
      %3644 = vmatprep.subr.mxu0 0.0
      %3645 = vmatpush2.msra.mxu0 0.0
      %3646 = vmatprep.subr.mxu0 0.0
      %3647 = vmatpush2.msra.mxu0 0.0
      %3648 = vmatprep.subr.mxu0 0.0
      %3649 = vmatpush2.msra.mxu0 0.0
      %3650 = vmatprep.subr.mxu0 0.0
      %3651 = vmatpush2.msra.mxu0 0.0
      %3652 = vmatprep.subr.mxu0 0.0
      %3653 = vmatpush2.msra.mxu0 0.0
      %3654 = vmatprep.subr.mxu0 0.0
      %3655 = vmatpush2.msra.mxu0 0.0
      %3656 = vmatprep.subr.mxu0 0.0
      %3657 = vmatpush2.msra.mxu0 0.0
      %3658 = vmatprep.subr.mxu0 0.0
      %3659 = vmatpush2.msra.mxu0 0.0
      %3660 = vmatprep.subr.mxu0 0.0
      %3661 = vmatpush2.msra.mxu0 0.0
      %3662 = vmatprep.subr.mxu0 0.0
      %3663 = vmatpush2.msra.mxu0 0.0
      %3664 = vmatprep.mubr.f32.mxu0 0.0
      %3665 = vmatmul.mubr.f32.gmra.mxu0 %v3598
      %v3666 = vpop.f32.mrf.mxu0
      %v3667 = vadd.f32 %v3585, %v3666
      %v3668 = vpop.f32.mrf.mxu0
      %v3669 = vadd.f32 %v3589, %v3668
      %3670 = vdwg.mxu0
      %3671 = vmatprep.subr.mxu0 0.0
      %3672 = vmatpush1.msra.mxu0 0.0
      %3673 = vmatprep.subr.mxu0 0.0
      %3674 = vmatpush1.msra.mxu0 0.0
      %3675 = vmatprep.subr.mxu0 0.0
      %3676 = vmatpush1.msra.mxu0 0.0
      %3677 = vmatprep.subr.mxu0 0.0
      %3678 = vmatpush1.msra.mxu0 0.0
      %3679 = vmatprep.subr.mxu0 0.0
      %3680 = vmatpush1.msra.mxu0 %v3579
      %3681 = vmatprep.subr.mxu0 0.0
      %3682 = vmatpush1.msra.mxu0 %v3576
      %3683 = vmatprep.subr.mxu0 0.0
      %3684 = vmatpush1.msra.mxu0 %v3573
      %3685 = vmatprep.subr.mxu0 0.0
      %3686 = vmatpush1.msra.mxu0 %v3570
      %3687 = vmatprep.subr.mxu0 0.0
      %3688 = vmatpush1.msra.mxu0 %v3567
      %3689 = vmatprep.subr.mxu0 0.0
      %3690 = vmatpush1.msra.mxu0 %v3564
      %3691 = vmatprep.subr.mxu0 0.0
      %3692 = vmatpush1.msra.mxu0 %v3561
      %3693 = vmatprep.subr.mxu0 0.0
      %3694 = vmatpush1.msra.mxu0 %v3558
      %3695 = vmatprep.subr.mxu0 0.0
      %3696 = vmatpush1.msra.mxu0 %v3555
      %3697 = vmatprep.subr.mxu0 0.0
      %3698 = vmatpush1.msra.mxu0 %v3552
      %3699 = vmatprep.subr.mxu0 0.0
      %3700 = vmatpush1.msra.mxu0 %v3549
      %3701 = vmatprep.subr.mxu0 0.0
      %3702 = vmatpush1.msra.mxu0 %v3546
      %3703 = vmatprep.subr.mxu0 0.0
      %3704 = vmatpush2.msra.mxu0 0.0
      %3705 = vmatprep.subr.mxu0 0.0
      %3706 = vmatpush2.msra.mxu0 0.0
      %3707 = vmatprep.subr.mxu0 0.0
      %3708 = vmatpush2.msra.mxu0 0.0
      %3709 = vmatprep.subr.mxu0 0.0
      %3710 = vmatpush2.msra.mxu0 0.0
      %3711 = vmatprep.subr.mxu0 0.0
      %3712 = vmatpush2.msra.mxu0 0.0
      %3713 = vmatprep.subr.mxu0 0.0
      %3714 = vmatpush2.msra.mxu0 0.0
      %3715 = vmatprep.subr.mxu0 0.0
      %3716 = vmatpush2.msra.mxu0 0.0
      %3717 = vmatprep.subr.mxu0 0.0
      %3718 = vmatpush2.msra.mxu0 0.0
      %3719 = vmatprep.subr.mxu0 0.0
      %3720 = vmatpush2.msra.mxu0 0.0
      %3721 = vmatprep.subr.mxu0 0.0
      %3722 = vmatpush2.msra.mxu0 0.0
      %3723 = vmatprep.subr.mxu0 0.0
      %3724 = vmatpush2.msra.mxu0 0.0
      %3725 = vmatprep.subr.mxu0 0.0
      %3726 = vmatpush2.msra.mxu0 0.0
      %3727 = vmatprep.subr.mxu0 0.0
      %3728 = vmatpush2.msra.mxu0 0.0
      %3729 = vmatprep.subr.mxu0 0.0
      %3730 = vmatpush2.msra.mxu0 0.0
      %3731 = vmatprep.subr.mxu0 0.0
      %3732 = vmatpush2.msra.mxu0 0.0
      %3733 = vmatprep.subr.mxu0 0.0
      %3734 = vmatpush2.msra.mxu0 0.0
      %3735 = vmatprep.mubr.f32.mxu0 0.0
      %3736 = vmatmul.mubr.f32.gmra.mxu0 %v3598
      %v3737 = vpop.f32.mrf.mxu0
      %v3738 = vadd.f32 %v3593, %v3737
      %v3739 = vpop.f32.mrf.mxu0
      %3740 = vdwg.mxu0
      %v3741 = vld [vmem:[%s13] sm:$0xff]
      %v3742 = vld [vmem:[%s13 + $0x8] sm:$0xff]
      %v3743 = vld [vmem:[%s13 + $0x10] sm:$0xff]
      %v3744 = vld [vmem:[%s13 + $0x18] sm:$0xff]
      %v3745 = vld [vmem:[%s13 + $0x20] sm:$0xff]
      %v3746 = vld [vmem:[%s13 + $0x28] sm:$0xff]
      %v3747 = vld [vmem:[%s13 + $0x30] sm:$0xff]
      %v3748 = vld [vmem:[%s13 + $0x38] sm:$0xff]
      %v3749 = vld [vmem:[%s13 + $0x40] sm:$0xff]
      %v3750 = vld [vmem:[%s13 + $0x48] sm:$0xff]
      %v3751 = vld [vmem:[%s13 + $0x50] sm:$0xff]
      %v3752 = vld [vmem:[%s13 + $0x58] sm:$0xff]
      %v3753 = vld [vmem:[%s13 + $0x60] sm:$0xff]
      %v3754 = vld [vmem:[%s13 + $0x68] sm:$0xff]
      %v3755 = vld [vmem:[%s13 + $0x70] sm:$0xff]
      %v3756 = vld [vmem:[%s13 + $0x78] sm:$0xff]
      %v3757 = vld [vmem:[%s13 + $0x80] sm:$0xff]
      %v3758 = vld [vmem:[%s13 + $0x88] sm:$0xff]
      %v3759 = vld [vmem:[%s13 + $0x90] sm:$0xff]
      %v3760 = vld [vmem:[%s13 + $0x98] sm:$0xff]
      %v3761 = vld [vmem:[%s13 + $0xa0] sm:$0xff]
      %v3762 = vld [vmem:[%s13 + $0xa8] sm:$0xff]
      %v3763 = vld [vmem:[%s13 + $0xb0] sm:$0xff]
      %v3764 = vld [vmem:[%s13 + $0xb8] sm:$0xff]
      %v3765 = vld [vmem:[%s13 + $0xc0] sm:$0xff]
      %v3766 = vld [vmem:[%s13 + $0xc8] sm:$0xff]
      %v3767 = vld [vmem:[%s13 + $0xd0] sm:$0xff]
      %v3768 = vld [vmem:[%s13 + $0xd8] sm:$0xff]
      %v3769 = vld [vmem:[%s13 + $0xe0] sm:$0xff]
      %v3770 = vld [vmem:[%s13 + $0xe8] sm:$0xff]
      %v3771 = vld [vmem:[%s13 + $0xf0] sm:$0xff]
      %v3772 = vld [vmem:[%s13 + $0xf8] sm:$0xff]
      %v3773 = vld [vmem:[%s13 + $0x100] sm:$0xff]
      %v3774 = vld [vmem:[%s13 + $0x108] sm:$0xff]
      %v3775 = vld [vmem:[%s13 + $0x110] sm:$0xff]
      %v3776 = vld [vmem:[%s13 + $0x118] sm:$0xff]
      %s3777 = scalar_lea.vmem %s14, 1
      %v3778 = vld [vmem:[%s3777] ss:$2 sm:$0x7]
      %v3780 = vlaneseq
      %v3781 = vshrl.u32 %v3780, 7
      %v3782 = vsub.s32 0, %v3781
      %v3783 = vrot.slane %v3778, %v3782
      %v3784 = vlaneseq
      %v3785 = vshrl.u32 %v3784, 7
      %v3786 = vsub.s32 1, %v3785
      %v3787 = vrot.slane %v3778, %v3786
      %v3788 = vlaneseq
      %v3789 = vshrl.u32 %v3788, 7
      %v3790 = vsub.s32 2, %v3789
      %v3791 = vrot.slane %v3778, %v3790
      %v3796 = vsel %vm901, %v3543, 0
      %3798 = vmatprep.subr.mxu0 0.0
      %3799 = vmatpush1.msra.mxu0 0.0
      %3800 = vmatprep.subr.mxu0 0.0
      %3801 = vmatpush1.msra.mxu0 0.0
      %3802 = vmatprep.subr.mxu0 0.0
      %3803 = vmatpush1.msra.mxu0 0.0
      %3804 = vmatprep.subr.mxu0 0.0
      %3805 = vmatpush1.msra.mxu0 0.0
      %3806 = vmatprep.subr.mxu0 %v3775
      %3807 = vmatpush1.msra.mxu0 %v3774
      %3808 = vmatprep.subr.mxu0 %v3772
      %3809 = vmatpush1.msra.mxu0 %v3771
      %3810 = vmatprep.subr.mxu0 %v3769
      %3811 = vmatpush1.msra.mxu0 %v3768
      %3812 = vmatprep.subr.mxu0 %v3766
      %3813 = vmatpush1.msra.mxu0 %v3765
      %3814 = vmatprep.subr.mxu0 %v3763
      %3815 = vmatpush1.msra.mxu0 %v3762
      %3816 = vmatprep.subr.mxu0 %v3760
      %3817 = vmatpush1.msra.mxu0 %v3759
      %3818 = vmatprep.subr.mxu0 %v3757
      %3819 = vmatpush1.msra.mxu0 %v3756
      %3820 = vmatprep.subr.mxu0 %v3754
      %3821 = vmatpush1.msra.mxu0 %v3753
      %3822 = vmatprep.subr.mxu0 %v3751
      %3823 = vmatpush1.msra.mxu0 %v3750
      %3824 = vmatprep.subr.mxu0 %v3748
      %3825 = vmatpush1.msra.mxu0 %v3747
      %3826 = vmatprep.subr.mxu0 %v3745
      %3827 = vmatpush1.msra.mxu0 %v3744
      %3828 = vmatprep.subr.mxu0 %v3742
      %3829 = vmatpush1.msra.mxu0 %v3741
      %3830 = vmatprep.subr.mxu0 0.0
      %3831 = vmatpush2.msra.mxu0 0.0
      %3832 = vmatprep.subr.mxu0 0.0
      %3833 = vmatpush2.msra.mxu0 0.0
      %3834 = vmatprep.subr.mxu0 0.0
      %3835 = vmatpush2.msra.mxu0 0.0
      %3836 = vmatprep.subr.mxu0 0.0
      %3837 = vmatpush2.msra.mxu0 0.0
      %3838 = vmatprep.subr.mxu0 0.0
      %3839 = vmatpush2.msra.mxu0 0.0
      %3840 = vmatprep.subr.mxu0 0.0
      %3841 = vmatpush2.msra.mxu0 0.0
      %3842 = vmatprep.subr.mxu0 0.0
      %3843 = vmatpush2.msra.mxu0 0.0
      %3844 = vmatprep.subr.mxu0 0.0
      %3845 = vmatpush2.msra.mxu0 0.0
      %3846 = vmatprep.subr.mxu0 0.0
      %3847 = vmatpush2.msra.mxu0 0.0
      %3848 = vmatprep.subr.mxu0 0.0
      %3849 = vmatpush2.msra.mxu0 0.0
      %3850 = vmatprep.subr.mxu0 0.0
      %3851 = vmatpush2.msra.mxu0 0.0
      %3852 = vmatprep.subr.mxu0 0.0
      %3853 = vmatpush2.msra.mxu0 0.0
      %3854 = vmatprep.subr.mxu0 0.0
      %3855 = vmatpush2.msra.mxu0 0.0
      %3856 = vmatprep.subr.mxu0 0.0
      %3857 = vmatpush2.msra.mxu0 0.0
      %3858 = vmatprep.subr.mxu0 0.0
      %3859 = vmatpush2.msra.mxu0 0.0
      %3860 = vmatprep.subr.mxu0 0.0
      %3861 = vmatpush2.msra.mxu0 0.0
      %3862 = vmatprep.mubr.f32.mxu0 0.0
      %3863 = vmatmul.mubr.f32.gmra.mxu0 %v3796
      %v3864 = vpop.f32.mrf.mxu0
      %v3865 = vadd.f32 %v3783, %v3864
      %v3866 = vpop.f32.mrf.mxu0
      %v3867 = vadd.f32 %v3787, %v3866
      %3868 = vdwg.mxu0
      %3869 = vmatprep.subr.mxu0 0.0
      %3870 = vmatpush1.msra.mxu0 0.0
      %3871 = vmatprep.subr.mxu0 0.0
      %3872 = vmatpush1.msra.mxu0 0.0
      %3873 = vmatprep.subr.mxu0 0.0
      %3874 = vmatpush1.msra.mxu0 0.0
      %3875 = vmatprep.subr.mxu0 0.0
      %3876 = vmatpush1.msra.mxu0 0.0
      %3877 = vmatprep.subr.mxu0 0.0
      %3878 = vmatpush1.msra.mxu0 %v3776
      %3879 = vmatprep.subr.mxu0 0.0
      %3880 = vmatpush1.msra.mxu0 %v3773
      %3881 = vmatprep.subr.mxu0 0.0
      %3882 = vmatpush1.msra.mxu0 %v3770
      %3883 = vmatprep.subr.mxu0 0.0
      %3884 = vmatpush1.msra.mxu0 %v3767
      %3885 = vmatprep.subr.mxu0 0.0
      %3886 = vmatpush1.msra.mxu0 %v3764
      %3887 = vmatprep.subr.mxu0 0.0
      %3888 = vmatpush1.msra.mxu0 %v3761
      %3889 = vmatprep.subr.mxu0 0.0
      %3890 = vmatpush1.msra.mxu0 %v3758
      %3891 = vmatprep.subr.mxu0 0.0
      %3892 = vmatpush1.msra.mxu0 %v3755
      %3893 = vmatprep.subr.mxu0 0.0
      %3894 = vmatpush1.msra.mxu0 %v3752
      %3895 = vmatprep.subr.mxu0 0.0
      %3896 = vmatpush1.msra.mxu0 %v3749
      %3897 = vmatprep.subr.mxu0 0.0
      %3898 = vmatpush1.msra.mxu0 %v3746
      %3899 = vmatprep.subr.mxu0 0.0
      %3900 = vmatpush1.msra.mxu0 %v3743
      %3901 = vmatprep.subr.mxu0 0.0
      %3902 = vmatpush2.msra.mxu0 0.0
      %3903 = vmatprep.subr.mxu0 0.0
      %3904 = vmatpush2.msra.mxu0 0.0
      %3905 = vmatprep.subr.mxu0 0.0
      %3906 = vmatpush2.msra.mxu0 0.0
      %3907 = vmatprep.subr.mxu0 0.0
      %3908 = vmatpush2.msra.mxu0 0.0
      %3909 = vmatprep.subr.mxu0 0.0
      %3910 = vmatpush2.msra.mxu0 0.0
      %3911 = vmatprep.subr.mxu0 0.0
      %3912 = vmatpush2.msra.mxu0 0.0
      %3913 = vmatprep.subr.mxu0 0.0
      %3914 = vmatpush2.msra.mxu0 0.0
      %3915 = vmatprep.subr.mxu0 0.0
      %3916 = vmatpush2.msra.mxu0 0.0
      %3917 = vmatprep.subr.mxu0 0.0
      %3918 = vmatpush2.msra.mxu0 0.0
      %3919 = vmatprep.subr.mxu0 0.0
      %3920 = vmatpush2.msra.mxu0 0.0
      %3921 = vmatprep.subr.mxu0 0.0
      %3922 = vmatpush2.msra.mxu0 0.0
      %3923 = vmatprep.subr.mxu0 0.0
      %3924 = vmatpush2.msra.mxu0 0.0
      %3925 = vmatprep.subr.mxu0 0.0
      %3926 = vmatpush2.msra.mxu0 0.0
      %3927 = vmatprep.subr.mxu0 0.0
      %3928 = vmatpush2.msra.mxu0 0.0
      %3929 = vmatprep.subr.mxu0 0.0
      %3930 = vmatpush2.msra.mxu0 0.0
      %3931 = vmatprep.subr.mxu0 0.0
      %3932 = vmatpush2.msra.mxu0 0.0
      %3933 = vmatprep.mubr.f32.mxu0 0.0
      %3934 = vmatmul.mubr.f32.gmra.mxu0 %v3796
      %v3935 = vpop.f32.mrf.mxu0
      %v3936 = vadd.f32 %v3791, %v3935
      %v3937 = vpop.f32.mrf.mxu0
      %3938 = vdwg.mxu0
      %v3939 = vadd.f32 %v3667, %v3865
      %v3940 = vxor.u32 %v3939, 2147483648
      %v3941 = vmul.f32 %v3940, 1.442695
      %v3942 = vpow.pop %v3941
      %v3943 = vadd.f32 %v3942, 1.0
      %v3944 = vrcp.pop %v3943
      %v3945 = vmul.f32 1.0, %v3944
      %v3946 = vadd.f32 %v3669, %v3867
      %v3947 = vxor.u32 %v3946, 2147483648
      %v3948 = vmul.f32 %v3947, 1.442695
      %v3949 = vpow.pop %v3948
      %v3950 = vadd.f32 %v3949, 1.0
      %v3951 = vrcp.pop %v3950
      %v3952 = vmul.f32 1.0, %v3951
      %3955 = vrot.lane.b32.xlu0 %v3867, 64
      %v3956 = vpop.permute.xlu0 %3955
      %3957 = vrot.lane.b32.xlu0 %v3936, 64
      %v3958 = vpop.permute.xlu0 %3957
      %v3959 = vsel %vm1428, %v3956, %v3958
      %v3961 = vmul.f32 %v3945, %v3959
      %3963 = vrot.lane.b32.xlu0 %v3961, 64
      %v3964 = vpop.permute.xlu0 %3963
      %v3966 = vadd.f32 %v3669, %v3964
      %v3967 = vadd.f32 %v3738, %v3964
      %v3968 = vtanh.pop %v3966
      %v3969 = vtanh.pop %v3967
      %v3970 = vsub.f32 1.0, %v3945
      %v3971 = vsub.f32 1.0, %v3952
      %3974 = vrot.lane.b32.xlu0 %v3968, 32
      %v3975 = vpop.permute.xlu0 %3974
      %3976 = vrot.lane.b32.xlu0 %v3969, 32
      %v3977 = vpop.permute.xlu0 %3976
      %v3978 = vsel %vm1448, %v3975, %v3977
      %v3981 = vmul.f32 %v3970, %v3975
      %v3982 = vmul.f32 %v3971, %v3978
      %3983 = vrot.lane.b32.xlu0 %v3543, 96
      %v3984 = vpop.permute.xlu0 %3983
      %v3986 = vmul.f32 %v3945, %v3984
      %v3987 = vmul.f32 %v3952, %v3984
      %v3988 = vadd.f32 %v3981, %v3986
      %v3989 = vadd.f32 %v3982, %v3987
      %3992 = vrot.lane.b32.xlu0 %v3988, 32
      %v3993 = vpop.permute.xlu0 %3992
      %3994 = vrot.lane.b32.xlu0 %v3989, 32
      %v3995 = vpop.permute.xlu0 %3994
      %v3996 = vsel %vm1448, %v3993, %v3995
      %3998 = vst.msk [vmem:[#allocation6] sm:$0xff] %vm901, %v3996
      %3999 = vst.msk [vmem:[%s695] sm:$0xff] %vm901, %v3996
      %4002 = vrot.lane.b32.xlu0 %v1459, 32
      %v4003 = vpop.permute.xlu0 %4002
      %4004 = vrot.lane.b32.xlu0 %v1460, 32
      %v4005 = vpop.permute.xlu0 %4004
      %v4006 = vsel %vm1448, %v4003, %v4005
      %4008 = vst.msk [vmem:[#allocation4] sm:$0xff] %vm901, %v4006
      %v4009 = vld [vmem:[%s15] sm:$0xff]
      %v4010 = vld [vmem:[%s15 + $0x8] sm:$0xff]
      %v4011 = vld [vmem:[%s15 + $0x10] sm:$0xff]
      %v4012 = vld [vmem:[%s15 + $0x18] sm:$0xff]
      %v4013 = vld [vmem:[%s15 + $0x20] sm:$0xff]
      %v4014 = vld [vmem:[%s15 + $0x28] sm:$0xff]
      %v4015 = vld [vmem:[%s15 + $0x30] sm:$0xff]
      %v4016 = vld [vmem:[%s15 + $0x38] sm:$0xff]
      %v4017 = vld [vmem:[%s15 + $0x40] sm:$0xff]
      %v4018 = vld [vmem:[%s15 + $0x48] sm:$0xff]
      %v4019 = vld [vmem:[%s15 + $0x50] sm:$0xff]
      %v4020 = vld [vmem:[%s15 + $0x58] sm:$0xff]
      %v4021 = vsel %vm901, %v4006, 0
      %4023 = vmatprep.subr.mxu0 0.0
      %4024 = vmatpush1.msra.mxu0 0.0
      %4025 = vmatprep.subr.mxu0 0.0
      %4026 = vmatpush1.msra.mxu0 0.0
      %4027 = vmatprep.subr.mxu0 0.0
      %4028 = vmatpush1.msra.mxu0 0.0
      %4029 = vmatprep.subr.mxu0 0.0
      %4030 = vmatpush1.msra.mxu0 0.0
      %4031 = vmatprep.subr.mxu0 0.0
      %4032 = vmatpush1.msra.mxu0 %v4020
      %4033 = vmatprep.subr.mxu0 0.0
      %4034 = vmatpush1.msra.mxu0 %v4019
      %4035 = vmatprep.subr.mxu0 0.0
      %4036 = vmatpush1.msra.mxu0 %v4018
      %4037 = vmatprep.subr.mxu0 0.0
      %4038 = vmatpush1.msra.mxu0 %v4017
      %4039 = vmatprep.subr.mxu0 0.0
      %4040 = vmatpush1.msra.mxu0 %v4016
      %4041 = vmatprep.subr.mxu0 0.0
      %4042 = vmatpush1.msra.mxu0 %v4015
      %4043 = vmatprep.subr.mxu0 0.0
      %4044 = vmatpush1.msra.mxu0 %v4014
      %4045 = vmatprep.subr.mxu0 0.0
      %4046 = vmatpush1.msra.mxu0 %v4013
      %4047 = vmatprep.subr.mxu0 0.0
      %4048 = vmatpush1.msra.mxu0 %v4012
      %4049 = vmatprep.subr.mxu0 0.0
      %4050 = vmatpush1.msra.mxu0 %v4011
      %4051 = vmatprep.subr.mxu0 0.0
      %4052 = vmatpush1.msra.mxu0 %v4010
      %4053 = vmatprep.subr.mxu0 0.0
      %4054 = vmatpush1.msra.mxu0 %v4009
      %4055 = vmatprep.subr.mxu0 0.0
      %4056 = vmatpush2.msra.mxu0 0.0
      %4057 = vmatprep.subr.mxu0 0.0
      %4058 = vmatpush2.msra.mxu0 0.0
      %4059 = vmatprep.subr.mxu0 0.0
      %4060 = vmatpush2.msra.mxu0 0.0
      %4061 = vmatprep.subr.mxu0 0.0
      %4062 = vmatpush2.msra.mxu0 0.0
      %4063 = vmatprep.subr.mxu0 0.0
      %4064 = vmatpush2.msra.mxu0 0.0
      %4065 = vmatprep.subr.mxu0 0.0
      %4066 = vmatpush2.msra.mxu0 0.0
      %4067 = vmatprep.subr.mxu0 0.0
      %4068 = vmatpush2.msra.mxu0 0.0
      %4069 = vmatprep.subr.mxu0 0.0
      %4070 = vmatpush2.msra.mxu0 0.0
      %4071 = vmatprep.subr.mxu0 0.0
      %4072 = vmatpush2.msra.mxu0 0.0
      %4073 = vmatprep.subr.mxu0 0.0
      %4074 = vmatpush2.msra.mxu0 0.0
      %4075 = vmatprep.subr.mxu0 0.0
      %4076 = vmatpush2.msra.mxu0 0.0
      %4077 = vmatprep.subr.mxu0 0.0
      %4078 = vmatpush2.msra.mxu0 0.0
      %4079 = vmatprep.subr.mxu0 0.0
      %4080 = vmatpush2.msra.mxu0 0.0
      %4081 = vmatprep.subr.mxu0 0.0
      %4082 = vmatpush2.msra.mxu0 0.0
      %4083 = vmatprep.subr.mxu0 0.0
      %4084 = vmatpush2.msra.mxu0 0.0
      %4085 = vmatprep.subr.mxu0 0.0
      %4086 = vmatpush2.msra.mxu0 0.0
      %4087 = vmatprep.mubr.f32.mxu0 0.0
      %4088 = vmatmul.mubr.f32.gmra.mxu0 %v4021
      %v4089 = vpop.f32.mrf.mxu0
      %v4090 = vadd.f32 0.0, %v4089
      %v4091 = vpop.f32.mrf.mxu0
      %4092 = vdwg.mxu0
      %s4093 = scalar_lea.vmem [#allocation2], %s743
      %4094 = vst.msk [vmem:[%s4093] sm:$0xff] %vm1502, %v4090
      %v4095 = vld [vmem:[%s16] sm:$0xff]
      %v4096 = vld [vmem:[%s16 + $0x8] sm:$0xff]
      %v4097 = vld [vmem:[%s16 + $0x10] sm:$0xff]
      %v4098 = vld [vmem:[%s16 + $0x18] sm:$0xff]
      %v4099 = vld [vmem:[%s16 + $0x20] sm:$0xff]
      %v4100 = vld [vmem:[%s16 + $0x28] sm:$0xff]
      %v4101 = vld [vmem:[%s16 + $0x30] sm:$0xff]
      %v4102 = vld [vmem:[%s16 + $0x38] sm:$0xff]
      %v4103 = vld [vmem:[%s16 + $0x40] sm:$0xff]
      %v4104 = vld [vmem:[%s16 + $0x48] sm:$0xff]
      %v4105 = vld [vmem:[%s16 + $0x50] sm:$0xff]
      %v4106 = vld [vmem:[%s16 + $0x58] sm:$0xff]
      %v4107 = vld [vmem:[%s16 + $0x60] sm:$0xff]
      %v4108 = vld [vmem:[%s16 + $0x68] sm:$0xff]
      %v4109 = vld [vmem:[%s16 + $0x70] sm:$0xff]
      %v4110 = vld [vmem:[%s16 + $0x78] sm:$0xff]
      %v4111 = vld [vmem:[%s16 + $0x80] sm:$0xff]
      %v4112 = vld [vmem:[%s16 + $0x88] sm:$0xff]
      %v4113 = vld [vmem:[%s16 + $0x90] sm:$0xff]
      %v4114 = vld [vmem:[%s16 + $0x98] sm:$0xff]
      %v4115 = vld [vmem:[%s16 + $0xa0] sm:$0xff]
      %v4116 = vld [vmem:[%s16 + $0xa8] sm:$0xff]
      %v4117 = vld [vmem:[%s16 + $0xb0] sm:$0xff]
      %v4118 = vld [vmem:[%s16 + $0xb8] sm:$0xff]
      %v4119 = vld [vmem:[%s16 + $0xc0] sm:$0xff]
      %v4120 = vld [vmem:[%s16 + $0xc8] sm:$0xff]
      %v4121 = vld [vmem:[%s16 + $0xd0] sm:$0xff]
      %v4122 = vld [vmem:[%s16 + $0xd8] sm:$0xff]
      %v4123 = vld [vmem:[%s16 + $0xe0] sm:$0xff]
      %v4124 = vld [vmem:[%s16 + $0xe8] sm:$0xff]
      %v4125 = vld [vmem:[%s16 + $0xf0] sm:$0xff]
      %v4126 = vld [vmem:[%s16 + $0xf8] sm:$0xff]
      %v4127 = vld [vmem:[%s16 + $0x100] sm:$0xff]
      %v4128 = vld [vmem:[%s16 + $0x108] sm:$0xff]
      %v4129 = vld [vmem:[%s16 + $0x110] sm:$0xff]
      %v4130 = vld [vmem:[%s16 + $0x118] sm:$0xff]
      %4131 = vmatprep.subr.mxu0 0.0
      %4132 = vmatpush1.msra.mxu0 0.0
      %4133 = vmatprep.subr.mxu0 0.0
      %4134 = vmatpush1.msra.mxu0 0.0
      %4135 = vmatprep.subr.mxu0 0.0
      %4136 = vmatpush1.msra.mxu0 0.0
      %4137 = vmatprep.subr.mxu0 0.0
      %4138 = vmatpush1.msra.mxu0 0.0
      %4139 = vmatprep.subr.mxu0 %v4129
      %4140 = vmatpush1.msra.mxu0 %v4128
      %4141 = vmatprep.subr.mxu0 %v4126
      %4142 = vmatpush1.msra.mxu0 %v4125
      %4143 = vmatprep.subr.mxu0 %v4123
      %4144 = vmatpush1.msra.mxu0 %v4122
      %4145 = vmatprep.subr.mxu0 %v4120
      %4146 = vmatpush1.msra.mxu0 %v4119
      %4147 = vmatprep.subr.mxu0 %v4117
      %4148 = vmatpush1.msra.mxu0 %v4116
      %4149 = vmatprep.subr.mxu0 %v4114
      %4150 = vmatpush1.msra.mxu0 %v4113
      %4151 = vmatprep.subr.mxu0 %v4111
      %4152 = vmatpush1.msra.mxu0 %v4110
      %4153 = vmatprep.subr.mxu0 %v4108
      %4154 = vmatpush1.msra.mxu0 %v4107
      %4155 = vmatprep.subr.mxu0 %v4105
      %4156 = vmatpush1.msra.mxu0 %v4104
      %4157 = vmatprep.subr.mxu0 %v4102
      %4158 = vmatpush1.msra.mxu0 %v4101
      %4159 = vmatprep.subr.mxu0 %v4099
      %4160 = vmatpush1.msra.mxu0 %v4098
      %4161 = vmatprep.subr.mxu0 %v4096
      %4162 = vmatpush1.msra.mxu0 %v4095
      %4163 = vmatprep.subr.mxu0 0.0
      %4164 = vmatpush2.msra.mxu0 0.0
      %4165 = vmatprep.subr.mxu0 0.0
      %4166 = vmatpush2.msra.mxu0 0.0
      %4167 = vmatprep.subr.mxu0 0.0
      %4168 = vmatpush2.msra.mxu0 0.0
      %4169 = vmatprep.subr.mxu0 0.0
      %4170 = vmatpush2.msra.mxu0 0.0
      %4171 = vmatprep.subr.mxu0 0.0
      %4172 = vmatpush2.msra.mxu0 0.0
      %4173 = vmatprep.subr.mxu0 0.0
      %4174 = vmatpush2.msra.mxu0 0.0
      %4175 = vmatprep.subr.mxu0 0.0
      %4176 = vmatpush2.msra.mxu0 0.0
      %4177 = vmatprep.subr.mxu0 0.0
      %4178 = vmatpush2.msra.mxu0 0.0
      %4179 = vmatprep.subr.mxu0 0.0
      %4180 = vmatpush2.msra.mxu0 0.0
      %4181 = vmatprep.subr.mxu0 0.0
      %4182 = vmatpush2.msra.mxu0 0.0
      %4183 = vmatprep.subr.mxu0 0.0
      %4184 = vmatpush2.msra.mxu0 0.0
      %4185 = vmatprep.subr.mxu0 0.0
      %4186 = vmatpush2.msra.mxu0 0.0
      %4187 = vmatprep.subr.mxu0 0.0
      %4188 = vmatpush2.msra.mxu0 0.0
      %4189 = vmatprep.subr.mxu0 0.0
      %4190 = vmatpush2.msra.mxu0 0.0
      %4191 = vmatprep.subr.mxu0 0.0
      %4192 = vmatpush2.msra.mxu0 0.0
      %4193 = vmatprep.subr.mxu0 0.0
      %4194 = vmatpush2.msra.mxu0 0.0
      %4195 = vmatprep.mubr.f32.mxu0 0.0
      %4196 = vmatmul.mubr.f32.gmra.mxu0 %v4021
      %v4197 = vpop.f32.mrf.mxu0
      %v4198 = vadd.f32 0.0, %v4197
      %v4199 = vpop.f32.mrf.mxu0
      %v4200 = vadd.f32 0.0, %v4199
      %4201 = vdwg.mxu0
      %4202 = vmatprep.subr.mxu0 0.0
      %4203 = vmatpush1.msra.mxu0 0.0
      %4204 = vmatprep.subr.mxu0 0.0
      %4205 = vmatpush1.msra.mxu0 0.0
      %4206 = vmatprep.subr.mxu0 0.0
      %4207 = vmatpush1.msra.mxu0 0.0
      %4208 = vmatprep.subr.mxu0 0.0
      %4209 = vmatpush1.msra.mxu0 0.0
      %4210 = vmatprep.subr.mxu0 0.0
      %4211 = vmatpush1.msra.mxu0 %v4130
      %4212 = vmatprep.subr.mxu0 0.0
      %4213 = vmatpush1.msra.mxu0 %v4127
      %4214 = vmatprep.subr.mxu0 0.0
      %4215 = vmatpush1.msra.mxu0 %v4124
      %4216 = vmatprep.subr.mxu0 0.0
      %4217 = vmatpush1.msra.mxu0 %v4121
      %4218 = vmatprep.subr.mxu0 0.0
      %4219 = vmatpush1.msra.mxu0 %v4118
      %4220 = vmatprep.subr.mxu0 0.0
      %4221 = vmatpush1.msra.mxu0 %v4115
      %4222 = vmatprep.subr.mxu0 0.0
      %4223 = vmatpush1.msra.mxu0 %v4112
      %4224 = vmatprep.subr.mxu0 0.0
      %4225 = vmatpush1.msra.mxu0 %v4109
      %4226 = vmatprep.subr.mxu0 0.0
      %4227 = vmatpush1.msra.mxu0 %v4106
      %4228 = vmatprep.subr.mxu0 0.0
      %4229 = vmatpush1.msra.mxu0 %v4103
      %4230 = vmatprep.subr.mxu0 0.0
      %4231 = vmatpush1.msra.mxu0 %v4100
      %4232 = vmatprep.subr.mxu0 0.0
      %4233 = vmatpush1.msra.mxu0 %v4097
      %4234 = vmatprep.subr.mxu0 0.0
      %4235 = vmatpush2.msra.mxu0 0.0
      %4236 = vmatprep.subr.mxu0 0.0
      %4237 = vmatpush2.msra.mxu0 0.0
      %4238 = vmatprep.subr.mxu0 0.0
      %4239 = vmatpush2.msra.mxu0 0.0
      %4240 = vmatprep.subr.mxu0 0.0
      %4241 = vmatpush2.msra.mxu0 0.0
      %4242 = vmatprep.subr.mxu0 0.0
      %4243 = vmatpush2.msra.mxu0 0.0
      %4244 = vmatprep.subr.mxu0 0.0
      %4245 = vmatpush2.msra.mxu0 0.0
      %4246 = vmatprep.subr.mxu0 0.0
      %4247 = vmatpush2.msra.mxu0 0.0
      %4248 = vmatprep.subr.mxu0 0.0
      %4249 = vmatpush2.msra.mxu0 0.0
      %4250 = vmatprep.subr.mxu0 0.0
      %4251 = vmatpush2.msra.mxu0 0.0
      %4252 = vmatprep.subr.mxu0 0.0
      %4253 = vmatpush2.msra.mxu0 0.0
      %4254 = vmatprep.subr.mxu0 0.0
      %4255 = vmatpush2.msra.mxu0 0.0
      %4256 = vmatprep.subr.mxu0 0.0
      %4257 = vmatpush2.msra.mxu0 0.0
      %4258 = vmatprep.subr.mxu0 0.0
      %4259 = vmatpush2.msra.mxu0 0.0
      %4260 = vmatprep.subr.mxu0 0.0
      %4261 = vmatpush2.msra.mxu0 0.0
      %4262 = vmatprep.subr.mxu0 0.0
      %4263 = vmatpush2.msra.mxu0 0.0
      %4264 = vmatprep.subr.mxu0 0.0
      %4265 = vmatpush2.msra.mxu0 0.0
      %4266 = vmatprep.mubr.f32.mxu0 0.0
      %4267 = vmatmul.mubr.f32.gmra.mxu0 %v4021
      %v4268 = vpop.f32.mrf.mxu0
      %v4269 = vadd.f32 0.0, %v4268
      %v4270 = vpop.f32.mrf.mxu0
      %4271 = vdwg.mxu0
      %s4272 = smul.u32 %s35, 3
      %s4273 = smul.addr %s4272, 8
      %s4274 = scalar_lea.vmem [#allocation3], %s4273
      %4275 = vst [vmem:[%s4274] sm:$0xff] %v4198
      %4276 = vst [vmem:[%s4274 + $0x8] sm:$0xff] %v4200
      %4277 = vst.msk [vmem:[%s4274 + $0x10] sm:$0xff] %vm1448, %v4269
      %p4278 = scmp.lt.s32.totalorder %s35, 7
      %s4279 = scalar_select %p4278, %s35, 7
      %s4280 = smul.addr %s4279, 8
      %s4281 = scalar_lea.vmem %s22, %s4280
      %p4282 = scmp.lt.s32.totalorder %s35, 7
      %s4283 = scalar_select %p4282, %s35, 7
      %s4284 = smul.addr %s4283, 8
      %s4285 = scalar_lea.vmem %s23, %s4284
      // Predicated region
      $region113: #{_forward_core.3} parent=107 // pred_check
        %p4286 = pneg %p515
      $region114: #{_forward_core.3} parent=107 // pred_check_branch
        %4288 = sbr.rel (%p4286) target = $region116
      $region115: #{_forward_core.3} parent=107 // pred_region
        _
      $region116: #{_forward_core.3} parent=107 // pred_fallthru
        _
      // Predicated region
      $region117: #{_forward_core.3} parent=107 // pred_check
        %p4289 = pneg %p541
      $region118: #{_forward_core.3} parent=107 // pred_check_branch
        %4291 = sbr.rel (%p4289) target = $region120
      $region119: #{_forward_core.3} parent=107 // pred_region
        _
      $region120: #{_forward_core.3} parent=107 // pred_fallthru
        _
    $region108: #{_forward_core.3} parent=5 // pred_fallthru
      _
    %p4292 = scmp.le.s32.totalorder 2, %s30
    // Predicated region
    $region121: #{_forward_core.3} parent=5 // pred_check
      %p4293 = pneg %p4292
    $region122: #{_forward_core.3} parent=5 // pred_check_branch
      %4295 = sbr.rel (%p4293) target = $region124
    $region123: #{_forward_core.3} parent=5 // pred_region
      %s4296 = ssub.s32 %s30, 2
      // Predicated region
      $region125: #{_forward_core.3} parent=123 // pred_check
        %p4297 = pneg %p521
      $region126: #{_forward_core.3} parent=123 // pred_check_branch
        %4299 = sbr.rel (%p4297) target = $region128
      $region127: #{_forward_core.3} parent=123 // pred_region
        %p4300 = scmp.lt.s32.totalorder %s36, 7
        %s4301 = scalar_select %p4300, %s36, 7
        %s4302 = smul.addr %s4301, 8
        %s4303 = scalar_lea.vmem %s22, %s4302
      $region128: #{_forward_core.3} parent=123 // pred_fallthru
        _
      // Predicated region
      $region129: #{_forward_core.3} parent=123 // pred_check
        %p4304 = pneg %p547
      $region130: #{_forward_core.3} parent=123 // pred_check_branch
        %4306 = sbr.rel (%p4304) target = $region132
      $region131: #{_forward_core.3} parent=123 // pred_region
        %p4307 = scmp.lt.s32.totalorder %s36, 7
        %s4308 = scalar_select %p4307, %s36, 7
        %s4309 = smul.addr %s4308, 8
        %s4310 = scalar_lea.vmem %s23, %s4309
      $region132: #{_forward_core.3} parent=123 // pred_fallthru
        _
    $region124: #{_forward_core.3} parent=5 // pred_fallthru
      _
  $region6: #{_forward_core.3} parent=0 // loop_footer
    %s34 = sadd.s32 1, %s30
  $region7: #{_forward_core.3} parent=0 // loop_footer_branch
    %29 = sbr.rel target = $region3
  $region8: #{_forward_core.3} parent=0 // loop_exit
    _

</llo_original>
